<compile_context>
chip_gen: v7x
topology: tpu7x:2x2x1
jax: 0.10.0
libtpu: 0.0.40
codegen_flags: <defaults>
</compile_context>

<pallas_src>
import functools

import jax
import jax.numpy as jnp
import numpy as np
from jax.experimental import pallas as pl
from jax.experimental.pallas import tpu as pltpu


def _ga_kernel(x_ref, y_ref, bias_ref,
               wq_ref, bq_ref, wkv_ref, bkv_ref, wo_ref, bo_ref,
               gamma_ref, beta_ref,
               out_ref, atted_ref,
               *, num_heads, head_dim, hidden, heads_per_group, ln_eps):
    """One (batch, Lx-tile) per grid step. Full (padded) Ly keys resident."""
    x = x_ref[0]                                  # (Lt, D) f32 — residual / LN path
    y_bf = y_ref[0]                               # (Ly, D) bf16 (pre-cast on host)

    # Projections: bf16 MXU operands, f32 accumulation, f32 bias add.
    # Wq/bq already carry the 1/sqrt(head_dim) scale. K|V fused in one matmul.
    q = jnp.dot(x.astype(jnp.bfloat16), wq_ref[...],
                preferred_element_type=jnp.float32) + bq_ref[...]
    kv = jnp.dot(y_bf, wkv_ref[...],
                 preferred_element_type=jnp.float32) + bkv_ref[...]

    # Cast once; per-head slices below reuse these bf16 slabs.
    q_bf = q.astype(jnp.bfloat16)
    kv_bf = kv.astype(jnp.bfloat16)
    k_bf = kv_bf[:, :hidden]
    v_bf = kv_bf[:, hidden:]

    bias_row = bias_ref[0]                        # (1, Ly) f32: 0 / -1e9 per key

    gw = heads_per_group * head_dim               # lane-dense group width
    for g in range(num_heads // heads_per_group):
        pv_parts = []
        for j in range(heads_per_group):
            h = g * heads_per_group + j
            sl = slice(h * head_dim, (h + 1) * head_dim)
            # q k^T via trailing-dim contraction (no XLU transpose of k).
            s = jax.lax.dot_general(
                q_bf[:, sl], k_bf[:, sl],
                dimension_numbers=(((1,), (1,)), ((), ())),
                preferred_element_type=jnp.float32)          # (Lt, Ly)
            s = s + bias_row                                  # fused broadcast-add
            p = jnp.exp(s - jnp.max(s, axis=-1, keepdims=True))
            r = pl.reciprocal(jnp.sum(p, axis=-1, keepdims=True), approx=True)
            pv = jnp.dot(p.astype(jnp.bfloat16), v_bf[:, sl],
                         preferred_element_type=jnp.float32)  # (Lt, hd)
            # Deferred normalization on the small (Lt, hd) result.
            pv_parts.append((pv * r).astype(jnp.bfloat16))
        grp = pv_parts[0] if heads_per_group == 1 else jnp.concatenate(pv_parts, -1)
        atted_ref[:, g * gw:(g + 1) * gw] = grp               # lane-dense store

    # Output projection + residual + LayerNorm (f32 except MXU operands).
    proj = jnp.dot(atted_ref[...], wo_ref[...],
                   preferred_element_type=jnp.float32) + bo_ref[...]
    z = x + proj
    mu = jnp.mean(z, axis=-1, keepdims=True)
    var = jnp.mean((z - mu) ** 2, axis=-1, keepdims=True)
    zn = (z - mu) * jax.lax.rsqrt(var + ln_eps)
    out_ref[0] = (zn * gamma_ref[...] + beta_ref[...]).astype(out_ref.dtype)


def _round_up(a, b):
    return (a + b - 1) // b * b


def _device_tuning():
    """(max block_lx, vmem_limit_bytes) per TPU generation."""
    try:
        kind = jax.devices()[0].device_kind.lower()
    except Exception:  # pragma: no cover
        kind = ""
    if "v5" in kind or "v6" in kind:
        return 512, 64 * 1024 * 1024       # 128 MiB physical VMEM
    return 256, 48 * 1024 * 1024           # v7x / unknown: 64 MiB per TC


def guided_attn(x, y, x_mask, y_mask, params, *, num_heads, ln_eps=1e-6):
    """Pallas-backed GuidedAttn forward. x_mask is unused (as in the reference)."""
    del x_mask
    B, Lx, D = x.shape
    _, Ly, _ = y.shape
    head_dim = D // num_heads

    wq, bq, wk, bk, wv, bv, wo, bo, gamma, beta = params

    # Host-side prep: fold the attention scale into Wq/bq (bq stays f32),
    # fuse K|V weights, cast MXU weights + y to bf16, build the -1e9 bias row.
    scale = np.float32(1.0 / np.sqrt(head_dim))
    wq_b = (wq * scale).astype(jnp.bfloat16)                          # (D, D)
    bq_s = (bq * scale).astype(jnp.float32)                           # (1, D)
    wkv_b = jnp.concatenate([wk, wv], axis=1).astype(jnp.bfloat16)    # (D, 2D)
    bkv = jnp.concatenate([bk, bv], axis=1).astype(jnp.float32)       # (1, 2D)
    wo_b = wo.astype(jnp.bfloat16)                                    # (D, D)
    y_bf = y.astype(jnp.bfloat16)
    bias = y_mask.astype(jnp.float32) * jnp.float32(-1e9)             # (B, 1, Ly)

    max_block, vmem_limit = _device_tuning()

    # Pad Ly to a multiple of 128 (lane-dense softmax / MXU N); pad keys masked.
    Ly_pad = _round_up(Ly, 128)
    if Ly_pad != Ly:
        y_bf = jnp.pad(y_bf, ((0, 0), (0, Ly_pad - Ly), (0, 0)))
        bias = jnp.pad(bias, ((0, 0), (0, 0), (0, Ly_pad - Ly)),
                       constant_values=-1e9)

    # Lx tiling: largest multiple-of-8 tile <= max_block; pad Lx to the tile.
    block_lx = min(max_block, _round_up(Lx, 8))
    Lx_pad = _round_up(Lx, block_lx)
    x_p = x if Lx_pad == Lx else jnp.pad(x, ((0, 0), (0, Lx_pad - Lx), (0, 0)))

    # Lane-dense head grouping for the atted stores.
    if head_dim >= 128:
        hpg = 1
    elif D <= 128:
        hpg = num_heads
    else:
        hpg = max(1, 128 // head_dim)
        while num_heads % hpg:
            hpg -= 1

    grid = (B, Lx_pad // block_lx)

    kernel = functools.partial(
        _ga_kernel, num_heads=num_heads, head_dim=head_dim, hidden=D,
        heads_per_group=hpg, ln_eps=ln_eps)

    args = (x_p, y_bf, bias, wq_b, bq_s, wkv_b, bkv, wo_b, bo, gamma, beta)

    def _build(single_buffer_weights):
        def const_spec(shape):
            idx = lambda b, i, _n=len(shape): (0,) * _n
            if single_buffer_weights:
                # Weights are never re-fetched (constant index map); single-buffer
                # them to reclaim VMEM (matters most on v7x's 64 MiB).
                return pl.BlockSpec(shape, idx, pipeline_mode=pl.Buffered(1))
            return pl.BlockSpec(shape, idx)

        in_specs = [
            pl.BlockSpec((1, block_lx, D), lambda b, i: (b, i, 0)),   # x
            pl.BlockSpec((1, Ly_pad, D), lambda b, i: (b, 0, 0)),     # y (bf16)
            pl.BlockSpec((1, 1, Ly_pad), lambda b, i: (b, 0, 0)),     # mask bias
            const_spec((D, D)), const_spec((1, D)),                   # Wq, bq
            const_spec((D, 2 * D)), const_spec((1, 2 * D)),           # W[k|v], b[k|v]
            const_spec((D, D)), const_spec((1, D)),                   # Wo, bo
            const_spec((1, D)), const_spec((1, D)),                   # gamma, beta
        ]
        return pl.pallas_call(
            kernel,
            out_shape=jax.ShapeDtypeStruct((B, Lx_pad, D), x.dtype),
            grid_spec=pltpu.PrefetchScalarGridSpec(
                num_scalar_prefetch=0,
                grid=grid,
                in_specs=in_specs,
                out_specs=pl.BlockSpec((1, block_lx, D), lambda b, i: (b, i, 0)),
                scratch_shapes=[pltpu.VMEM((block_lx, D), jnp.bfloat16)],
            ),
            compiler_params=pltpu.CompilerParams(
                dimension_semantics=("parallel", "parallel"),
                vmem_limit_bytes=vmem_limit,
            ),
        )

    try:
        out = _build(True)(*args)
    except Exception:
        # Fallback if single-buffering via pl.Buffered(1) is unsupported.
        out = _build(False)(*args)

    return out if Lx_pad == Lx else out[:, :Lx, :]


def guided_attn_ref(x, y, y_mask, params, *, num_heads, ln_eps=1e-6):
    """Pure-JAX f32 reference (mirrors the PyTorch _GA forward)."""
    wq, bq, wk, bk, wv, bv, wo, bo, gamma, beta = params
    B, Lx, D = x.shape
    Ly = y.shape[1]
    hd = D // num_heads

    def split(t, L):
        return t.reshape(B, L, num_heads, hd).transpose(0, 2, 1, 3)

    q = split(x @ wq + bq, Lx)
    k = split(y @ wk + bk, Ly)
    v = split(y @ wv + bv, Ly)
    s = jnp.einsum("bhqd,bhkd->bhqk", q, k) / jnp.sqrt(float(hd))
    s = s - y_mask[:, None, :, :] * 1e9
    p = jax.nn.softmax(s, axis=-1)
    a = jnp.einsum("bhqk,bhkd->bhqd", p, v).transpose(0, 2, 1, 3).reshape(B, Lx, D)
    a = a @ wo + bo
    z = x + a
    mu = jnp.mean(z, axis=-1, keepdims=True)
    var = jnp.mean((z - mu) ** 2, axis=-1, keepdims=True)
    return (z - mu) / jnp.sqrt(var + ln_eps) * gamma + beta


def make_params(key, D):
    """Deterministic synthetic parameters. nn.Linear weights are (out,in);
    stored pre-transposed to (in,out) so the kernel does x @ W."""
    ks = jax.random.split(key, 8)
    std = 1.0 / np.sqrt(D)

    def lin(kw, kb):
        w = jax.random.uniform(kw, (D, D), jnp.float32, -std, std).T  # (in,out)
        b = jax.random.uniform(kb, (1, D), jnp.float32, -std, std)
        return w, b

    wq, bq = lin(ks[0], ks[1])
    wk, bk = lin(ks[2], ks[3])
    wv, bv = lin(ks[4], ks[5])
    wo, bo = lin(ks[6], ks[7])
    gamma = jnp.ones((1, D), jnp.float32)
    beta = jnp.zeros((1, D), jnp.float32)
    return (wq, bq, wk, bk, wv, bv, wo, bo, gamma, beta)


if __name__ == "__main__":
    B, Lx, Ly, D, H = 2, 8, 8, 32, 4

    key = jax.random.PRNGKey(0)
    kx, ky, kp = jax.random.split(key, 3)
    x = jax.random.normal(kx, (B, Lx, D), jnp.float32)
    y = jax.random.normal(ky, (B, Ly, D), jnp.float32)

    # Masks: last two key positions of batch 1 are padded (masked).
    y_mask_np = np.zeros((B, 1, Ly), np.float32)
    y_mask_np[1, 0, -2:] = 1.0
    y_mask = jnp.asarray(y_mask_np)
    x_mask = jnp.zeros((B, 1, Lx), jnp.float32)  # accepted, unused by _GA

    params = make_params(kp, D)

    out = guided_attn(x, y, x_mask, y_mask, params, num_heads=H)
    out = jax.block_until_ready(out)

    ref = guided_attn_ref(x, y, y_mask, params, num_heads=H)
    # bf16 MXU operands (f32 accumulation / softmax / LayerNorm) => looser
    # tolerance vs. the all-f32 reference.
    np.testing.assert_allclose(np.asarray(out), np.asarray(ref), rtol=5e-2, atol=5e-2)

    print("KERNEL_OK")
</pallas_src>

<mosaic_0001>
module attributes {stable_mosaic.version = 11 : i64} {
  func.func @_ga_kernel(%arg0: i32, %arg1: i32, %arg2: memref<1x8x32xf32, #tpu.memory_space<vmem>>, %arg3: memref<1x128x32xbf16, #tpu.memory_space<vmem>>, %arg4: memref<1x1x128xf32, #tpu.memory_space<vmem>>, %arg5: memref<32x32xbf16, #tpu.memory_space<vmem>>, %arg6: memref<1x32xf32, #tpu.memory_space<vmem>>, %arg7: memref<32x64xbf16, #tpu.memory_space<vmem>>, %arg8: memref<1x64xf32, #tpu.memory_space<vmem>>, %arg9: memref<32x32xbf16, #tpu.memory_space<vmem>>, %arg10: memref<1x32xf32, #tpu.memory_space<vmem>>, %arg11: memref<1x32xf32, #tpu.memory_space<vmem>>, %arg12: memref<1x32xf32, #tpu.memory_space<vmem>>, %arg13: memref<1x8x32xf32, #tpu.memory_space<vmem>>, %arg14: memref<8x32xbf16, #tpu.memory_space<vmem>>) attributes {dimension_semantics = [#tpu.dimension_semantics<parallel>, #tpu.dimension_semantics<parallel>], iteration_bounds = array<i64: 2, 1>, scalar_prefetch = 0 : i64, scratch_operands = 1 : i64, tpu.core_type = #tpu.core_type<tc>, window_params = [{transform_indices = @transform_0, window_bounds = array<i64: 1, 8, 32>}, {transform_indices = @transform_1, window_bounds = array<i64: 1, 128, 32>}, {transform_indices = @transform_2, window_bounds = array<i64: 1, 1, 128>}, {pipeline_mode = #tpu.pipeline_mode<synchronous>, transform_indices = @transform_3, window_bounds = array<i64: 32, 32>}, {pipeline_mode = #tpu.pipeline_mode<synchronous>, transform_indices = @transform_4, window_bounds = array<i64: 1, 32>}, {pipeline_mode = #tpu.pipeline_mode<synchronous>, transform_indices = @transform_5, window_bounds = array<i64: 32, 64>}, {pipeline_mode = #tpu.pipeline_mode<synchronous>, transform_indices = @transform_6, window_bounds = array<i64: 1, 64>}, {pipeline_mode = #tpu.pipeline_mode<synchronous>, transform_indices = @transform_7, window_bounds = array<i64: 32, 32>}, {pipeline_mode = #tpu.pipeline_mode<synchronous>, transform_indices = @transform_8, window_bounds = array<i64: 1, 32>}, {pipeline_mode = #tpu.pipeline_mode<synchronous>, transform_indices = @transform_9, window_bounds = array<i64: 1, 32>}, {pipeline_mode = #tpu.pipeline_mode<synchronous>, transform_indices = @transform_10, window_bounds = array<i64: 1, 32>}, {transform_indices = @transform_11, window_bounds = array<i64: 1, 8, 32>}]} {
    %c0 = arith.constant 0 : index
    %c0_0 = arith.constant 0 : index
    %c0_1 = arith.constant 0 : index
    %0 = vector.load %arg2[%c0, %c0_0, %c0_1] : memref<1x8x32xf32, #tpu.memory_space<vmem>>, vector<1x8x32xf32>
    %1 = vector.shape_cast %0 : vector<1x8x32xf32> to vector<8x32xf32>
    %c0_2 = arith.constant 0 : index
    %c0_3 = arith.constant 0 : index
    %c0_4 = arith.constant 0 : index
    %2 = vector.load %arg3[%c0_2, %c0_3, %c0_4] : memref<1x128x32xbf16, #tpu.memory_space<vmem>>, vector<1x128x32xbf16>
    %3 = vector.shape_cast %2 : vector<1x128x32xbf16> to vector<128x32xbf16>
    %4 = arith.truncf %1 : vector<8x32xf32> to vector<8x32xbf16>
    %c0_5 = arith.constant 0 : index
    %c0_6 = arith.constant 0 : index
    %5 = vector.load %arg5[%c0_5, %c0_6] : memref<32x32xbf16, #tpu.memory_space<vmem>>, vector<32x32xbf16>
    %cst = arith.constant dense<0.000000e+00> : vector<8x32xf32>
    %6 = tpu.matmul %4, %5, %cst {dimension_numbers = #tpu.dot_dimension_numbers<[1], [0], [0], [1], [0, 0, 1, 1], [], []>} : vector<8x32xbf16>, vector<32x32xbf16>, vector<8x32xf32> -> vector<8x32xf32>
    %c0_7 = arith.constant 0 : index
    %c0_8 = arith.constant 0 : index
    %7 = vector.load %arg6[%c0_7, %c0_8] : memref<1x32xf32, #tpu.memory_space<vmem>>, vector<1x32xf32>
    %8 = vector.broadcast %7 : vector<1x32xf32> to vector<8x32xf32>
    %9 = arith.addf %6, %8 : vector<8x32xf32>
    %c0_9 = arith.constant 0 : index
    %c0_10 = arith.constant 0 : index
    %10 = vector.load %arg7[%c0_9, %c0_10] : memref<32x64xbf16, #tpu.memory_space<vmem>>, vector<32x64xbf16>
    %cst_11 = arith.constant dense<0.000000e+00> : vector<128x64xf32>
    %11 = tpu.matmul %3, %10, %cst_11 {dimension_numbers = #tpu.dot_dimension_numbers<[1], [0], [0], [1], [0, 0, 1, 1], [], []>} : vector<128x32xbf16>, vector<32x64xbf16>, vector<128x64xf32> -> vector<128x64xf32>
    %c0_12 = arith.constant 0 : index
    %c0_13 = arith.constant 0 : index
    %12 = vector.load %arg8[%c0_12, %c0_13] : memref<1x64xf32, #tpu.memory_space<vmem>>, vector<1x64xf32>
    %13 = vector.broadcast %12 : vector<1x64xf32> to vector<128x64xf32>
    %14 = arith.addf %11, %13 : vector<128x64xf32>
    %15 = arith.truncf %9 : vector<8x32xf32> to vector<8x32xbf16>
    %16 = arith.truncf %14 : vector<128x64xf32> to vector<128x64xbf16>
    %17 = vector.extract_strided_slice %16 {offsets = [0, 0], sizes = [128, 32], strides = [1, 1]} : vector<128x64xbf16> to vector<128x32xbf16>
    %18 = vector.extract_strided_slice %16 {offsets = [0, 32], sizes = [128, 32], strides = [1, 1]} : vector<128x64xbf16> to vector<128x32xbf16>
    %c0_14 = arith.constant 0 : index
    %c0_15 = arith.constant 0 : index
    %c0_16 = arith.constant 0 : index
    %19 = vector.load %arg4[%c0_14, %c0_15, %c0_16] : memref<1x1x128xf32, #tpu.memory_space<vmem>>, vector<1x1x128xf32>
    %20 = vector.shape_cast %19 : vector<1x1x128xf32> to vector<1x128xf32>
    %21 = vector.extract_strided_slice %15 {offsets = [0, 0], sizes = [8, 8], strides = [1, 1]} : vector<8x32xbf16> to vector<8x8xbf16>
    %22 = vector.extract_strided_slice %17 {offsets = [0, 0], sizes = [128, 8], strides = [1, 1]} : vector<128x32xbf16> to vector<128x8xbf16>
    %cst_17 = arith.constant dense<0.000000e+00> : vector<8x128xf32>
    %23 = tpu.matmul %21, %22, %cst_17 {dimension_numbers = #tpu.dot_dimension_numbers<[1], [1], [0], [0], [0, 0, 1, 0], [], []>} : vector<8x8xbf16>, vector<128x8xbf16>, vector<8x128xf32> -> vector<8x128xf32>
    %24 = vector.broadcast %20 : vector<1x128xf32> to vector<8x128xf32>
    %25 = arith.addf %23, %24 : vector<8x128xf32>
    %cst_18 = arith.constant dense<0xFF800000> : vector<8xf32>
    %26 = vector.multi_reduction <maximumf>, %25, %cst_18 [1] : vector<8x128xf32> to vector<8xf32>
    %27 = vector.shape_cast %26 : vector<8xf32> to vector<8x1xf32>
    %28 = vector.broadcast %27 : vector<8x1xf32> to vector<8x128xf32>
    %29 = arith.subf %25, %28 : vector<8x128xf32>
    %30 = math.exp %29 : vector<8x128xf32>
    %cst_19 = arith.constant dense<0.000000e+00> : vector<8xf32>
    %31 = vector.multi_reduction <add>, %30, %cst_19 [1] : vector<8x128xf32> to vector<8xf32>
    %32 = vector.shape_cast %31 : vector<8xf32> to vector<8x1xf32>
    %33 = tpu.reciprocal %32 {approx = true} : vector<8x1xf32> -> vector<8x1xf32>
    %34 = arith.truncf %30 : vector<8x128xf32> to vector<8x128xbf16>
    %35 = vector.extract_strided_slice %18 {offsets = [0, 0], sizes = [128, 8], strides = [1, 1]} : vector<128x32xbf16> to vector<128x8xbf16>
    %cst_20 = arith.constant dense<0.000000e+00> : vector<8x8xf32>
    %36 = tpu.matmul %34, %35, %cst_20 {dimension_numbers = #tpu.dot_dimension_numbers<[1], [0], [0], [1], [0, 0, 1, 1], [], []>} : vector<8x128xbf16>, vector<128x8xbf16>, vector<8x8xf32> -> vector<8x8xf32>
    %37 = vector.broadcast %33 : vector<8x1xf32> to vector<8x8xf32>
    %38 = arith.mulf %36, %37 : vector<8x8xf32>
    %39 = arith.truncf %38 : vector<8x8xf32> to vector<8x8xbf16>
    %40 = vector.extract_strided_slice %15 {offsets = [0, 8], sizes = [8, 8], strides = [1, 1]} : vector<8x32xbf16> to vector<8x8xbf16>
    %41 = vector.extract_strided_slice %17 {offsets = [0, 8], sizes = [128, 8], strides = [1, 1]} : vector<128x32xbf16> to vector<128x8xbf16>
    %cst_21 = arith.constant dense<0.000000e+00> : vector<8x128xf32>
    %42 = tpu.matmul %40, %41, %cst_21 {dimension_numbers = #tpu.dot_dimension_numbers<[1], [1], [0], [0], [0, 0, 1, 0], [], []>} : vector<8x8xbf16>, vector<128x8xbf16>, vector<8x128xf32> -> vector<8x128xf32>
    %43 = vector.broadcast %20 : vector<1x128xf32> to vector<8x128xf32>
    %44 = arith.addf %42, %43 : vector<8x128xf32>
    %cst_22 = arith.constant dense<0xFF800000> : vector<8xf32>
    %45 = vector.multi_reduction <maximumf>, %44, %cst_22 [1] : vector<8x128xf32> to vector<8xf32>
    %46 = vector.shape_cast %45 : vector<8xf32> to vector<8x1xf32>
    %47 = vector.broadcast %46 : vector<8x1xf32> to vector<8x128xf32>
    %48 = arith.subf %44, %47 : vector<8x128xf32>
    %49 = math.exp %48 : vector<8x128xf32>
    %cst_23 = arith.constant dense<0.000000e+00> : vector<8xf32>
    %50 = vector.multi_reduction <add>, %49, %cst_23 [1] : vector<8x128xf32> to vector<8xf32>
    %51 = vector.shape_cast %50 : vector<8xf32> to vector<8x1xf32>
    %52 = tpu.reciprocal %51 {approx = true} : vector<8x1xf32> -> vector<8x1xf32>
    %53 = arith.truncf %49 : vector<8x128xf32> to vector<8x128xbf16>
    %54 = vector.extract_strided_slice %18 {offsets = [0, 8], sizes = [128, 8], strides = [1, 1]} : vector<128x32xbf16> to vector<128x8xbf16>
    %cst_24 = arith.constant dense<0.000000e+00> : vector<8x8xf32>
    %55 = tpu.matmul %53, %54, %cst_24 {dimension_numbers = #tpu.dot_dimension_numbers<[1], [0], [0], [1], [0, 0, 1, 1], [], []>} : vector<8x128xbf16>, vector<128x8xbf16>, vector<8x8xf32> -> vector<8x8xf32>
    %56 = vector.broadcast %52 : vector<8x1xf32> to vector<8x8xf32>
    %57 = arith.mulf %55, %56 : vector<8x8xf32>
    %58 = arith.truncf %57 : vector<8x8xf32> to vector<8x8xbf16>
    %59 = vector.extract_strided_slice %15 {offsets = [0, 16], sizes = [8, 8], strides = [1, 1]} : vector<8x32xbf16> to vector<8x8xbf16>
    %60 = vector.extract_strided_slice %17 {offsets = [0, 16], sizes = [128, 8], strides = [1, 1]} : vector<128x32xbf16> to vector<128x8xbf16>
    %cst_25 = arith.constant dense<0.000000e+00> : vector<8x128xf32>
    %61 = tpu.matmul %59, %60, %cst_25 {dimension_numbers = #tpu.dot_dimension_numbers<[1], [1], [0], [0], [0, 0, 1, 0], [], []>} : vector<8x8xbf16>, vector<128x8xbf16>, vector<8x128xf32> -> vector<8x128xf32>
    %62 = vector.broadcast %20 : vector<1x128xf32> to vector<8x128xf32>
    %63 = arith.addf %61, %62 : vector<8x128xf32>
    %cst_26 = arith.constant dense<0xFF800000> : vector<8xf32>
    %64 = vector.multi_reduction <maximumf>, %63, %cst_26 [1] : vector<8x128xf32> to vector<8xf32>
    %65 = vector.shape_cast %64 : vector<8xf32> to vector<8x1xf32>
    %66 = vector.broadcast %65 : vector<8x1xf32> to vector<8x128xf32>
    %67 = arith.subf %63, %66 : vector<8x128xf32>
    %68 = math.exp %67 : vector<8x128xf32>
    %cst_27 = arith.constant dense<0.000000e+00> : vector<8xf32>
    %69 = vector.multi_reduction <add>, %68, %cst_27 [1] : vector<8x128xf32> to vector<8xf32>
    %70 = vector.shape_cast %69 : vector<8xf32> to vector<8x1xf32>
    %71 = tpu.reciprocal %70 {approx = true} : vector<8x1xf32> -> vector<8x1xf32>
    %72 = arith.truncf %68 : vector<8x128xf32> to vector<8x128xbf16>
    %73 = vector.extract_strided_slice %18 {offsets = [0, 16], sizes = [128, 8], strides = [1, 1]} : vector<128x32xbf16> to vector<128x8xbf16>
    %cst_28 = arith.constant dense<0.000000e+00> : vector<8x8xf32>
    %74 = tpu.matmul %72, %73, %cst_28 {dimension_numbers = #tpu.dot_dimension_numbers<[1], [0], [0], [1], [0, 0, 1, 1], [], []>} : vector<8x128xbf16>, vector<128x8xbf16>, vector<8x8xf32> -> vector<8x8xf32>
    %75 = vector.broadcast %71 : vector<8x1xf32> to vector<8x8xf32>
    %76 = arith.mulf %74, %75 : vector<8x8xf32>
    %77 = arith.truncf %76 : vector<8x8xf32> to vector<8x8xbf16>
    %78 = vector.extract_strided_slice %15 {offsets = [0, 24], sizes = [8, 8], strides = [1, 1]} : vector<8x32xbf16> to vector<8x8xbf16>
    %79 = vector.extract_strided_slice %17 {offsets = [0, 24], sizes = [128, 8], strides = [1, 1]} : vector<128x32xbf16> to vector<128x8xbf16>
    %cst_29 = arith.constant dense<0.000000e+00> : vector<8x128xf32>
    %80 = tpu.matmul %78, %79, %cst_29 {dimension_numbers = #tpu.dot_dimension_numbers<[1], [1], [0], [0], [0, 0, 1, 0], [], []>} : vector<8x8xbf16>, vector<128x8xbf16>, vector<8x128xf32> -> vector<8x128xf32>
    %81 = vector.broadcast %20 : vector<1x128xf32> to vector<8x128xf32>
    %82 = arith.addf %80, %81 : vector<8x128xf32>
    %cst_30 = arith.constant dense<0xFF800000> : vector<8xf32>
    %83 = vector.multi_reduction <maximumf>, %82, %cst_30 [1] : vector<8x128xf32> to vector<8xf32>
    %84 = vector.shape_cast %83 : vector<8xf32> to vector<8x1xf32>
    %85 = vector.broadcast %84 : vector<8x1xf32> to vector<8x128xf32>
    %86 = arith.subf %82, %85 : vector<8x128xf32>
    %87 = math.exp %86 : vector<8x128xf32>
    %cst_31 = arith.constant dense<0.000000e+00> : vector<8xf32>
    %88 = vector.multi_reduction <add>, %87, %cst_31 [1] : vector<8x128xf32> to vector<8xf32>
    %89 = vector.shape_cast %88 : vector<8xf32> to vector<8x1xf32>
    %90 = tpu.reciprocal %89 {approx = true} : vector<8x1xf32> -> vector<8x1xf32>
    %91 = arith.truncf %87 : vector<8x128xf32> to vector<8x128xbf16>
    %92 = vector.extract_strided_slice %18 {offsets = [0, 24], sizes = [128, 8], strides = [1, 1]} : vector<128x32xbf16> to vector<128x8xbf16>
    %cst_32 = arith.constant dense<0.000000e+00> : vector<8x8xf32>
    %93 = tpu.matmul %91, %92, %cst_32 {dimension_numbers = #tpu.dot_dimension_numbers<[1], [0], [0], [1], [0, 0, 1, 1], [], []>} : vector<8x128xbf16>, vector<128x8xbf16>, vector<8x8xf32> -> vector<8x8xf32>
    %94 = vector.broadcast %90 : vector<8x1xf32> to vector<8x8xf32>
    %95 = arith.mulf %93, %94 : vector<8x8xf32>
    %96 = arith.truncf %95 : vector<8x8xf32> to vector<8x8xbf16>
    %97 = tpu.concatenate %39, %58, %77, %96 in 1 : vector<8x8xbf16>, vector<8x8xbf16>, vector<8x8xbf16>, vector<8x8xbf16> -> vector<8x32xbf16>
    %c0_33 = arith.constant 0 : index
    %c0_34 = arith.constant 0 : index
    %98 = vector.load %arg14[%c0_33, %c0_34] : memref<8x32xbf16, #tpu.memory_space<vmem>>, vector<8x32xbf16>
    tpu.vector_store %arg14[%c0_33, %c0_34], %97 {strides = array<i32>} : memref<8x32xbf16, #tpu.memory_space<vmem>>, vector<8x32xbf16>,
    %c0_35 = arith.constant 0 : index
    %c0_36 = arith.constant 0 : index
    %99 = vector.load %arg14[%c0_35, %c0_36] : memref<8x32xbf16, #tpu.memory_space<vmem>>, vector<8x32xbf16>
    %c0_37 = arith.constant 0 : index
    %c0_38 = arith.constant 0 : index
    %100 = vector.load %arg9[%c0_37, %c0_38] : memref<32x32xbf16, #tpu.memory_space<vmem>>, vector<32x32xbf16>
    %cst_39 = arith.constant dense<0.000000e+00> : vector<8x32xf32>
    %101 = tpu.matmul %99, %100, %cst_39 {dimension_numbers = #tpu.dot_dimension_numbers<[1], [0], [0], [1], [0, 0, 1, 1], [], []>} : vector<8x32xbf16>, vector<32x32xbf16>, vector<8x32xf32> -> vector<8x32xf32>
    %c0_40 = arith.constant 0 : index
    %c0_41 = arith.constant 0 : index
    %102 = vector.load %arg10[%c0_40, %c0_41] : memref<1x32xf32, #tpu.memory_space<vmem>>, vector<1x32xf32>
    %103 = vector.broadcast %102 : vector<1x32xf32> to vector<8x32xf32>
    %104 = arith.addf %101, %103 : vector<8x32xf32>
    %105 = arith.addf %1, %104 : vector<8x32xf32>
    %cst_42 = arith.constant dense<0.000000e+00> : vector<8xf32>
    %106 = vector.multi_reduction <add>, %105, %cst_42 [1] : vector<8x32xf32> to vector<8xf32>
    %107 = vector.shape_cast %106 : vector<8xf32> to vector<8x1xf32>
    %cst_43 = arith.constant 3.200000e+01 : f32
    %108 = vector.broadcast %cst_43 : f32 to vector<8x1xf32>
    %109 = arith.divf %107, %108 : vector<8x1xf32>
    %110 = vector.broadcast %109 : vector<8x1xf32> to vector<8x32xf32>
    %111 = arith.subf %105, %110 : vector<8x32xf32>
    %112 = arith.mulf %111, %111 : vector<8x32xf32>
    %cst_44 = arith.constant dense<0.000000e+00> : vector<8xf32>
    %113 = vector.multi_reduction <add>, %112, %cst_44 [1] : vector<8x32xf32> to vector<8xf32>
    %114 = vector.shape_cast %113 : vector<8xf32> to vector<8x1xf32>
    %cst_45 = arith.constant 3.200000e+01 : f32
    %115 = vector.broadcast %cst_45 : f32 to vector<8x1xf32>
    %116 = arith.divf %114, %115 : vector<8x1xf32>
    %117 = vector.broadcast %109 : vector<8x1xf32> to vector<8x32xf32>
    %118 = arith.subf %105, %117 : vector<8x32xf32>
    %cst_46 = arith.constant 9.99999997E-7 : f32
    %119 = vector.broadcast %cst_46 : f32 to vector<8x1xf32>
    %120 = arith.addf %116, %119 : vector<8x1xf32>
    %121 = math.rsqrt %120 : vector<8x1xf32>
    %122 = vector.broadcast %121 : vector<8x1xf32> to vector<8x32xf32>
    %123 = arith.mulf %118, %122 : vector<8x32xf32>
    %c0_47 = arith.constant 0 : index
    %c0_48 = arith.constant 0 : index
    %124 = vector.load %arg11[%c0_47, %c0_48] : memref<1x32xf32, #tpu.memory_space<vmem>>, vector<1x32xf32>
    %125 = vector.broadcast %124 : vector<1x32xf32> to vector<8x32xf32>
    %126 = arith.mulf %123, %125 : vector<8x32xf32>
    %c0_49 = arith.constant 0 : index
    %c0_50 = arith.constant 0 : index
    %127 = vector.load %arg12[%c0_49, %c0_50] : memref<1x32xf32, #tpu.memory_space<vmem>>, vector<1x32xf32>
    %128 = vector.broadcast %127 : vector<1x32xf32> to vector<8x32xf32>
    %129 = arith.addf %126, %128 : vector<8x32xf32>
    %c0_51 = arith.constant 0 : index
    %c0_52 = arith.constant 0 : index
    %c0_53 = arith.constant 0 : index
    %130 = vector.load %arg13[%c0_51, %c0_52, %c0_53] : memref<1x8x32xf32, #tpu.memory_space<vmem>>, vector<1x8x32xf32>
    %131 = vector.shape_cast %130 : vector<1x8x32xf32> to vector<8x32xf32>
    %132 = vector.shape_cast %129 : vector<8x32xf32> to vector<1x8x32xf32>
    tpu.vector_store %arg13[%c0_51, %c0_52, %c0_53], %132 {strides = array<i32>} : memref<1x8x32xf32, #tpu.memory_space<vmem>>, vector<1x8x32xf32>,
    return
  }
  func.func @transform_0(%arg0: i32, %arg1: i32) -> (i32, i32, i32) {
    %c0_i32 = arith.constant 0 : i32
    %c0_i32_0 = arith.constant 0 : i32
    return %arg0, %arg1, %c0_i32 : i32, i32, i32
  }
  func.func @transform_1(%arg0: i32, %arg1: i32) -> (i32, i32, i32) {
    %c0_i32 = arith.constant 0 : i32
    %c0_i32_0 = arith.constant 0 : i32
    %c0_i32_1 = arith.constant 0 : i32
    return %arg0, %c0_i32, %c0_i32_0 : i32, i32, i32
  }
  func.func @transform_2(%arg0: i32, %arg1: i32) -> (i32, i32, i32) {
    %c0_i32 = arith.constant 0 : i32
    %c0_i32_0 = arith.constant 0 : i32
    %c0_i32_1 = arith.constant 0 : i32
    return %arg0, %c0_i32, %c0_i32_0 : i32, i32, i32
  }
  func.func @transform_3(%arg0: i32, %arg1: i32) -> (i32, i32) {
    %c0_i32 = arith.constant 0 : i32
    %c0_i32_0 = arith.constant 0 : i32
    %c0_i32_1 = arith.constant 0 : i32
    return %c0_i32, %c0_i32_0 : i32, i32
  }
  func.func @transform_4(%arg0: i32, %arg1: i32) -> (i32, i32) {
    %c0_i32 = arith.constant 0 : i32
    %c0_i32_0 = arith.constant 0 : i32
    %c0_i32_1 = arith.constant 0 : i32
    return %c0_i32, %c0_i32_0 : i32, i32
  }
  func.func @transform_5(%arg0: i32, %arg1: i32) -> (i32, i32) {
    %c0_i32 = arith.constant 0 : i32
    %c0_i32_0 = arith.constant 0 : i32
    %c0_i32_1 = arith.constant 0 : i32
    return %c0_i32, %c0_i32_0 : i32, i32
  }
  func.func @transform_6(%arg0: i32, %arg1: i32) -> (i32, i32) {
    %c0_i32 = arith.constant 0 : i32
    %c0_i32_0 = arith.constant 0 : i32
    %c0_i32_1 = arith.constant 0 : i32
    return %c0_i32, %c0_i32_0 : i32, i32
  }
  func.func @transform_7(%arg0: i32, %arg1: i32) -> (i32, i32) {
    %c0_i32 = arith.constant 0 : i32
    %c0_i32_0 = arith.constant 0 : i32
    %c0_i32_1 = arith.constant 0 : i32
    return %c0_i32, %c0_i32_0 : i32, i32
  }
  func.func @transform_8(%arg0: i32, %arg1: i32) -> (i32, i32) {
    %c0_i32 = arith.constant 0 : i32
    %c0_i32_0 = arith.constant 0 : i32
    %c0_i32_1 = arith.constant 0 : i32
    return %c0_i32, %c0_i32_0 : i32, i32
  }
  func.func @transform_9(%arg0: i32, %arg1: i32) -> (i32, i32) {
    %c0_i32 = arith.constant 0 : i32
    %c0_i32_0 = arith.constant 0 : i32
    %c0_i32_1 = arith.constant 0 : i32
    return %c0_i32, %c0_i32_0 : i32, i32
  }
  func.func @transform_10(%arg0: i32, %arg1: i32) -> (i32, i32) {
    %c0_i32 = arith.constant 0 : i32
    %c0_i32_0 = arith.constant 0 : i32
    %c0_i32_1 = arith.constant 0 : i32
    return %c0_i32, %c0_i32_0 : i32, i32
  }
  func.func @transform_11(%arg0: i32, %arg1: i32) -> (i32, i32, i32) {
    %c0_i32 = arith.constant 0 : i32
    %c0_i32_0 = arith.constant 0 : i32
    return %arg0, %arg1, %c0_i32 : i32, i32, i32
  }
}

module attributes {stable_mosaic.version = 11 : i64} {
  func.func @_ga_kernel(%arg0: i32, %arg1: i32, %arg2: memref<1x8x32xf32, #tpu.memory_space<vmem>>, %arg3: memref<1x128x32xbf16, #tpu.memory_space<vmem>>, %arg4: memref<1x1x128xf32, #tpu.memory_space<vmem>>, %arg5: memref<32x32xbf16, #tpu.memory_space<vmem>>, %arg6: memref<1x32xf32, #tpu.memory_space<vmem>>, %arg7: memref<32x64xbf16, #tpu.memory_space<vmem>>, %arg8: memref<1x64xf32, #tpu.memory_space<vmem>>, %arg9: memref<32x32xbf16, #tpu.memory_space<vmem>>, %arg10: memref<1x32xf32, #tpu.memory_space<vmem>>, %arg11: memref<1x32xf32, #tpu.memory_space<vmem>>, %arg12: memref<1x32xf32, #tpu.memory_space<vmem>>, %arg13: memref<1x8x32xf32, #tpu.memory_space<vmem>>, %arg14: memref<8x32xbf16, #tpu.memory_space<vmem>>) attributes {dimension_semantics = [#tpu.dimension_semantics<parallel>, #tpu.dimension_semantics<parallel>], iteration_bounds = array<i64: 2, 1>, scalar_prefetch = 0 : i64, scratch_operands = 1 : i64, tpu.core_type = #tpu.core_type<tc>, window_params = [{transform_indices = @transform_0, window_bounds = array<i64: 1, 8, 32>}, {transform_indices = @transform_1, window_bounds = array<i64: 1, 128, 32>}, {transform_indices = @transform_2, window_bounds = array<i64: 1, 1, 128>}, {pipeline_mode = #tpu.pipeline_mode<synchronous>, transform_indices = @transform_3, window_bounds = array<i64: 32, 32>}, {pipeline_mode = #tpu.pipeline_mode<synchronous>, transform_indices = @transform_4, window_bounds = array<i64: 1, 32>}, {pipeline_mode = #tpu.pipeline_mode<synchronous>, transform_indices = @transform_5, window_bounds = array<i64: 32, 64>}, {pipeline_mode = #tpu.pipeline_mode<synchronous>, transform_indices = @transform_6, window_bounds = array<i64: 1, 64>}, {pipeline_mode = #tpu.pipeline_mode<synchronous>, transform_indices = @transform_7, window_bounds = array<i64: 32, 32>}, {pipeline_mode = #tpu.pipeline_mode<synchronous>, transform_indices = @transform_8, window_bounds = array<i64: 1, 32>}, {pipeline_mode = #tpu.pipeline_mode<synchronous>, transform_indices = @transform_9, window_bounds = array<i64: 1, 32>}, {pipeline_mode = #tpu.pipeline_mode<synchronous>, transform_indices = @transform_10, window_bounds = array<i64: 1, 32>}, {transform_indices = @transform_11, window_bounds = array<i64: 1, 8, 32>}]} {
    %c0 = arith.constant 0 : index
    %c0_0 = arith.constant 0 : index
    %c0_1 = arith.constant 0 : index
    %0 = vector.load %arg2[%c0, %c0_0, %c0_1] : memref<1x8x32xf32, #tpu.memory_space<vmem>>, vector<1x8x32xf32>
    %1 = vector.shape_cast %0 : vector<1x8x32xf32> to vector<8x32xf32>
    %c0_2 = arith.constant 0 : index
    %c0_3 = arith.constant 0 : index
    %c0_4 = arith.constant 0 : index
    %2 = vector.load %arg3[%c0_2, %c0_3, %c0_4] : memref<1x128x32xbf16, #tpu.memory_space<vmem>>, vector<1x128x32xbf16>
    %3 = vector.shape_cast %2 : vector<1x128x32xbf16> to vector<128x32xbf16>
    %4 = arith.truncf %1 : vector<8x32xf32> to vector<8x32xbf16>
    %c0_5 = arith.constant 0 : index
    %c0_6 = arith.constant 0 : index
    %5 = vector.load %arg5[%c0_5, %c0_6] : memref<32x32xbf16, #tpu.memory_space<vmem>>, vector<32x32xbf16>
    %cst = arith.constant dense<0.000000e+00> : vector<8x32xf32>
    %6 = tpu.matmul %4, %5, %cst {dimension_numbers = #tpu.dot_dimension_numbers<[1], [0], [0], [1], [0, 0, 1, 1], [], []>} : vector<8x32xbf16>, vector<32x32xbf16>, vector<8x32xf32> -> vector<8x32xf32>
    %c0_7 = arith.constant 0 : index
    %c0_8 = arith.constant 0 : index
    %7 = vector.load %arg6[%c0_7, %c0_8] : memref<1x32xf32, #tpu.memory_space<vmem>>, vector<1x32xf32>
    %8 = vector.broadcast %7 : vector<1x32xf32> to vector<8x32xf32>
    %9 = arith.addf %6, %8 : vector<8x32xf32>
    %c0_9 = arith.constant 0 : index
    %c0_10 = arith.constant 0 : index
    %10 = vector.load %arg7[%c0_9, %c0_10] : memref<32x64xbf16, #tpu.memory_space<vmem>>, vector<32x64xbf16>
    %cst_11 = arith.constant dense<0.000000e+00> : vector<128x64xf32>
    %11 = tpu.matmul %3, %10, %cst_11 {dimension_numbers = #tpu.dot_dimension_numbers<[1], [0], [0], [1], [0, 0, 1, 1], [], []>} : vector<128x32xbf16>, vector<32x64xbf16>, vector<128x64xf32> -> vector<128x64xf32>
    %c0_12 = arith.constant 0 : index
    %c0_13 = arith.constant 0 : index
    %12 = vector.load %arg8[%c0_12, %c0_13] : memref<1x64xf32, #tpu.memory_space<vmem>>, vector<1x64xf32>
    %13 = vector.broadcast %12 : vector<1x64xf32> to vector<128x64xf32>
    %14 = arith.addf %11, %13 : vector<128x64xf32>
    %15 = arith.truncf %9 : vector<8x32xf32> to vector<8x32xbf16>
    %16 = arith.truncf %14 : vector<128x64xf32> to vector<128x64xbf16>
    %17 = vector.extract_strided_slice %16 {offsets = [0, 0], sizes = [128, 32], strides = [1, 1]} : vector<128x64xbf16> to vector<128x32xbf16>
    %18 = vector.extract_strided_slice %16 {offsets = [0, 32], sizes = [128, 32], strides = [1, 1]} : vector<128x64xbf16> to vector<128x32xbf16>
    %c0_14 = arith.constant 0 : index
    %c0_15 = arith.constant 0 : index
    %c0_16 = arith.constant 0 : index
    %19 = vector.load %arg4[%c0_14, %c0_15, %c0_16] : memref<1x1x128xf32, #tpu.memory_space<vmem>>, vector<1x1x128xf32>
    %20 = vector.shape_cast %19 : vector<1x1x128xf32> to vector<1x128xf32>
    %21 = vector.extract_strided_slice %15 {offsets = [0, 0], sizes = [8, 8], strides = [1, 1]} : vector<8x32xbf16> to vector<8x8xbf16>
    %22 = vector.extract_strided_slice %17 {offsets = [0, 0], sizes = [128, 8], strides = [1, 1]} : vector<128x32xbf16> to vector<128x8xbf16>
    %cst_17 = arith.constant dense<0.000000e+00> : vector<8x128xf32>
    %23 = tpu.matmul %21, %22, %cst_17 {dimension_numbers = #tpu.dot_dimension_numbers<[1], [1], [0], [0], [0, 0, 1, 0], [], []>} : vector<8x8xbf16>, vector<128x8xbf16>, vector<8x128xf32> -> vector<8x128xf32>
    %24 = vector.broadcast %20 : vector<1x128xf32> to vector<8x128xf32>
    %25 = arith.addf %23, %24 : vector<8x128xf32>
    %cst_18 = arith.constant dense<0xFF800000> : vector<8xf32>
    %26 = vector.multi_reduction <maximumf>, %25, %cst_18 [1] : vector<8x128xf32> to vector<8xf32>
    %27 = vector.shape_cast %26 : vector<8xf32> to vector<8x1xf32>
    %28 = vector.broadcast %27 : vector<8x1xf32> to vector<8x128xf32>
    %29 = arith.subf %25, %28 : vector<8x128xf32>
    %30 = math.exp %29 : vector<8x128xf32>
    %cst_19 = arith.constant dense<0.000000e+00> : vector<8xf32>
    %31 = vector.multi_reduction <add>, %30, %cst_19 [1] : vector<8x128xf32> to vector<8xf32>
    %32 = vector.shape_cast %31 : vector<8xf32> to vector<8x1xf32>
    %33 = tpu.reciprocal %32 {approx = true} : vector<8x1xf32> -> vector<8x1xf32>
    %34 = arith.truncf %30 : vector<8x128xf32> to vector<8x128xbf16>
    %35 = vector.extract_strided_slice %18 {offsets = [0, 0], sizes = [128, 8], strides = [1, 1]} : vector<128x32xbf16> to vector<128x8xbf16>
    %cst_20 = arith.constant dense<0.000000e+00> : vector<8x8xf32>
    %36 = tpu.matmul %34, %35, %cst_20 {dimension_numbers = #tpu.dot_dimension_numbers<[1], [0], [0], [1], [0, 0, 1, 1], [], []>} : vector<8x128xbf16>, vector<128x8xbf16>, vector<8x8xf32> -> vector<8x8xf32>
    %37 = vector.broadcast %33 : vector<8x1xf32> to vector<8x8xf32>
    %38 = arith.mulf %36, %37 : vector<8x8xf32>
    %39 = arith.truncf %38 : vector<8x8xf32> to vector<8x8xbf16>
    %40 = vector.extract_strided_slice %15 {offsets = [0, 8], sizes = [8, 8], strides = [1, 1]} : vector<8x32xbf16> to vector<8x8xbf16>
    %41 = vector.extract_strided_slice %17 {offsets = [0, 8], sizes = [128, 8], strides = [1, 1]} : vector<128x32xbf16> to vector<128x8xbf16>
    %cst_21 = arith.constant dense<0.000000e+00> : vector<8x128xf32>
    %42 = tpu.matmul %40, %41, %cst_21 {dimension_numbers = #tpu.dot_dimension_numbers<[1], [1], [0], [0], [0, 0, 1, 0], [], []>} : vector<8x8xbf16>, vector<128x8xbf16>, vector<8x128xf32> -> vector<8x128xf32>
    %43 = vector.broadcast %20 : vector<1x128xf32> to vector<8x128xf32>
    %44 = arith.addf %42, %43 : vector<8x128xf32>
    %cst_22 = arith.constant dense<0xFF800000> : vector<8xf32>
    %45 = vector.multi_reduction <maximumf>, %44, %cst_22 [1] : vector<8x128xf32> to vector<8xf32>
    %46 = vector.shape_cast %45 : vector<8xf32> to vector<8x1xf32>
    %47 = vector.broadcast %46 : vector<8x1xf32> to vector<8x128xf32>
    %48 = arith.subf %44, %47 : vector<8x128xf32>
    %49 = math.exp %48 : vector<8x128xf32>
    %cst_23 = arith.constant dense<0.000000e+00> : vector<8xf32>
    %50 = vector.multi_reduction <add>, %49, %cst_23 [1] : vector<8x128xf32> to vector<8xf32>
    %51 = vector.shape_cast %50 : vector<8xf32> to vector<8x1xf32>
    %52 = tpu.reciprocal %51 {approx = true} : vector<8x1xf32> -> vector<8x1xf32>
    %53 = arith.truncf %49 : vector<8x128xf32> to vector<8x128xbf16>
    %54 = vector.extract_strided_slice %18 {offsets = [0, 8], sizes = [128, 8], strides = [1, 1]} : vector<128x32xbf16> to vector<128x8xbf16>
    %cst_24 = arith.constant dense<0.000000e+00> : vector<8x8xf32>
    %55 = tpu.matmul %53, %54, %cst_24 {dimension_numbers = #tpu.dot_dimension_numbers<[1], [0], [0], [1], [0, 0, 1, 1], [], []>} : vector<8x128xbf16>, vector<128x8xbf16>, vector<8x8xf32> -> vector<8x8xf32>
    %56 = vector.broadcast %52 : vector<8x1xf32> to vector<8x8xf32>
    %57 = arith.mulf %55, %56 : vector<8x8xf32>
    %58 = arith.truncf %57 : vector<8x8xf32> to vector<8x8xbf16>
    %59 = vector.extract_strided_slice %15 {offsets = [0, 16], sizes = [8, 8], strides = [1, 1]} : vector<8x32xbf16> to vector<8x8xbf16>
    %60 = vector.extract_strided_slice %17 {offsets = [0, 16], sizes = [128, 8], strides = [1, 1]} : vector<128x32xbf16> to vector<128x8xbf16>
    %cst_25 = arith.constant dense<0.000000e+00> : vector<8x128xf32>
    %61 = tpu.matmul %59, %60, %cst_25 {dimension_numbers = #tpu.dot_dimension_numbers<[1], [1], [0], [0], [0, 0, 1, 0], [], []>} : vector<8x8xbf16>, vector<128x8xbf16>, vector<8x128xf32> -> vector<8x128xf32>
    %62 = vector.broadcast %20 : vector<1x128xf32> to vector<8x128xf32>
    %63 = arith.addf %61, %62 : vector<8x128xf32>
    %cst_26 = arith.constant dense<0xFF800000> : vector<8xf32>
    %64 = vector.multi_reduction <maximumf>, %63, %cst_26 [1] : vector<8x128xf32> to vector<8xf32>
    %65 = vector.shape_cast %64 : vector<8xf32> to vector<8x1xf32>
    %66 = vector.broadcast %65 : vector<8x1xf32> to vector<8x128xf32>
    %67 = arith.subf %63, %66 : vector<8x128xf32>
    %68 = math.exp %67 : vector<8x128xf32>
    %cst_27 = arith.constant dense<0.000000e+00> : vector<8xf32>
    %69 = vector.multi_reduction <add>, %68, %cst_27 [1] : vector<8x128xf32> to vector<8xf32>
    %70 = vector.shape_cast %69 : vector<8xf32> to vector<8x1xf32>
    %71 = tpu.reciprocal %70 {approx = true} : vector<8x1xf32> -> vector<8x1xf32>
    %72 = arith.truncf %68 : vector<8x128xf32> to vector<8x128xbf16>
    %73 = vector.extract_strided_slice %18 {offsets = [0, 16], sizes = [128, 8], strides = [1, 1]} : vector<128x32xbf16> to vector<128x8xbf16>
    %cst_28 = arith.constant dense<0.000000e+00> : vector<8x8xf32>
    %74 = tpu.matmul %72, %73, %cst_28 {dimension_numbers = #tpu.dot_dimension_numbers<[1], [0], [0], [1], [0, 0, 1, 1], [], []>} : vector<8x128xbf16>, vector<128x8xbf16>, vector<8x8xf32> -> vector<8x8xf32>
    %75 = vector.broadcast %71 : vector<8x1xf32> to vector<8x8xf32>
    %76 = arith.mulf %74, %75 : vector<8x8xf32>
    %77 = arith.truncf %76 : vector<8x8xf32> to vector<8x8xbf16>
    %78 = vector.extract_strided_slice %15 {offsets = [0, 24], sizes = [8, 8], strides = [1, 1]} : vector<8x32xbf16> to vector<8x8xbf16>
    %79 = vector.extract_strided_slice %17 {offsets = [0, 24], sizes = [128, 8], strides = [1, 1]} : vector<128x32xbf16> to vector<128x8xbf16>
    %cst_29 = arith.constant dense<0.000000e+00> : vector<8x128xf32>
    %80 = tpu.matmul %78, %79, %cst_29 {dimension_numbers = #tpu.dot_dimension_numbers<[1], [1], [0], [0], [0, 0, 1, 0], [], []>} : vector<8x8xbf16>, vector<128x8xbf16>, vector<8x128xf32> -> vector<8x128xf32>
    %81 = vector.broadcast %20 : vector<1x128xf32> to vector<8x128xf32>
    %82 = arith.addf %80, %81 : vector<8x128xf32>
    %cst_30 = arith.constant dense<0xFF800000> : vector<8xf32>
    %83 = vector.multi_reduction <maximumf>, %82, %cst_30 [1] : vector<8x128xf32> to vector<8xf32>
    %84 = vector.shape_cast %83 : vector<8xf32> to vector<8x1xf32>
    %85 = vector.broadcast %84 : vector<8x1xf32> to vector<8x128xf32>
    %86 = arith.subf %82, %85 : vector<8x128xf32>
    %87 = math.exp %86 : vector<8x128xf32>
    %cst_31 = arith.constant dense<0.000000e+00> : vector<8xf32>
    %88 = vector.multi_reduction <add>, %87, %cst_31 [1] : vector<8x128xf32> to vector<8xf32>
    %89 = vector.shape_cast %88 : vector<8xf32> to vector<8x1xf32>
    %90 = tpu.reciprocal %89 {approx = true} : vector<8x1xf32> -> vector<8x1xf32>
    %91 = arith.truncf %87 : vector<8x128xf32> to vector<8x128xbf16>
    %92 = vector.extract_strided_slice %18 {offsets = [0, 24], sizes = [128, 8], strides = [1, 1]} : vector<128x32xbf16> to vector<128x8xbf16>
    %cst_32 = arith.constant dense<0.000000e+00> : vector<8x8xf32>
    %93 = tpu.matmul %91, %92, %cst_32 {dimension_numbers = #tpu.dot_dimension_numbers<[1], [0], [0], [1], [0, 0, 1, 1], [], []>} : vector<8x128xbf16>, vector<128x8xbf16>, vector<8x8xf32> -> vector<8x8xf32>
    %94 = vector.broadcast %90 : vector<8x1xf32> to vector<8x8xf32>
    %95 = arith.mulf %93, %94 : vector<8x8xf32>
    %96 = arith.truncf %95 : vector<8x8xf32> to vector<8x8xbf16>
    %97 = tpu.concatenate %39, %58, %77, %96 in 1 : vector<8x8xbf16>, vector<8x8xbf16>, vector<8x8xbf16>, vector<8x8xbf16> -> vector<8x32xbf16>
    %c0_33 = arith.constant 0 : index
    %c0_34 = arith.constant 0 : index
    %98 = vector.load %arg14[%c0_33, %c0_34] : memref<8x32xbf16, #tpu.memory_space<vmem>>, vector<8x32xbf16>
    tpu.vector_store %arg14[%c0_33, %c0_34], %97 {strides = array<i32>} : memref<8x32xbf16, #tpu.memory_space<vmem>>, vector<8x32xbf16>,
    %c0_35 = arith.constant 0 : index
    %c0_36 = arith.constant 0 : index
    %99 = vector.load %arg14[%c0_35, %c0_36] : memref<8x32xbf16, #tpu.memory_space<vmem>>, vector<8x32xbf16>
    %c0_37 = arith.constant 0 : index
    %c0_38 = arith.constant 0 : index
    %100 = vector.load %arg9[%c0_37, %c0_38] : memref<32x32xbf16, #tpu.memory_space<vmem>>, vector<32x32xbf16>
    %cst_39 = arith.constant dense<0.000000e+00> : vector<8x32xf32>
    %101 = tpu.matmul %99, %100, %cst_39 {dimension_numbers = #tpu.dot_dimension_numbers<[1], [0], [0], [1], [0, 0, 1, 1], [], []>} : vector<8x32xbf16>, vector<32x32xbf16>, vector<8x32xf32> -> vector<8x32xf32>
    %c0_40 = arith.constant 0 : index
    %c0_41 = arith.constant 0 : index
    %102 = vector.load %arg10[%c0_40, %c0_41] : memref<1x32xf32, #tpu.memory_space<vmem>>, vector<1x32xf32>
    %103 = vector.broadcast %102 : vector<1x32xf32> to vector<8x32xf32>
    %104 = arith.addf %101, %103 : vector<8x32xf32>
    %105 = arith.addf %1, %104 : vector<8x32xf32>
    %cst_42 = arith.constant dense<0.000000e+00> : vector<8xf32>
    %106 = vector.multi_reduction <add>, %105, %cst_42 [1] : vector<8x32xf32> to vector<8xf32>
    %107 = vector.shape_cast %106 : vector<8xf32> to vector<8x1xf32>
    %cst_43 = arith.constant 3.200000e+01 : f32
    %108 = vector.broadcast %cst_43 : f32 to vector<8x1xf32>
    %109 = arith.divf %107, %108 : vector<8x1xf32>
    %110 = vector.broadcast %109 : vector<8x1xf32> to vector<8x32xf32>
    %111 = arith.subf %105, %110 : vector<8x32xf32>
    %112 = arith.mulf %111, %111 : vector<8x32xf32>
    %cst_44 = arith.constant dense<0.000000e+00> : vector<8xf32>
    %113 = vector.multi_reduction <add>, %112, %cst_44 [1] : vector<8x32xf32> to vector<8xf32>
    %114 = vector.shape_cast %113 : vector<8xf32> to vector<8x1xf32>
    %cst_45 = arith.constant 3.200000e+01 : f32
    %115 = vector.broadcast %cst_45 : f32 to vector<8x1xf32>
    %116 = arith.divf %114, %115 : vector<8x1xf32>
    %117 = vector.broadcast %109 : vector<8x1xf32> to vector<8x32xf32>
    %118 = arith.subf %105, %117 : vector<8x32xf32>
    %cst_46 = arith.constant 9.99999997E-7 : f32
    %119 = vector.broadcast %cst_46 : f32 to vector<8x1xf32>
    %120 = arith.addf %116, %119 : vector<8x1xf32>
    %121 = math.rsqrt %120 : vector<8x1xf32>
    %122 = vector.broadcast %121 : vector<8x1xf32> to vector<8x32xf32>
    %123 = arith.mulf %118, %122 : vector<8x32xf32>
    %c0_47 = arith.constant 0 : index
    %c0_48 = arith.constant 0 : index
    %124 = vector.load %arg11[%c0_47, %c0_48] : memref<1x32xf32, #tpu.memory_space<vmem>>, vector<1x32xf32>
    %125 = vector.broadcast %124 : vector<1x32xf32> to vector<8x32xf32>
    %126 = arith.mulf %123, %125 : vector<8x32xf32>
    %c0_49 = arith.constant 0 : index
    %c0_50 = arith.constant 0 : index
    %127 = vector.load %arg12[%c0_49, %c0_50] : memref<1x32xf32, #tpu.memory_space<vmem>>, vector<1x32xf32>
    %128 = vector.broadcast %127 : vector<1x32xf32> to vector<8x32xf32>
    %129 = arith.addf %126, %128 : vector<8x32xf32>
    %c0_51 = arith.constant 0 : index
    %c0_52 = arith.constant 0 : index
    %c0_53 = arith.constant 0 : index
    %130 = vector.load %arg13[%c0_51, %c0_52, %c0_53] : memref<1x8x32xf32, #tpu.memory_space<vmem>>, vector<1x8x32xf32>
    %131 = vector.shape_cast %130 : vector<1x8x32xf32> to vector<8x32xf32>
    %132 = vector.shape_cast %129 : vector<8x32xf32> to vector<1x8x32xf32>
    tpu.vector_store %arg13[%c0_51, %c0_52, %c0_53], %132 {strides = array<i32>} : memref<1x8x32xf32, #tpu.memory_space<vmem>>, vector<1x8x32xf32>,
    return
  }
  func.func @transform_0(%arg0: i32, %arg1: i32) -> (i32, i32, i32) {
    %c0_i32 = arith.constant 0 : i32
    %c0_i32_0 = arith.constant 0 : i32
    return %arg0, %arg1, %c0_i32 : i32, i32, i32
  }
  func.func @transform_1(%arg0: i32, %arg1: i32) -> (i32, i32, i32) {
    %c0_i32 = arith.constant 0 : i32
    %c0_i32_0 = arith.constant 0 : i32
    %c0_i32_1 = arith.constant 0 : i32
    return %arg0, %c0_i32, %c0_i32_0 : i32, i32, i32
  }
  func.func @transform_2(%arg0: i32, %arg1: i32) -> (i32, i32, i32) {
    %c0_i32 = arith.constant 0 : i32
    %c0_i32_0 = arith.constant 0 : i32
    %c0_i32_1 = arith.constant 0 : i32
    return %arg0, %c0_i32, %c0_i32_0 : i32, i32, i32
  }
  func.func @transform_3(%arg0: i32, %arg1: i32) -> (i32, i32) {
    %c0_i32 = arith.constant 0 : i32
    %c0_i32_0 = arith.constant 0 : i32
    %c0_i32_1 = arith.constant 0 : i32
    return %c0_i32, %c0_i32_0 : i32, i32
  }
  func.func @transform_4(%arg0: i32, %arg1: i32) -> (i32, i32) {
    %c0_i32 = arith.constant 0 : i32
    %c0_i32_0 = arith.constant 0 : i32
    %c0_i32_1 = arith.constant 0 : i32
    return %c0_i32, %c0_i32_0 : i32, i32
  }
  func.func @transform_5(%arg0: i32, %arg1: i32) -> (i32, i32) {
    %c0_i32 = arith.constant 0 : i32
    %c0_i32_0 = arith.constant 0 : i32
    %c0_i32_1 = arith.constant 0 : i32
    return %c0_i32, %c0_i32_0 : i32, i32
  }
  func.func @transform_6(%arg0: i32, %arg1: i32) -> (i32, i32) {
    %c0_i32 = arith.constant 0 : i32
    %c0_i32_0 = arith.constant 0 : i32
    %c0_i32_1 = arith.constant 0 : i32
    return %c0_i32, %c0_i32_0 : i32, i32
  }
  func.func @transform_7(%arg0: i32, %arg1: i32) -> (i32, i32) {
    %c0_i32 = arith.constant 0 : i32
    %c0_i32_0 = arith.constant 0 : i32
    %c0_i32_1 = arith.constant 0 : i32
    return %c0_i32, %c0_i32_0 : i32, i32
  }
  func.func @transform_8(%arg0: i32, %arg1: i32) -> (i32, i32) {
    %c0_i32 = arith.constant 0 : i32
    %c0_i32_0 = arith.constant 0 : i32
    %c0_i32_1 = arith.constant 0 : i32
    return %c0_i32, %c0_i32_0 : i32, i32
  }
  func.func @transform_9(%arg0: i32, %arg1: i32) -> (i32, i32) {
    %c0_i32 = arith.constant 0 : i32
    %c0_i32_0 = arith.constant 0 : i32
    %c0_i32_1 = arith.constant 0 : i32
    return %c0_i32, %c0_i32_0 : i32, i32
  }
  func.func @transform_10(%arg0: i32, %arg1: i32) -> (i32, i32) {
    %c0_i32 = arith.constant 0 : i32
    %c0_i32_0 = arith.constant 0 : i32
    %c0_i32_1 = arith.constant 0 : i32
    return %c0_i32, %c0_i32_0 : i32, i32
  }
  func.func @transform_11(%arg0: i32, %arg1: i32) -> (i32, i32, i32) {
    %c0_i32 = arith.constant 0 : i32
    %c0_i32_0 = arith.constant 0 : i32
    return %arg0, %arg1, %c0_i32 : i32, i32, i32
  }
}

</mosaic_0001>

<llo_original>
// kernel: tpu_custom_call.1
$region0: #{tpu_custom_call.1}
  #allocation0 [shape = 'u32[]', space=smem, size = 0x4, offset = 0x4, fixed_abs, tag = 'smem constant byte address 0x4 - core index']
  #allocation1 [shape = 'u32[144,128]{1,0:T(1,128)}', space=vmem, size = 0x12000, scoped, tag = 'internal scratch']
  #allocation2 [shape = 'bf16[8,32]{1,0:T(8,128)(2,1)}', space=vmem, size = 0x800, scoped, tag = 'scratch operand']
  %s0 = inlined_call_operand.vmem [shape: f32[2,8,32], index: 0, kind: input, shape index: {}]
  %s1 = inlined_call_operand.vmem [shape: bf16[2,128,32], index: 1, kind: input, shape index: {}]
  %s2 = inlined_call_operand.vmem [shape: f32[2,1,128], index: 2, kind: input, shape index: {}]
  %s3 = inlined_call_operand.vmem [shape: bf16[32,32], index: 3, kind: input, shape index: {}]
  %s4 = inlined_call_operand.vmem [shape: f32[1,32], index: 4, kind: input, shape index: {}]
  %s5 = inlined_call_operand.vmem [shape: bf16[32,64], index: 5, kind: input, shape index: {}]
  %s6 = inlined_call_operand.vmem [shape: f32[1,64], index: 6, kind: input, shape index: {}]
  %s7 = inlined_call_operand.vmem [shape: bf16[32,32], index: 7, kind: input, shape index: {}]
  %s8 = inlined_call_operand.vmem [shape: f32[1,32], index: 8, kind: input, shape index: {}]
  %s9 = inlined_call_operand.vmem [shape: f32[1,32], index: 9, kind: input, shape index: {}]
  %s10 = inlined_call_operand.vmem [shape: f32[1,32], index: 10, kind: input, shape index: {}]
  %s11 = inlined_call_operand.hbm [shape: f32[2,8,32], index: 11, kind: output, shape index: {}]
  %s12 = sld [smem:[#allocation0]]
  $region77: #{tpu_custom_call.1} parent=0
    _
  %s14 = ssub.s32 1, %s12
  %s15 = scalar_select 0, %s14, %s12
  $region1: #{tpu_custom_call.1} parent=0
    #allocation3 [shape = 'u8[8192]{0}', space=vmem, size = 0x2000, scoped, tag = 'output window, operand 0']
    #allocation4 [shape = 's32[2]{0}', space=sflag, size = 0x8, scoped, tag = 'scoped memory for tpu_custom_call.1']
    %16 = vsyncpa [#allocation4], 0
    %s17 = scalar_lea.sflag [#allocation4], 1
    %18 = vsyncpa %s17, 0
    loop: start=0, step=1, limit=4
    $region2: #{tpu_custom_call.1} parent=1 // loop_pre_header
      _
    $region3: #{tpu_custom_call.1} parent=1 // loop_header
      %s20 = sphi 0, %s24
      %p21 = scmp.ge.s32.totalorder %s20, 4
      %s27 = sphi 0, %s39
      %s28 = sphi 0, %s35
      %s29 = sphi 0, %s27
      %s30 = sphi 0, %s28
      %s31 = sphi 0, %s29
      %s32 = sphi 0, %s30
      %s44 = sphi 0, %s46
      %s47 = sphi 0, %s44
      %s48 = sphi 0, %s47
      %s64 = sphi 0, %s48
      %s70 = sphi 0, %s72
      %s73 = sphi 0, %s70
      %s74 = sphi 0, %s73
      %s90 = sphi 0, %s74
      %s96 = sphi 0, %s98
      %s99 = sphi 0, %s96
      %s100 = sphi 0, %s99
      %s116 = sphi 0, %s100
      %s120 = sphi 0, %s120
      %s122 = sphi 0, %s120
      %s123 = sphi 0, %s122
      %s137 = sphi 0, %s123
      %s141 = sphi 0, %s141
      %s143 = sphi 0, %s141
      %s144 = sphi 0, %s143
      %s158 = sphi 0, %s144
      %s162 = sphi 0, %s162
      %s164 = sphi 0, %s162
      %s165 = sphi 0, %s164
      %s179 = sphi 0, %s165
      %s183 = sphi 0, %s183
      %s185 = sphi 0, %s183
      %s186 = sphi 0, %s185
      %s200 = sphi 0, %s186
      %s204 = sphi 0, %s204
      %s206 = sphi 0, %s204
      %s207 = sphi 0, %s206
      %s221 = sphi 0, %s207
      %s225 = sphi 0, %s225
      %s227 = sphi 0, %s225
      %s228 = sphi 0, %s227
      %s242 = sphi 0, %s228
      %s246 = sphi 0, %s246
      %s248 = sphi 0, %s246
      %s249 = sphi 0, %s248
      %s263 = sphi 0, %s249
      %s267 = sphi 0, %s267
      %s269 = sphi 0, %s267
      %s270 = sphi 0, %s269
      %s284 = sphi 0, %s270
      %s292 = sphi 0, %s294
      %s295 = sphi 0, %s292
      %s296 = sphi 0, %s295
      %s312 = sphi 0, %s296
    $region4: #{tpu_custom_call.1} parent=1 // loop_header_branch
      %23 = sbr.rel (%p21) target = $region8
    $region5: #{tpu_custom_call.1} parent=1 // loop_body
      %s25 = ssub.s32 %s20, 1
      %s26 = ssub.s32 %s20, 2
      %s33 = sadd.s32 1, %s28
      %p34 = scmp.ge.s32.totalorder %s33, 1
      %s35 = scalar_select %p34, 0, %s33
      %s36 = sadd.s32 1, %s27
      %s37 = scalar_select %p34, %s36, %s27
      %p38 = scmp.ge.s32.totalorder %s37, 2
      %s39 = scalar_select %p38, 0, %s37
      %s40 = ssub.s32 %s27, %s39
      %s41 = ssub.s32 %s28, %s35
      %s42 = sor.u32 %s40, %s41
      %p43 = scmp.eq.s32.totalorder %s42, 0
      %s45 = sadd.s32 %s44, 1
      %s46 = scalar_select %p43, %s44, %s45
      %p49 = pneg %p43
      %p50 = scmp.eq.s32.totalorder %s20, 1
      %p51 = por %p49, %p50
      %p52 = scmp.ne.s32.totalorder %s44, %s47
      %p53 = scmp.eq.s32.totalorder %s20, 0
      %p54 = por %p52, %p53
      %p55 = scmp.ne.s32.totalorder %s44, %s47
      %p56 = scmp.eq.s32.totalorder %s25, 1
      %p57 = por %p55, %p56
      %p58 = scmp.ne.s32.totalorder %s47, %s48
      %p59 = scmp.eq.s32.totalorder %s25, 0
      %p60 = por %p58, %p59
      %p61 = scmp.ne.s32.totalorder %s47, %s48
      %p62 = scmp.eq.s32.totalorder %s26, 1
      %p63 = por %p61, %p62
      %p65 = scmp.ne.s32.totalorder %s48, %s64
      %p66 = scmp.eq.s32.totalorder %s26, 0
      %p67 = por %p65, %p66
      %s68 = ssub.s32 %s27, %s39
      %p69 = scmp.eq.s32.totalorder %s68, 0
      %s71 = sadd.s32 %s70, 1
      %s72 = scalar_select %p69, %s70, %s71
      %p75 = pneg %p69
      %p76 = scmp.eq.s32.totalorder %s20, 1
      %p77 = por %p75, %p76
      %p78 = scmp.ne.s32.totalorder %s70, %s73
      %p79 = scmp.eq.s32.totalorder %s20, 0
      %p80 = por %p78, %p79
      %p81 = scmp.ne.s32.totalorder %s70, %s73
      %p82 = scmp.eq.s32.totalorder %s25, 1
      %p83 = por %p81, %p82
      %p84 = scmp.ne.s32.totalorder %s73, %s74
      %p85 = scmp.eq.s32.totalorder %s25, 0
      %p86 = por %p84, %p85
      %p87 = scmp.ne.s32.totalorder %s73, %s74
      %p88 = scmp.eq.s32.totalorder %s26, 1
      %p89 = por %p87, %p88
      %p91 = scmp.ne.s32.totalorder %s74, %s90
      %p92 = scmp.eq.s32.totalorder %s26, 0
      %p93 = por %p91, %p92
      %s94 = ssub.s32 %s27, %s39
      %p95 = scmp.eq.s32.totalorder %s94, 0
      %s97 = sadd.s32 %s96, 1
      %s98 = scalar_select %p95, %s96, %s97
      %p101 = pneg %p95
      %p102 = scmp.eq.s32.totalorder %s20, 1
      %p103 = por %p101, %p102
      %p104 = scmp.ne.s32.totalorder %s96, %s99
      %p105 = scmp.eq.s32.totalorder %s20, 0
      %p106 = por %p104, %p105
      %p107 = scmp.ne.s32.totalorder %s96, %s99
      %p108 = scmp.eq.s32.totalorder %s25, 1
      %p109 = por %p107, %p108
      %p110 = scmp.ne.s32.totalorder %s99, %s100
      %p111 = scmp.eq.s32.totalorder %s25, 0
      %p112 = por %p110, %p111
      %p113 = scmp.ne.s32.totalorder %s99, %s100
      %p114 = scmp.eq.s32.totalorder %s26, 1
      %p115 = por %p113, %p114
      %p117 = scmp.ne.s32.totalorder %s100, %s116
      %p118 = scmp.eq.s32.totalorder %s26, 0
      %p119 = por %p117, %p118
      %s121 = sadd.s32 %s120, 1
      %p124 = scmp.eq.s32.totalorder %s20, 1
      %p125 = scmp.ne.s32.totalorder %s120, %s122
      %p126 = scmp.eq.s32.totalorder %s20, 0
      %p127 = por %p125, %p126
      %p128 = scmp.ne.s32.totalorder %s120, %s122
      %p129 = scmp.eq.s32.totalorder %s25, 1
      %p130 = por %p128, %p129
      %p131 = scmp.ne.s32.totalorder %s122, %s123
      %p132 = scmp.eq.s32.totalorder %s25, 0
      %p133 = por %p131, %p132
      %p134 = scmp.ne.s32.totalorder %s122, %s123
      %p135 = scmp.eq.s32.totalorder %s26, 1
      %p136 = por %p134, %p135
      %p138 = scmp.ne.s32.totalorder %s123, %s137
      %p139 = scmp.eq.s32.totalorder %s26, 0
      %p140 = por %p138, %p139
      %s142 = sadd.s32 %s141, 1
      %p145 = scmp.eq.s32.totalorder %s20, 1
      %p146 = scmp.ne.s32.totalorder %s141, %s143
      %p147 = scmp.eq.s32.totalorder %s20, 0
      %p148 = por %p146, %p147
      %p149 = scmp.ne.s32.totalorder %s141, %s143
      %p150 = scmp.eq.s32.totalorder %s25, 1
      %p151 = por %p149, %p150
      %p152 = scmp.ne.s32.totalorder %s143, %s144
      %p153 = scmp.eq.s32.totalorder %s25, 0
      %p154 = por %p152, %p153
      %p155 = scmp.ne.s32.totalorder %s143, %s144
      %p156 = scmp.eq.s32.totalorder %s26, 1
      %p157 = por %p155, %p156
      %p159 = scmp.ne.s32.totalorder %s144, %s158
      %p160 = scmp.eq.s32.totalorder %s26, 0
      %p161 = por %p159, %p160
      %s163 = sadd.s32 %s162, 1
      %p166 = scmp.eq.s32.totalorder %s20, 1
      %p167 = scmp.ne.s32.totalorder %s162, %s164
      %p168 = scmp.eq.s32.totalorder %s20, 0
      %p169 = por %p167, %p168
      %p170 = scmp.ne.s32.totalorder %s162, %s164
      %p171 = scmp.eq.s32.totalorder %s25, 1
      %p172 = por %p170, %p171
      %p173 = scmp.ne.s32.totalorder %s164, %s165
      %p174 = scmp.eq.s32.totalorder %s25, 0
      %p175 = por %p173, %p174
      %p176 = scmp.ne.s32.totalorder %s164, %s165
      %p177 = scmp.eq.s32.totalorder %s26, 1
      %p178 = por %p176, %p177
      %p180 = scmp.ne.s32.totalorder %s165, %s179
      %p181 = scmp.eq.s32.totalorder %s26, 0
      %p182 = por %p180, %p181
      %s184 = sadd.s32 %s183, 1
      %p187 = scmp.eq.s32.totalorder %s20, 1
      %p188 = scmp.ne.s32.totalorder %s183, %s185
      %p189 = scmp.eq.s32.totalorder %s20, 0
      %p190 = por %p188, %p189
      %p191 = scmp.ne.s32.totalorder %s183, %s185
      %p192 = scmp.eq.s32.totalorder %s25, 1
      %p193 = por %p191, %p192
      %p194 = scmp.ne.s32.totalorder %s185, %s186
      %p195 = scmp.eq.s32.totalorder %s25, 0
      %p196 = por %p194, %p195
      %p197 = scmp.ne.s32.totalorder %s185, %s186
      %p198 = scmp.eq.s32.totalorder %s26, 1
      %p199 = por %p197, %p198
      %p201 = scmp.ne.s32.totalorder %s186, %s200
      %p202 = scmp.eq.s32.totalorder %s26, 0
      %p203 = por %p201, %p202
      %s205 = sadd.s32 %s204, 1
      %p208 = scmp.eq.s32.totalorder %s20, 1
      %p209 = scmp.ne.s32.totalorder %s204, %s206
      %p210 = scmp.eq.s32.totalorder %s20, 0
      %p211 = por %p209, %p210
      %p212 = scmp.ne.s32.totalorder %s204, %s206
      %p213 = scmp.eq.s32.totalorder %s25, 1
      %p214 = por %p212, %p213
      %p215 = scmp.ne.s32.totalorder %s206, %s207
      %p216 = scmp.eq.s32.totalorder %s25, 0
      %p217 = por %p215, %p216
      %p218 = scmp.ne.s32.totalorder %s206, %s207
      %p219 = scmp.eq.s32.totalorder %s26, 1
      %p220 = por %p218, %p219
      %p222 = scmp.ne.s32.totalorder %s207, %s221
      %p223 = scmp.eq.s32.totalorder %s26, 0
      %p224 = por %p222, %p223
      %s226 = sadd.s32 %s225, 1
      %p229 = scmp.eq.s32.totalorder %s20, 1
      %p230 = scmp.ne.s32.totalorder %s225, %s227
      %p231 = scmp.eq.s32.totalorder %s20, 0
      %p232 = por %p230, %p231
      %p233 = scmp.ne.s32.totalorder %s225, %s227
      %p234 = scmp.eq.s32.totalorder %s25, 1
      %p235 = por %p233, %p234
      %p236 = scmp.ne.s32.totalorder %s227, %s228
      %p237 = scmp.eq.s32.totalorder %s25, 0
      %p238 = por %p236, %p237
      %p239 = scmp.ne.s32.totalorder %s227, %s228
      %p240 = scmp.eq.s32.totalorder %s26, 1
      %p241 = por %p239, %p240
      %p243 = scmp.ne.s32.totalorder %s228, %s242
      %p244 = scmp.eq.s32.totalorder %s26, 0
      %p245 = por %p243, %p244
      %s247 = sadd.s32 %s246, 1
      %p250 = scmp.eq.s32.totalorder %s20, 1
      %p251 = scmp.ne.s32.totalorder %s246, %s248
      %p252 = scmp.eq.s32.totalorder %s20, 0
      %p253 = por %p251, %p252
      %p254 = scmp.ne.s32.totalorder %s246, %s248
      %p255 = scmp.eq.s32.totalorder %s25, 1
      %p256 = por %p254, %p255
      %p257 = scmp.ne.s32.totalorder %s248, %s249
      %p258 = scmp.eq.s32.totalorder %s25, 0
      %p259 = por %p257, %p258
      %p260 = scmp.ne.s32.totalorder %s248, %s249
      %p261 = scmp.eq.s32.totalorder %s26, 1
      %p262 = por %p260, %p261
      %p264 = scmp.ne.s32.totalorder %s249, %s263
      %p265 = scmp.eq.s32.totalorder %s26, 0
      %p266 = por %p264, %p265
      %s268 = sadd.s32 %s267, 1
      %p271 = scmp.eq.s32.totalorder %s20, 1
      %p272 = scmp.ne.s32.totalorder %s267, %s269
      %p273 = scmp.eq.s32.totalorder %s20, 0
      %p274 = por %p272, %p273
      %p275 = scmp.ne.s32.totalorder %s267, %s269
      %p276 = scmp.eq.s32.totalorder %s25, 1
      %p277 = por %p275, %p276
      %p278 = scmp.ne.s32.totalorder %s269, %s270
      %p279 = scmp.eq.s32.totalorder %s25, 0
      %p280 = por %p278, %p279
      %p281 = scmp.ne.s32.totalorder %s269, %s270
      %p282 = scmp.eq.s32.totalorder %s26, 1
      %p283 = por %p281, %p282
      %p285 = scmp.ne.s32.totalorder %s270, %s284
      %p286 = scmp.eq.s32.totalorder %s26, 0
      %p287 = por %p285, %p286
      %s288 = ssub.s32 %s27, %s39
      %s289 = ssub.s32 %s28, %s35
      %s290 = sor.u32 %s288, %s289
      %p291 = scmp.eq.s32.totalorder %s290, 0
      %s293 = sadd.s32 %s292, 1
      %s294 = scalar_select %p291, %s292, %s293
      %p297 = pneg %p291
      %p298 = scmp.eq.s32.totalorder %s20, 1
      %p299 = por %p297, %p298
      %p300 = scmp.ne.s32.totalorder %s292, %s295
      %p301 = scmp.eq.s32.totalorder %s20, 0
      %p302 = por %p300, %p301
      %p303 = scmp.ne.s32.totalorder %s292, %s295
      %p304 = scmp.eq.s32.totalorder %s25, 1
      %p305 = por %p303, %p304
      %p306 = scmp.ne.s32.totalorder %s295, %s296
      %p307 = scmp.eq.s32.totalorder %s25, 0
      %p308 = por %p306, %p307
      %p309 = scmp.ne.s32.totalorder %s295, %s296
      %p310 = scmp.eq.s32.totalorder %s26, 1
      %p311 = por %p309, %p310
      %p313 = scmp.ne.s32.totalorder %s296, %s312
      %p314 = scmp.eq.s32.totalorder %s26, 0
      %p315 = por %p313, %p314
      %p316 = scmp.le.s32.totalorder 1, %s20
      %p317 = scmp.lt.s32.totalorder %s20, 3
      %p318 = pnand %p316, %p317
      %p319 = pneg %p318
      // Predicated region
      $region9: #{tpu_custom_call.1} parent=5 // pred_check
        _
      $region10: #{tpu_custom_call.1} parent=5 // pred_check_branch
        %321 = sbr.rel (%p318) target = $region12
      $region11: #{tpu_custom_call.1} parent=5 // pred_region
        %s322 = ssub.s32 %s20, 1
        // Predicated region
        $region13: #{tpu_custom_call.1} parent=11 // pred_check
          %p323 = pneg %p133
        $region14: #{tpu_custom_call.1} parent=11 // pred_check_branch
          %325 = sbr.rel (%p323) target = $region16
        $region15: #{tpu_custom_call.1} parent=11 // pred_region
          _
        $region16: #{tpu_custom_call.1} parent=11 // pred_fallthru
          _
        // Predicated region
        $region17: #{tpu_custom_call.1} parent=11 // pred_check
          %p326 = pneg %p154
        $region18: #{tpu_custom_call.1} parent=11 // pred_check_branch
          %328 = sbr.rel (%p326) target = $region20
        $region19: #{tpu_custom_call.1} parent=11 // pred_region
          _
        $region20: #{tpu_custom_call.1} parent=11 // pred_fallthru
          _
        // Predicated region
        $region21: #{tpu_custom_call.1} parent=11 // pred_check
          %p329 = pneg %p175
        $region22: #{tpu_custom_call.1} parent=11 // pred_check_branch
          %331 = sbr.rel (%p329) target = $region24
        $region23: #{tpu_custom_call.1} parent=11 // pred_region
          _
        $region24: #{tpu_custom_call.1} parent=11 // pred_fallthru
          _
        // Predicated region
        $region25: #{tpu_custom_call.1} parent=11 // pred_check
          %p332 = pneg %p196
        $region26: #{tpu_custom_call.1} parent=11 // pred_check_branch
          %334 = sbr.rel (%p332) target = $region28
        $region27: #{tpu_custom_call.1} parent=11 // pred_region
          _
        $region28: #{tpu_custom_call.1} parent=11 // pred_fallthru
          _
        // Predicated region
        $region29: #{tpu_custom_call.1} parent=11 // pred_check
          %p335 = pneg %p217
        $region30: #{tpu_custom_call.1} parent=11 // pred_check_branch
          %337 = sbr.rel (%p335) target = $region32
        $region31: #{tpu_custom_call.1} parent=11 // pred_region
          _
        $region32: #{tpu_custom_call.1} parent=11 // pred_fallthru
          _
        // Predicated region
        $region33: #{tpu_custom_call.1} parent=11 // pred_check
          %p338 = pneg %p238
        $region34: #{tpu_custom_call.1} parent=11 // pred_check_branch
          %340 = sbr.rel (%p338) target = $region36
        $region35: #{tpu_custom_call.1} parent=11 // pred_region
          _
        $region36: #{tpu_custom_call.1} parent=11 // pred_fallthru
          _
        // Predicated region
        $region37: #{tpu_custom_call.1} parent=11 // pred_check
          %p341 = pneg %p259
        $region38: #{tpu_custom_call.1} parent=11 // pred_check_branch
          %343 = sbr.rel (%p341) target = $region40
        $region39: #{tpu_custom_call.1} parent=11 // pred_region
          _
        $region40: #{tpu_custom_call.1} parent=11 // pred_fallthru
          _
        // Predicated region
        $region41: #{tpu_custom_call.1} parent=11 // pred_check
          %p344 = pneg %p280
        $region42: #{tpu_custom_call.1} parent=11 // pred_check_branch
          %346 = sbr.rel (%p344) target = $region44
        $region43: #{tpu_custom_call.1} parent=11 // pred_region
          _
        $region44: #{tpu_custom_call.1} parent=11 // pred_fallthru
          _
      $region12: #{tpu_custom_call.1} parent=5 // pred_fallthru
        _
      %p347 = scmp.lt.s32.totalorder %s20, 2
      // Predicated region
      $region45: #{tpu_custom_call.1} parent=5 // pred_check
        %p348 = pneg %p347
      $region46: #{tpu_custom_call.1} parent=5 // pred_check_branch
        %350 = sbr.rel (%p348) target = $region48
      $region47: #{tpu_custom_call.1} parent=5 // pred_region
        // Predicated region
        $region49: #{tpu_custom_call.1} parent=47 // pred_check
          %p351 = pneg %p54
        $region50: #{tpu_custom_call.1} parent=47 // pred_check_branch
          %353 = sbr.rel (%p351) target = $region52
        $region51: #{tpu_custom_call.1} parent=47 // pred_region
          %p354 = scmp.lt.s32.totalorder %s27, 1
          %s355 = scalar_select %p354, %s27, 1
          %p356 = scmp.lt.s32.totalorder %s28, 0
          %s357 = scalar_select %p356, %s28, 0
          %s358 = sadd.s32 %s357, %s355
          %s359 = smul.addr %s358, 8
          %s360 = scalar_lea.vmem %s0, %s359
        $region52: #{tpu_custom_call.1} parent=47 // pred_fallthru
          _
        // Predicated region
        $region53: #{tpu_custom_call.1} parent=47 // pred_check
          %p361 = pneg %p80
        $region54: #{tpu_custom_call.1} parent=47 // pred_check_branch
          %363 = sbr.rel (%p361) target = $region56
        $region55: #{tpu_custom_call.1} parent=47 // pred_region
          %p364 = scmp.lt.s32.totalorder %s27, 1
          %s365 = scalar_select %p364, %s27, 1
          %s366 = smul.addr %s365, 16
          %s367 = smul.addr %s366, 4
          %s368 = scalar_lea.vmem %s1, %s367
        $region56: #{tpu_custom_call.1} parent=47 // pred_fallthru
          _
        // Predicated region
        $region57: #{tpu_custom_call.1} parent=47 // pred_check
          %p369 = pneg %p106
        $region58: #{tpu_custom_call.1} parent=47 // pred_check_branch
          %371 = sbr.rel (%p369) target = $region60
        $region59: #{tpu_custom_call.1} parent=47 // pred_region
          %p372 = scmp.lt.s32.totalorder %s27, 1
          %s373 = scalar_select %p372, %s27, 1
          %s374 = scalar_lea.vmem %s2, %s373
        $region60: #{tpu_custom_call.1} parent=47 // pred_fallthru
          _
      $region48: #{tpu_custom_call.1} parent=5 // pred_fallthru
        _
      %p375 = scmp.le.s32.totalorder 1, %s20
      %p376 = scmp.lt.s32.totalorder %s20, 3
      %p377 = pnand %p375, %p376
      %p378 = pneg %p377
      // Predicated region
      $region61: #{tpu_custom_call.1} parent=5 // pred_check
        _
      $region62: #{tpu_custom_call.1} parent=5 // pred_check_branch
        %380 = sbr.rel (%p377) target = $region64
      $region63: #{tpu_custom_call.1} parent=5 // pred_region
        %s381 = ssub.s32 %s20, 1
        %p382 = scmp.lt.s32.totalorder %s29, 1
        %s383 = scalar_select %p382, %s29, 1
        %p384 = scmp.lt.s32.totalorder %s30, 0
        %s385 = scalar_select %p384, %s30, 0
        %s386 = sadd.s32 %s385, %s383
        %s387 = smul.addr %s386, 8
        %s388 = scalar_lea.vmem %s0, %s387
        %p389 = pneg %p60
        %p390 = pneg %p57
        %p391 = scmp.lt.s32.totalorder %s29, 1
        %s392 = scalar_select %p391, %s29, 1
        %s393 = smul.addr %s392, 16
        %s394 = smul.addr %s393, 4
        %s395 = scalar_lea.vmem %s1, %s394
        %p396 = pneg %p86
        %p397 = pneg %p83
        %p398 = scmp.lt.s32.totalorder %s29, 1
        %s399 = scalar_select %p398, %s29, 1
        %s400 = scalar_lea.vmem %s2, %s399
        %p401 = pneg %p112
        %p402 = pneg %p109
        %p403 = pneg %p133
        %p404 = pneg %p130
        %p405 = pneg %p154
        %p406 = pneg %p151
        %p407 = pneg %p175
        %p408 = pneg %p172
        %p409 = pneg %p196
        %p410 = pneg %p193
        %p411 = pneg %p217
        %p412 = pneg %p214
        %p413 = pneg %p238
        %p414 = pneg %p235
        %p415 = pneg %p259
        %p416 = pneg %p256
        %p417 = pneg %p280
        %p418 = pneg %p277
        %p419 = pneg %p308
        %p420 = pneg %p305
        %s421 = sand.u32 %s295, 1
        %s422 = scalar_lea.sflag [#allocation4], %s421
        %s423 = sand.u32 %s295, 1
        %s424 = smul.addr %s423, 8
        %s425 = scalar_lea.vmem [#allocation3], %s424
        %p426 = scmp.lt.s32.totalorder %s29, 1
        %s427 = scalar_select %p426, %s29, 1
        %p428 = scmp.lt.s32.totalorder %s30, 0
        %s429 = scalar_select %p428, %s30, 0
        %s430 = sadd.s32 %s429, %s427
        %s431 = smul.addr %s430, 8
        %s432 = scalar_lea.vmem %s0, %s431
        %p433 = scmp.lt.s32.totalorder %s29, 1
        %s434 = scalar_select %p433, %s29, 1
        %s435 = smul.addr %s434, 16
        %s436 = smul.addr %s435, 4
        %s437 = scalar_lea.vmem %s1, %s436
        %p438 = scmp.lt.s32.totalorder %s29, 1
        %s439 = scalar_select %p438, %s29, 1
        %s440 = scalar_lea.vmem %s2, %s439
        %v442 = vld [vmem:[%s432] sm:$0xff]
        %v443 = vld [vmem:[%s437] sm:$0xf]
        %v444 = vld [vmem:[%s437 + $0x4] sm:$0xf]
        %v445 = vld [vmem:[%s437 + $0x8] sm:$0xf]
        %v446 = vld [vmem:[%s437 + $0xc] sm:$0xf]
        %v447 = vld [vmem:[%s437 + $0x10] sm:$0xf]
        %v448 = vld [vmem:[%s437 + $0x14] sm:$0xf]
        %v449 = vld [vmem:[%s437 + $0x18] sm:$0xf]
        %v450 = vld [vmem:[%s437 + $0x1c] sm:$0xf]
        %v451 = vld [vmem:[%s437 + $0x20] sm:$0xf]
        %v452 = vld [vmem:[%s437 + $0x24] sm:$0xf]
        %v453 = vld [vmem:[%s437 + $0x28] sm:$0xf]
        %v454 = vld [vmem:[%s437 + $0x2c] sm:$0xf]
        %v455 = vld [vmem:[%s437 + $0x30] sm:$0xf]
        %v456 = vld [vmem:[%s437 + $0x34] sm:$0xf]
        %v457 = vld [vmem:[%s437 + $0x38] sm:$0xf]
        %v458 = vld [vmem:[%s437 + $0x3c] sm:$0xf]
        %v459 = vpack.c.bf16 %v442, %v442
        %v460 = vld [vmem:[%s3] sm:$0xf]
        %v461 = vld [vmem:[%s3 + $0x4] sm:$0xf]
        %v462 = vld [vmem:[%s3 + $0x8] sm:$0xf]
        %v463 = vld [vmem:[%s3 + $0xc] sm:$0xf]
        %v464 = vld [vmem:[%s4] sm:$0x1]
        %v466 = vlaneseq
        %v467 = vshrl.u32 %v466, 7
        %v468 = vsub.s32 0, %v467
        %v469 = vrot.slane %v464, %v468
        %v475 = vunpack.c.l.b16 %v460
        %v476 = vunpack.c.l.b16 %v461
        %v477 = vunpack.c.l.b16 %v462
        %v478 = vunpack.c.l.b16 %v463
        %v479 = vpack.c.b16 %v476, %v475
        %v480 = vpack.c.b16 %v478, %v477
        %vm483 = vcmask 261120
        %v485 = vsel %vm483, %v459, 0
        %487 = vmatprep.subr.bf16.mxu0 0
        %488 = vmatpush1.bf16.msra.mxu0 %v479
        %489 = vmatprep.subr.bf16.mxu0 0
        %490 = vmatpush1.bf16.msra.mxu0 %v480
        %491 = vmatprep.subr.bf16.mxu0 0
        %492 = vmatpush1.bf16.msra.mxu0 0
        %493 = vmatprep.subr.bf16.mxu0 0
        %494 = vmatpush1.bf16.msra.mxu0 0
        %495 = vmatprep.subr.bf16.mxu0 0
        %496 = vmatpush1.bf16.msra.mxu0 0
        %497 = vmatprep.subr.bf16.mxu0 0
        %498 = vmatpush1.bf16.msra.mxu0 0
        %499 = vmatprep.subr.bf16.mxu0 0
        %500 = vmatpush1.bf16.msra.mxu0 0
        %501 = vmatprep.subr.bf16.mxu0 0
        %502 = vmatpush1.bf16.msra.mxu0 0
        %503 = vmatprep.subr.bf16.mxu0 0
        %504 = vmatpush1.bf16.msra.mxu0 0
        %505 = vmatprep.subr.bf16.mxu0 0
        %506 = vmatpush1.bf16.msra.mxu0 0
        %507 = vmatprep.subr.bf16.mxu0 0
        %508 = vmatpush1.bf16.msra.mxu0 0
        %509 = vmatprep.subr.bf16.mxu0 0
        %510 = vmatpush1.bf16.msra.mxu0 0
        %511 = vmatprep.subr.bf16.mxu0 0
        %512 = vmatpush1.bf16.msra.mxu0 0
        %513 = vmatprep.subr.bf16.mxu0 0
        %514 = vmatpush1.bf16.msra.mxu0 0
        %515 = vmatprep.subr.bf16.mxu0 0
        %516 = vmatpush1.bf16.msra.mxu0 0
        %517 = vmatprep.subr.bf16.mxu0 0
        %518 = vmatpush1.bf16.msra.mxu0 0
        %519 = vmatprep.mubr.bf16.mxu0 0
        %520 = vmatmul.mubr.bf16.gmra.mrb[0].mxu0 %v485
        %v521 = vpop.f32.mrb[0].mxu0
        %v522 = vadd.f32 %v469, %v521
        %v523 = vpop.f32.mrb[0].mxu0
        %v524 = vpop.f32.mrb[0].mxu0
        %v525 = vpop.f32.mrb[0].mxu0
        %526 = vdwg.mxu0
        %v527 = vld [vmem:[%s5] sm:$0xf]
        %v528 = vld [vmem:[%s5 + $0x4] sm:$0xf]
        %v529 = vld [vmem:[%s5 + $0x8] sm:$0xf]
        %v530 = vld [vmem:[%s5 + $0xc] sm:$0xf]
        %v531 = vld [vmem:[%s6] sm:$0x1]
        %v533 = vlaneseq
        %v534 = vshrl.u32 %v533, 7
        %v535 = vsub.s32 0, %v534
        %v536 = vrot.slane %v531, %v535
        %v554 = vunpack.c.l.b16 %v443
        %v555 = vunpack.c.l.b16 %v444
        %v556 = vunpack.c.l.b16 %v445
        %v557 = vunpack.c.l.b16 %v446
        %v558 = vunpack.c.l.b16 %v447
        %v559 = vunpack.c.l.b16 %v448
        %v560 = vunpack.c.l.b16 %v449
        %v561 = vunpack.c.l.b16 %v450
        %v562 = vunpack.c.l.b16 %v451
        %v563 = vunpack.c.l.b16 %v452
        %v564 = vunpack.c.l.b16 %v453
        %v565 = vunpack.c.l.b16 %v454
        %v566 = vunpack.c.l.b16 %v455
        %v567 = vunpack.c.l.b16 %v456
        %v568 = vunpack.c.l.b16 %v457
        %v569 = vunpack.c.l.b16 %v458
        %v570 = vpack.c.b16 %v555, %v554
        %v571 = vpack.c.b16 %v557, %v556
        %v572 = vpack.c.b16 %v559, %v558
        %v573 = vpack.c.b16 %v561, %v560
        %v574 = vpack.c.b16 %v563, %v562
        %v575 = vpack.c.b16 %v565, %v564
        %v576 = vpack.c.b16 %v567, %v566
        %v577 = vpack.c.b16 %v569, %v568
        %v582 = vunpack.c.l.b16 %v527
        %v583 = vunpack.c.l.b16 %v528
        %v584 = vunpack.c.l.b16 %v529
        %v585 = vunpack.c.l.b16 %v530
        %v586 = vpack.c.b16 %v583, %v582
        %v587 = vpack.c.b16 %v585, %v584
        %v591 = vsel %vm483, %v570, 0
        %v594 = vsel %vm483, %v571, 0
        %v597 = vsel %vm483, %v572, 0
        %v600 = vsel %vm483, %v573, 0
        %v603 = vsel %vm483, %v574, 0
        %v606 = vsel %vm483, %v575, 0
        %v609 = vsel %vm483, %v576, 0
        %v612 = vsel %vm483, %v577, 0
        %614 = vmatprep.subr.bf16.mxu0 0
        %615 = vmatpush1.bf16.msra.mxu0 %v586
        %616 = vmatprep.subr.bf16.mxu0 0
        %617 = vmatpush1.bf16.msra.mxu0 %v587
        %618 = vmatprep.subr.bf16.mxu0 0
        %619 = vmatpush1.bf16.msra.mxu0 0
        %620 = vmatprep.subr.bf16.mxu0 0
        %621 = vmatpush1.bf16.msra.mxu0 0
        %622 = vmatprep.subr.bf16.mxu0 0
        %623 = vmatpush1.bf16.msra.mxu0 0
        %624 = vmatprep.subr.bf16.mxu0 0
        %625 = vmatpush1.bf16.msra.mxu0 0
        %626 = vmatprep.subr.bf16.mxu0 0
        %627 = vmatpush1.bf16.msra.mxu0 0
        %628 = vmatprep.subr.bf16.mxu0 0
        %629 = vmatpush1.bf16.msra.mxu0 0
        %630 = vmatprep.subr.bf16.mxu0 0
        %631 = vmatpush1.bf16.msra.mxu0 0
        %632 = vmatprep.subr.bf16.mxu0 0
        %633 = vmatpush1.bf16.msra.mxu0 0
        %634 = vmatprep.subr.bf16.mxu0 0
        %635 = vmatpush1.bf16.msra.mxu0 0
        %636 = vmatprep.subr.bf16.mxu0 0
        %637 = vmatpush1.bf16.msra.mxu0 0
        %638 = vmatprep.subr.bf16.mxu0 0
        %639 = vmatpush1.bf16.msra.mxu0 0
        %640 = vmatprep.subr.bf16.mxu0 0
        %641 = vmatpush1.bf16.msra.mxu0 0
        %642 = vmatprep.subr.bf16.mxu0 0
        %643 = vmatpush1.bf16.msra.mxu0 0
        %644 = vmatprep.subr.bf16.mxu0 0
        %645 = vmatpush1.bf16.msra.mxu0 0
        %646 = vmatprep.mubr.bf16.mxu0 0
        %647 = vmatmul.mubr.bf16.gmra.mrb[0].mxu0 %v591
        %v648 = vpop.f32.mrb[0].mxu0
        %v649 = vadd.f32 %v536, %v648
        %v650 = vpop.f32.mrb[0].mxu0
        %v651 = vpop.f32.mrb[0].mxu0
        %v652 = vadd.f32 %v536, %v651
        %v653 = vpop.f32.mrb[0].mxu0
        %654 = vmatprep.mubr.bf16.mxu0 0
        %655 = vmatmul.mubr.bf16.gmra.mrb[0].mxu0 %v594
        %v656 = vpop.f32.mrb[0].mxu0
        %v657 = vadd.f32 %v536, %v656
        %v658 = vpop.f32.mrb[0].mxu0
        %v659 = vpop.f32.mrb[0].mxu0
        %v660 = vadd.f32 %v536, %v659
        %v661 = vpop.f32.mrb[0].mxu0
        %662 = vmatprep.mubr.bf16.mxu0 0
        %663 = vmatmul.mubr.bf16.gmra.mrb[0].mxu0 %v597
        %v664 = vpop.f32.mrb[0].mxu0
        %v665 = vadd.f32 %v536, %v664
        %v666 = vpop.f32.mrb[0].mxu0
        %v667 = vpop.f32.mrb[0].mxu0
        %v668 = vadd.f32 %v536, %v667
        %v669 = vpop.f32.mrb[0].mxu0
        %670 = vmatprep.mubr.bf16.mxu0 0
        %671 = vmatmul.mubr.bf16.gmra.mrb[0].mxu0 %v600
        %v672 = vpop.f32.mrb[0].mxu0
        %v673 = vadd.f32 %v536, %v672
        %v674 = vpop.f32.mrb[0].mxu0
        %v675 = vpop.f32.mrb[0].mxu0
        %v676 = vadd.f32 %v536, %v675
        %v677 = vpop.f32.mrb[0].mxu0
        %678 = vmatprep.mubr.bf16.mxu0 0
        %679 = vmatmul.mubr.bf16.gmra.mrb[0].mxu0 %v603
        %v680 = vpop.f32.mrb[0].mxu0
        %v681 = vadd.f32 %v536, %v680
        %v682 = vpop.f32.mrb[0].mxu0
        %v683 = vpop.f32.mrb[0].mxu0
        %v684 = vadd.f32 %v536, %v683
        %v685 = vpop.f32.mrb[0].mxu0
        %686 = vmatprep.mubr.bf16.mxu0 0
        %687 = vmatmul.mubr.bf16.gmra.mrb[0].mxu0 %v606
        %v688 = vpop.f32.mrb[0].mxu0
        %v689 = vadd.f32 %v536, %v688
        %v690 = vpop.f32.mrb[0].mxu0
        %v691 = vpop.f32.mrb[0].mxu0
        %v692 = vadd.f32 %v536, %v691
        %v693 = vpop.f32.mrb[0].mxu0
        %694 = vmatprep.mubr.bf16.mxu0 0
        %695 = vmatmul.mubr.bf16.gmra.mrb[0].mxu0 %v609
        %v696 = vpop.f32.mrb[0].mxu0
        %v697 = vadd.f32 %v536, %v696
        %v698 = vpop.f32.mrb[0].mxu0
        %v699 = vpop.f32.mrb[0].mxu0
        %v700 = vadd.f32 %v536, %v699
        %v701 = vpop.f32.mrb[0].mxu0
        %702 = vmatprep.mubr.bf16.mxu0 0
        %703 = vmatmul.mubr.bf16.gmra.mrb[0].mxu0 %v612
        %v704 = vpop.f32.mrb[0].mxu0
        %v705 = vadd.f32 %v536, %v704
        %v706 = vpop.f32.mrb[0].mxu0
        %v707 = vpop.f32.mrb[0].mxu0
        %v708 = vadd.f32 %v536, %v707
        %v709 = vpop.f32.mrb[0].mxu0
        %710 = vdwg.mxu0
        %v711 = vpack.c.bf16 %v522, %v522
        %v712 = vpack.c.bf16 %v652, %v649
        %v713 = vpack.c.bf16 %v660, %v657
        %v714 = vpack.c.bf16 %v668, %v665
        %v715 = vpack.c.bf16 %v676, %v673
        %v716 = vpack.c.bf16 %v684, %v681
        %v717 = vpack.c.bf16 %v692, %v689
        %v718 = vpack.c.bf16 %v700, %v697
        %v719 = vpack.c.bf16 %v708, %v705
        %v720 = vld [vmem:[%s440] sm:$0x1]
        %v722 = vlaneseq
        %v723 = vshrl.u32 %v722, 7
        %v724 = vsub.s32 0, %v723
        %v725 = vrot.slane %v720, %v724
        %vm727 = vcmask 64512
        %v729 = vsel %vm727, %v711, 0
        %v732 = vsel %vm727, %v712, 0
        %v735 = vsel %vm727, %v713, 0
        %v738 = vsel %vm727, %v714, 0
        %v741 = vsel %vm727, %v715, 0
        %v744 = vsel %vm727, %v716, 0
        %v747 = vsel %vm727, %v717, 0
        %v750 = vsel %vm727, %v718, 0
        %v753 = vsel %vm727, %v719, 0
        %755 = vmatprep.subr.bf16.mxu0 0
        %756 = vmatpush1.bf16.xpose.msra.mxu0 %v732
        %757 = vmatprep.subr.bf16.mxu0 0
        %758 = vmatpush1.bf16.xpose.msra.mxu0 %v735
        %759 = vmatprep.subr.bf16.mxu0 0
        %760 = vmatpush1.bf16.xpose.msra.mxu0 %v738
        %761 = vmatprep.subr.bf16.mxu0 0
        %762 = vmatpush1.bf16.xpose.msra.mxu0 %v741
        %763 = vmatprep.subr.bf16.mxu0 0
        %764 = vmatpush1.bf16.xpose.msra.mxu0 %v744
        %765 = vmatprep.subr.bf16.mxu0 0
        %766 = vmatpush1.bf16.xpose.msra.mxu0 %v747
        %767 = vmatprep.subr.bf16.mxu0 0
        %768 = vmatpush1.bf16.xpose.msra.mxu0 %v750
        %769 = vmatprep.subr.bf16.mxu0 0
        %770 = vmatpush1.bf16.xpose.msra.mxu0 %v753
        %771 = vmatprep.subr.bf16.mxu0 0
        %772 = vmatpush1.bf16.xpose.msra.mxu0 0
        %773 = vmatprep.subr.bf16.mxu0 0
        %774 = vmatpush1.bf16.xpose.msra.mxu0 0
        %775 = vmatprep.subr.bf16.mxu0 0
        %776 = vmatpush1.bf16.xpose.msra.mxu0 0
        %777 = vmatprep.subr.bf16.mxu0 0
        %778 = vmatpush1.bf16.xpose.msra.mxu0 0
        %779 = vmatprep.subr.bf16.mxu0 0
        %780 = vmatpush1.bf16.xpose.msra.mxu0 0
        %781 = vmatprep.subr.bf16.mxu0 0
        %782 = vmatpush1.bf16.xpose.msra.mxu0 0
        %783 = vmatprep.subr.bf16.mxu0 0
        %784 = vmatpush1.bf16.xpose.msra.mxu0 0
        %785 = vmatprep.subr.bf16.mxu0 0
        %786 = vmatpush1.bf16.xpose.msra.mxu0 0
        %787 = vmatprep.mubr.bf16.mxu0 0
        %788 = vmatmul.mubr.bf16.gmra.mrb[0].mxu0 %v729
        %v789 = vpop.f32.mrb[0].mxu0
        %v790 = vadd.f32 %v725, %v789
        %v791 = vpop.f32.mrb[0].mxu0
        %v792 = vpop.f32.mrb[0].mxu0
        %v793 = vpop.f32.mrb[0].mxu0
        %794 = vdwg.mxu0
        %795 = vmax.xlane.f32.xlu0 %v790
        %v796 = vpop.xlane.xlu0 %795
        %v797 = vsub.f32 %v790, %v796
        %v798 = vmul.f32 %v797, 1.442695
        %v799 = vpow.pop %v798
        %800 = vadd.xlane.f32.xlu0 %v799
        %v801 = vpop.xlane.xlu0 %800
        %v802 = vrcp.pop %v801
        %v803 = vpack.c.bf16 %v799, %v799
        %812 = vrot.lane.b32.xlu0 %v712, 96
        %v813 = vpop.permute.xlu0 %812
        %814 = vrot.lane.b32.xlu0 %v713, 96
        %v815 = vpop.permute.xlu0 %814
        %816 = vrot.lane.b32.xlu0 %v714, 96
        %v817 = vpop.permute.xlu0 %816
        %818 = vrot.lane.b32.xlu0 %v715, 96
        %v819 = vpop.permute.xlu0 %818
        %820 = vrot.lane.b32.xlu0 %v716, 96
        %v821 = vpop.permute.xlu0 %820
        %822 = vrot.lane.b32.xlu0 %v717, 96
        %v823 = vpop.permute.xlu0 %822
        %824 = vrot.lane.b32.xlu0 %v718, 96
        %v825 = vpop.permute.xlu0 %824
        %826 = vrot.lane.b32.xlu0 %v719, 96
        %v827 = vpop.permute.xlu0 %826
        %836 = vmatprep.subr.bf16.mxu0 0
        %837 = vmatpush1.bf16.msra.mxu0 %v813
        %838 = vmatprep.subr.bf16.mxu0 0
        %839 = vmatpush1.bf16.msra.mxu0 %v815
        %840 = vmatprep.subr.bf16.mxu0 0
        %841 = vmatpush1.bf16.msra.mxu0 %v817
        %842 = vmatprep.subr.bf16.mxu0 0
        %843 = vmatpush1.bf16.msra.mxu0 %v819
        %844 = vmatprep.subr.bf16.mxu0 0
        %845 = vmatpush1.bf16.msra.mxu0 %v821
        %846 = vmatprep.subr.bf16.mxu0 0
        %847 = vmatpush1.bf16.msra.mxu0 %v823
        %848 = vmatprep.subr.bf16.mxu0 0
        %849 = vmatpush1.bf16.msra.mxu0 %v825
        %850 = vmatprep.subr.bf16.mxu0 0
        %851 = vmatpush1.bf16.msra.mxu0 %v827
        %852 = vmatprep.subr.bf16.mxu0 0
        %853 = vmatpush1.bf16.msra.mxu0 0
        %854 = vmatprep.subr.bf16.mxu0 0
        %855 = vmatpush1.bf16.msra.mxu0 0
        %856 = vmatprep.subr.bf16.mxu0 0
        %857 = vmatpush1.bf16.msra.mxu0 0
        %858 = vmatprep.subr.bf16.mxu0 0
        %859 = vmatpush1.bf16.msra.mxu0 0
        %860 = vmatprep.subr.bf16.mxu0 0
        %861 = vmatpush1.bf16.msra.mxu0 0
        %862 = vmatprep.subr.bf16.mxu0 0
        %863 = vmatpush1.bf16.msra.mxu0 0
        %864 = vmatprep.subr.bf16.mxu0 0
        %865 = vmatpush1.bf16.msra.mxu0 0
        %866 = vmatprep.subr.bf16.mxu0 0
        %867 = vmatpush1.bf16.msra.mxu0 0
        %868 = vmatprep.mubr.bf16.mxu0 0
        %869 = vmatmul.mubr.bf16.gmra.mrb[0].mxu0 %v803
        %v870 = vpop.f32.mrb[0].mxu0
        %v871 = vadd.f32 0.0, %v870
        %v872 = vpop.f32.mrb[0].mxu0
        %v873 = vpop.f32.mrb[0].mxu0
        %v874 = vpop.f32.mrb[0].mxu0
        %875 = vdwg.mxu0
        %v876 = vmul.f32 %v871, %v802
        %v877 = vpack.c.bf16 %v876, %v876
        %879 = vrot.lane.b32.xlu0 %v711, 120
        %v880 = vpop.permute.xlu0 %879
        %881 = vrot.lane.b32.xlu0 %v712, 120
        %v882 = vpop.permute.xlu0 %881
        %883 = vrot.lane.b32.xlu0 %v713, 120
        %v884 = vpop.permute.xlu0 %883
        %885 = vrot.lane.b32.xlu0 %v714, 120
        %v886 = vpop.permute.xlu0 %885
        %887 = vrot.lane.b32.xlu0 %v715, 120
        %v888 = vpop.permute.xlu0 %887
        %889 = vrot.lane.b32.xlu0 %v716, 120
        %v890 = vpop.permute.xlu0 %889
        %891 = vrot.lane.b32.xlu0 %v717, 120
        %v892 = vpop.permute.xlu0 %891
        %893 = vrot.lane.b32.xlu0 %v718, 120
        %v894 = vpop.permute.xlu0 %893
        %895 = vrot.lane.b32.xlu0 %v719, 120
        %v896 = vpop.permute.xlu0 %895
        %v898 = vsel %vm727, %v880, 0
        %v901 = vsel %vm727, %v882, 0
        %v904 = vsel %vm727, %v884, 0
        %v907 = vsel %vm727, %v886, 0
        %v910 = vsel %vm727, %v888, 0
        %v913 = vsel %vm727, %v890, 0
        %v916 = vsel %vm727, %v892, 0
        %v919 = vsel %vm727, %v894, 0
        %v922 = vsel %vm727, %v896, 0
        %924 = vmatprep.subr.bf16.mxu0 0
        %925 = vmatpush1.bf16.xpose.msra.mxu0 %v901
        %926 = vmatprep.subr.bf16.mxu0 0
        %927 = vmatpush1.bf16.xpose.msra.mxu0 %v904
        %928 = vmatprep.subr.bf16.mxu0 0
        %929 = vmatpush1.bf16.xpose.msra.mxu0 %v907
        %930 = vmatprep.subr.bf16.mxu0 0
        %931 = vmatpush1.bf16.xpose.msra.mxu0 %v910
        %932 = vmatprep.subr.bf16.mxu0 0
        %933 = vmatpush1.bf16.xpose.msra.mxu0 %v913
        %934 = vmatprep.subr.bf16.mxu0 0
        %935 = vmatpush1.bf16.xpose.msra.mxu0 %v916
        %936 = vmatprep.subr.bf16.mxu0 0
        %937 = vmatpush1.bf16.xpose.msra.mxu0 %v919
        %938 = vmatprep.subr.bf16.mxu0 0
        %939 = vmatpush1.bf16.xpose.msra.mxu0 %v922
        %940 = vmatprep.subr.bf16.mxu0 0
        %941 = vmatpush1.bf16.xpose.msra.mxu0 0
        %942 = vmatprep.subr.bf16.mxu0 0
        %943 = vmatpush1.bf16.xpose.msra.mxu0 0
        %944 = vmatprep.subr.bf16.mxu0 0
        %945 = vmatpush1.bf16.xpose.msra.mxu0 0
        %946 = vmatprep.subr.bf16.mxu0 0
        %947 = vmatpush1.bf16.xpose.msra.mxu0 0
        %948 = vmatprep.subr.bf16.mxu0 0
        %949 = vmatpush1.bf16.xpose.msra.mxu0 0
        %950 = vmatprep.subr.bf16.mxu0 0
        %951 = vmatpush1.bf16.xpose.msra.mxu0 0
        %952 = vmatprep.subr.bf16.mxu0 0
        %953 = vmatpush1.bf16.xpose.msra.mxu0 0
        %954 = vmatprep.subr.bf16.mxu0 0
        %955 = vmatpush1.bf16.xpose.msra.mxu0 0
        %956 = vmatprep.mubr.bf16.mxu0 0
        %957 = vmatmul.mubr.bf16.gmra.mrb[0].mxu0 %v898
        %v958 = vpop.f32.mrb[0].mxu0
        %v959 = vadd.f32 %v725, %v958
        %v960 = vpop.f32.mrb[0].mxu0
        %v961 = vpop.f32.mrb[0].mxu0
        %v962 = vpop.f32.mrb[0].mxu0
        %963 = vdwg.mxu0
        %964 = vmax.xlane.f32.xlu0 %v959
        %v965 = vpop.xlane.xlu0 %964
        %v966 = vsub.f32 %v959, %v965
        %v967 = vmul.f32 %v966, 1.442695
        %v968 = vpow.pop %v967
        %969 = vadd.xlane.f32.xlu0 %v968
        %v970 = vpop.xlane.xlu0 %969
        %v971 = vrcp.pop %v970
        %v972 = vpack.c.bf16 %v968, %v968
        %973 = vrot.lane.b32.xlu0 %v712, 88
        %v974 = vpop.permute.xlu0 %973
        %975 = vrot.lane.b32.xlu0 %v713, 88
        %v976 = vpop.permute.xlu0 %975
        %977 = vrot.lane.b32.xlu0 %v714, 88
        %v978 = vpop.permute.xlu0 %977
        %979 = vrot.lane.b32.xlu0 %v715, 88
        %v980 = vpop.permute.xlu0 %979
        %981 = vrot.lane.b32.xlu0 %v716, 88
        %v982 = vpop.permute.xlu0 %981
        %983 = vrot.lane.b32.xlu0 %v717, 88
        %v984 = vpop.permute.xlu0 %983
        %985 = vrot.lane.b32.xlu0 %v718, 88
        %v986 = vpop.permute.xlu0 %985
        %987 = vrot.lane.b32.xlu0 %v719, 88
        %v988 = vpop.permute.xlu0 %987
        %997 = vmatprep.subr.bf16.mxu0 0
        %998 = vmatpush1.bf16.msra.mxu0 %v974
        %999 = vmatprep.subr.bf16.mxu0 0
        %1000 = vmatpush1.bf16.msra.mxu0 %v976
        %1001 = vmatprep.subr.bf16.mxu0 0
        %1002 = vmatpush1.bf16.msra.mxu0 %v978
        %1003 = vmatprep.subr.bf16.mxu0 0
        %1004 = vmatpush1.bf16.msra.mxu0 %v980
        %1005 = vmatprep.subr.bf16.mxu0 0
        %1006 = vmatpush1.bf16.msra.mxu0 %v982
        %1007 = vmatprep.subr.bf16.mxu0 0
        %1008 = vmatpush1.bf16.msra.mxu0 %v984
        %1009 = vmatprep.subr.bf16.mxu0 0
        %1010 = vmatpush1.bf16.msra.mxu0 %v986
        %1011 = vmatprep.subr.bf16.mxu0 0
        %1012 = vmatpush1.bf16.msra.mxu0 %v988
        %1013 = vmatprep.subr.bf16.mxu0 0
        %1014 = vmatpush1.bf16.msra.mxu0 0
        %1015 = vmatprep.subr.bf16.mxu0 0
        %1016 = vmatpush1.bf16.msra.mxu0 0
        %1017 = vmatprep.subr.bf16.mxu0 0
        %1018 = vmatpush1.bf16.msra.mxu0 0
        %1019 = vmatprep.subr.bf16.mxu0 0
        %1020 = vmatpush1.bf16.msra.mxu0 0
        %1021 = vmatprep.subr.bf16.mxu0 0
        %1022 = vmatpush1.bf16.msra.mxu0 0
        %1023 = vmatprep.subr.bf16.mxu0 0
        %1024 = vmatpush1.bf16.msra.mxu0 0
        %1025 = vmatprep.subr.bf16.mxu0 0
        %1026 = vmatpush1.bf16.msra.mxu0 0
        %1027 = vmatprep.subr.bf16.mxu0 0
        %1028 = vmatpush1.bf16.msra.mxu0 0
        %1029 = vmatprep.mubr.bf16.mxu0 0
        %1030 = vmatmul.mubr.bf16.gmra.mrb[0].mxu0 %v972
        %v1031 = vpop.f32.mrb[0].mxu0
        %v1032 = vadd.f32 0.0, %v1031
        %v1033 = vpop.f32.mrb[0].mxu0
        %v1034 = vpop.f32.mrb[0].mxu0
        %v1035 = vpop.f32.mrb[0].mxu0
        %1036 = vdwg.mxu0
        %v1037 = vmul.f32 %v1032, %v971
        %v1038 = vpack.c.bf16 %v1037, %v1037
        %1039 = vrot.lane.b32.xlu0 %v711, 112
        %v1040 = vpop.permute.xlu0 %1039
        %1041 = vrot.lane.b32.xlu0 %v712, 112
        %v1042 = vpop.permute.xlu0 %1041
        %1043 = vrot.lane.b32.xlu0 %v713, 112
        %v1044 = vpop.permute.xlu0 %1043
        %1045 = vrot.lane.b32.xlu0 %v714, 112
        %v1046 = vpop.permute.xlu0 %1045
        %1047 = vrot.lane.b32.xlu0 %v715, 112
        %v1048 = vpop.permute.xlu0 %1047
        %1049 = vrot.lane.b32.xlu0 %v716, 112
        %v1050 = vpop.permute.xlu0 %1049
        %1051 = vrot.lane.b32.xlu0 %v717, 112
        %v1052 = vpop.permute.xlu0 %1051
        %1053 = vrot.lane.b32.xlu0 %v718, 112
        %v1054 = vpop.permute.xlu0 %1053
        %1055 = vrot.lane.b32.xlu0 %v719, 112
        %v1056 = vpop.permute.xlu0 %1055
        %v1058 = vsel %vm727, %v1040, 0
        %v1061 = vsel %vm727, %v1042, 0
        %v1064 = vsel %vm727, %v1044, 0
        %v1067 = vsel %vm727, %v1046, 0
        %v1070 = vsel %vm727, %v1048, 0
        %v1073 = vsel %vm727, %v1050, 0
        %v1076 = vsel %vm727, %v1052, 0
        %v1079 = vsel %vm727, %v1054, 0
        %v1082 = vsel %vm727, %v1056, 0
        %1084 = vmatprep.subr.bf16.mxu0 0
        %1085 = vmatpush1.bf16.xpose.msra.mxu0 %v1061
        %1086 = vmatprep.subr.bf16.mxu0 0
        %1087 = vmatpush1.bf16.xpose.msra.mxu0 %v1064
        %1088 = vmatprep.subr.bf16.mxu0 0
        %1089 = vmatpush1.bf16.xpose.msra.mxu0 %v1067
        %1090 = vmatprep.subr.bf16.mxu0 0
        %1091 = vmatpush1.bf16.xpose.msra.mxu0 %v1070
        %1092 = vmatprep.subr.bf16.mxu0 0
        %1093 = vmatpush1.bf16.xpose.msra.mxu0 %v1073
        %1094 = vmatprep.subr.bf16.mxu0 0
        %1095 = vmatpush1.bf16.xpose.msra.mxu0 %v1076
        %1096 = vmatprep.subr.bf16.mxu0 0
        %1097 = vmatpush1.bf16.xpose.msra.mxu0 %v1079
        %1098 = vmatprep.subr.bf16.mxu0 0
        %1099 = vmatpush1.bf16.xpose.msra.mxu0 %v1082
        %1100 = vmatprep.subr.bf16.mxu0 0
        %1101 = vmatpush1.bf16.xpose.msra.mxu0 0
        %1102 = vmatprep.subr.bf16.mxu0 0
        %1103 = vmatpush1.bf16.xpose.msra.mxu0 0
        %1104 = vmatprep.subr.bf16.mxu0 0
        %1105 = vmatpush1.bf16.xpose.msra.mxu0 0
        %1106 = vmatprep.subr.bf16.mxu0 0
        %1107 = vmatpush1.bf16.xpose.msra.mxu0 0
        %1108 = vmatprep.subr.bf16.mxu0 0
        %1109 = vmatpush1.bf16.xpose.msra.mxu0 0
        %1110 = vmatprep.subr.bf16.mxu0 0
        %1111 = vmatpush1.bf16.xpose.msra.mxu0 0
        %1112 = vmatprep.subr.bf16.mxu0 0
        %1113 = vmatpush1.bf16.xpose.msra.mxu0 0
        %1114 = vmatprep.subr.bf16.mxu0 0
        %1115 = vmatpush1.bf16.xpose.msra.mxu0 0
        %1116 = vmatprep.mubr.bf16.mxu0 0
        %1117 = vmatmul.mubr.bf16.gmra.mrb[0].mxu0 %v1058
        %v1118 = vpop.f32.mrb[0].mxu0
        %v1119 = vadd.f32 %v725, %v1118
        %v1120 = vpop.f32.mrb[0].mxu0
        %v1121 = vpop.f32.mrb[0].mxu0
        %v1122 = vpop.f32.mrb[0].mxu0
        %1123 = vdwg.mxu0
        %1124 = vmax.xlane.f32.xlu0 %v1119
        %v1125 = vpop.xlane.xlu0 %1124
        %v1126 = vsub.f32 %v1119, %v1125
        %v1127 = vmul.f32 %v1126, 1.442695
        %v1128 = vpow.pop %v1127
        %1129 = vadd.xlane.f32.xlu0 %v1128
        %v1130 = vpop.xlane.xlu0 %1129
        %v1131 = vrcp.pop %v1130
        %v1132 = vpack.c.bf16 %v1128, %v1128
        %1133 = vrot.lane.b32.xlu0 %v712, 80
        %v1134 = vpop.permute.xlu0 %1133
        %1135 = vrot.lane.b32.xlu0 %v713, 80
        %v1136 = vpop.permute.xlu0 %1135
        %1137 = vrot.lane.b32.xlu0 %v714, 80
        %v1138 = vpop.permute.xlu0 %1137
        %1139 = vrot.lane.b32.xlu0 %v715, 80
        %v1140 = vpop.permute.xlu0 %1139
        %1141 = vrot.lane.b32.xlu0 %v716, 80
        %v1142 = vpop.permute.xlu0 %1141
        %1143 = vrot.lane.b32.xlu0 %v717, 80
        %v1144 = vpop.permute.xlu0 %1143
        %1145 = vrot.lane.b32.xlu0 %v718, 80
        %v1146 = vpop.permute.xlu0 %1145
        %1147 = vrot.lane.b32.xlu0 %v719, 80
        %v1148 = vpop.permute.xlu0 %1147
        %1157 = vmatprep.subr.bf16.mxu0 0
        %1158 = vmatpush1.bf16.msra.mxu0 %v1134
        %1159 = vmatprep.subr.bf16.mxu0 0
        %1160 = vmatpush1.bf16.msra.mxu0 %v1136
        %1161 = vmatprep.subr.bf16.mxu0 0
        %1162 = vmatpush1.bf16.msra.mxu0 %v1138
        %1163 = vmatprep.subr.bf16.mxu0 0
        %1164 = vmatpush1.bf16.msra.mxu0 %v1140
        %1165 = vmatprep.subr.bf16.mxu0 0
        %1166 = vmatpush1.bf16.msra.mxu0 %v1142
        %1167 = vmatprep.subr.bf16.mxu0 0
        %1168 = vmatpush1.bf16.msra.mxu0 %v1144
        %1169 = vmatprep.subr.bf16.mxu0 0
        %1170 = vmatpush1.bf16.msra.mxu0 %v1146
        %1171 = vmatprep.subr.bf16.mxu0 0
        %1172 = vmatpush1.bf16.msra.mxu0 %v1148
        %1173 = vmatprep.subr.bf16.mxu0 0
        %1174 = vmatpush1.bf16.msra.mxu0 0
        %1175 = vmatprep.subr.bf16.mxu0 0
        %1176 = vmatpush1.bf16.msra.mxu0 0
        %1177 = vmatprep.subr.bf16.mxu0 0
        %1178 = vmatpush1.bf16.msra.mxu0 0
        %1179 = vmatprep.subr.bf16.mxu0 0
        %1180 = vmatpush1.bf16.msra.mxu0 0
        %1181 = vmatprep.subr.bf16.mxu0 0
        %1182 = vmatpush1.bf16.msra.mxu0 0
        %1183 = vmatprep.subr.bf16.mxu0 0
        %1184 = vmatpush1.bf16.msra.mxu0 0
        %1185 = vmatprep.subr.bf16.mxu0 0
        %1186 = vmatpush1.bf16.msra.mxu0 0
        %1187 = vmatprep.subr.bf16.mxu0 0
        %1188 = vmatpush1.bf16.msra.mxu0 0
        %1189 = vmatprep.mubr.bf16.mxu0 0
        %1190 = vmatmul.mubr.bf16.gmra.mrb[0].mxu0 %v1132
        %v1191 = vpop.f32.mrb[0].mxu0
        %v1192 = vadd.f32 0.0, %v1191
        %v1193 = vpop.f32.mrb[0].mxu0
        %v1194 = vpop.f32.mrb[0].mxu0
        %v1195 = vpop.f32.mrb[0].mxu0
        %1196 = vdwg.mxu0
        %v1197 = vmul.f32 %v1192, %v1131
        %v1198 = vpack.c.bf16 %v1197, %v1197
        %1199 = vrot.lane.b32.xlu0 %v711, 104
        %v1200 = vpop.permute.xlu0 %1199
        %1201 = vrot.lane.b32.xlu0 %v712, 104
        %v1202 = vpop.permute.xlu0 %1201
        %1203 = vrot.lane.b32.xlu0 %v713, 104
        %v1204 = vpop.permute.xlu0 %1203
        %1205 = vrot.lane.b32.xlu0 %v714, 104
        %v1206 = vpop.permute.xlu0 %1205
        %1207 = vrot.lane.b32.xlu0 %v715, 104
        %v1208 = vpop.permute.xlu0 %1207
        %1209 = vrot.lane.b32.xlu0 %v716, 104
        %v1210 = vpop.permute.xlu0 %1209
        %1211 = vrot.lane.b32.xlu0 %v717, 104
        %v1212 = vpop.permute.xlu0 %1211
        %1213 = vrot.lane.b32.xlu0 %v718, 104
        %v1214 = vpop.permute.xlu0 %1213
        %1215 = vrot.lane.b32.xlu0 %v719, 104
        %v1216 = vpop.permute.xlu0 %1215
        %v1218 = vsel %vm727, %v1200, 0
        %v1221 = vsel %vm727, %v1202, 0
        %v1224 = vsel %vm727, %v1204, 0
        %v1227 = vsel %vm727, %v1206, 0
        %v1230 = vsel %vm727, %v1208, 0
        %v1233 = vsel %vm727, %v1210, 0
        %v1236 = vsel %vm727, %v1212, 0
        %v1239 = vsel %vm727, %v1214, 0
        %v1242 = vsel %vm727, %v1216, 0
        %1244 = vmatprep.subr.bf16.mxu0 0
        %1245 = vmatpush1.bf16.xpose.msra.mxu0 %v1221
        %1246 = vmatprep.subr.bf16.mxu0 0
        %1247 = vmatpush1.bf16.xpose.msra.mxu0 %v1224
        %1248 = vmatprep.subr.bf16.mxu0 0
        %1249 = vmatpush1.bf16.xpose.msra.mxu0 %v1227
        %1250 = vmatprep.subr.bf16.mxu0 0
        %1251 = vmatpush1.bf16.xpose.msra.mxu0 %v1230
        %1252 = vmatprep.subr.bf16.mxu0 0
        %1253 = vmatpush1.bf16.xpose.msra.mxu0 %v1233
        %1254 = vmatprep.subr.bf16.mxu0 0
        %1255 = vmatpush1.bf16.xpose.msra.mxu0 %v1236
        %1256 = vmatprep.subr.bf16.mxu0 0
        %1257 = vmatpush1.bf16.xpose.msra.mxu0 %v1239
        %1258 = vmatprep.subr.bf16.mxu0 0
        %1259 = vmatpush1.bf16.xpose.msra.mxu0 %v1242
        %1260 = vmatprep.subr.bf16.mxu0 0
        %1261 = vmatpush1.bf16.xpose.msra.mxu0 0
        %1262 = vmatprep.subr.bf16.mxu0 0
        %1263 = vmatpush1.bf16.xpose.msra.mxu0 0
        %1264 = vmatprep.subr.bf16.mxu0 0
        %1265 = vmatpush1.bf16.xpose.msra.mxu0 0
        %1266 = vmatprep.subr.bf16.mxu0 0
        %1267 = vmatpush1.bf16.xpose.msra.mxu0 0
        %1268 = vmatprep.subr.bf16.mxu0 0
        %1269 = vmatpush1.bf16.xpose.msra.mxu0 0
        %1270 = vmatprep.subr.bf16.mxu0 0
        %1271 = vmatpush1.bf16.xpose.msra.mxu0 0
        %1272 = vmatprep.subr.bf16.mxu0 0
        %1273 = vmatpush1.bf16.xpose.msra.mxu0 0
        %1274 = vmatprep.subr.bf16.mxu0 0
        %1275 = vmatpush1.bf16.xpose.msra.mxu0 0
        %1276 = vmatprep.mubr.bf16.mxu0 0
        %1277 = vmatmul.mubr.bf16.gmra.mrb[0].mxu0 %v1218
        %v1278 = vpop.f32.mrb[0].mxu0
        %v1279 = vadd.f32 %v725, %v1278
        %v1280 = vpop.f32.mrb[0].mxu0
        %v1281 = vpop.f32.mrb[0].mxu0
        %v1282 = vpop.f32.mrb[0].mxu0
        %1283 = vdwg.mxu0
        %1284 = vmax.xlane.f32.xlu0 %v1279
        %v1285 = vpop.xlane.xlu0 %1284
        %v1286 = vsub.f32 %v1279, %v1285
        %v1287 = vmul.f32 %v1286, 1.442695
        %v1288 = vpow.pop %v1287
        %1289 = vadd.xlane.f32.xlu0 %v1288
        %v1290 = vpop.xlane.xlu0 %1289
        %v1291 = vrcp.pop %v1290
        %v1292 = vpack.c.bf16 %v1288, %v1288
        %1293 = vrot.lane.b32.xlu0 %v712, 72
        %v1294 = vpop.permute.xlu0 %1293
        %1295 = vrot.lane.b32.xlu0 %v713, 72
        %v1296 = vpop.permute.xlu0 %1295
        %1297 = vrot.lane.b32.xlu0 %v714, 72
        %v1298 = vpop.permute.xlu0 %1297
        %1299 = vrot.lane.b32.xlu0 %v715, 72
        %v1300 = vpop.permute.xlu0 %1299
        %1301 = vrot.lane.b32.xlu0 %v716, 72
        %v1302 = vpop.permute.xlu0 %1301
        %1303 = vrot.lane.b32.xlu0 %v717, 72
        %v1304 = vpop.permute.xlu0 %1303
        %1305 = vrot.lane.b32.xlu0 %v718, 72
        %v1306 = vpop.permute.xlu0 %1305
        %1307 = vrot.lane.b32.xlu0 %v719, 72
        %v1308 = vpop.permute.xlu0 %1307
        %1317 = vmatprep.subr.bf16.mxu0 0
        %1318 = vmatpush1.bf16.msra.mxu0 %v1294
        %1319 = vmatprep.subr.bf16.mxu0 0
        %1320 = vmatpush1.bf16.msra.mxu0 %v1296
        %1321 = vmatprep.subr.bf16.mxu0 0
        %1322 = vmatpush1.bf16.msra.mxu0 %v1298
        %1323 = vmatprep.subr.bf16.mxu0 0
        %1324 = vmatpush1.bf16.msra.mxu0 %v1300
        %1325 = vmatprep.subr.bf16.mxu0 0
        %1326 = vmatpush1.bf16.msra.mxu0 %v1302
        %1327 = vmatprep.subr.bf16.mxu0 0
        %1328 = vmatpush1.bf16.msra.mxu0 %v1304
        %1329 = vmatprep.subr.bf16.mxu0 0
        %1330 = vmatpush1.bf16.msra.mxu0 %v1306
        %1331 = vmatprep.subr.bf16.mxu0 0
        %1332 = vmatpush1.bf16.msra.mxu0 %v1308
        %1333 = vmatprep.subr.bf16.mxu0 0
        %1334 = vmatpush1.bf16.msra.mxu0 0
        %1335 = vmatprep.subr.bf16.mxu0 0
        %1336 = vmatpush1.bf16.msra.mxu0 0
        %1337 = vmatprep.subr.bf16.mxu0 0
        %1338 = vmatpush1.bf16.msra.mxu0 0
        %1339 = vmatprep.subr.bf16.mxu0 0
        %1340 = vmatpush1.bf16.msra.mxu0 0
        %1341 = vmatprep.subr.bf16.mxu0 0
        %1342 = vmatpush1.bf16.msra.mxu0 0
        %1343 = vmatprep.subr.bf16.mxu0 0
        %1344 = vmatpush1.bf16.msra.mxu0 0
        %1345 = vmatprep.subr.bf16.mxu0 0
        %1346 = vmatpush1.bf16.msra.mxu0 0
        %1347 = vmatprep.subr.bf16.mxu0 0
        %1348 = vmatpush1.bf16.msra.mxu0 0
        %1349 = vmatprep.mubr.bf16.mxu0 0
        %1350 = vmatmul.mubr.bf16.gmra.mrb[0].mxu0 %v1292
        %v1351 = vpop.f32.mrb[0].mxu0
        %v1352 = vadd.f32 0.0, %v1351
        %v1353 = vpop.f32.mrb[0].mxu0
        %v1354 = vpop.f32.mrb[0].mxu0
        %v1355 = vpop.f32.mrb[0].mxu0
        %1356 = vdwg.mxu0
        %v1357 = vmul.f32 %v1352, %v1291
        %v1358 = vpack.c.bf16 %v1357, %v1357
        %1360 = vrot.lane.b32.xlu0 %v1038, 8
        %v1361 = vpop.permute.xlu0 %1360
        %1363 = vrot.lane.b32.xlu0 %v1198, 16
        %v1364 = vpop.permute.xlu0 %1363
        %1366 = vrot.lane.b32.xlu0 %v1358, 24
        %v1367 = vpop.permute.xlu0 %1366
        %v1370 = vsel %vm727, %v877, %v1361
        %vm1371 = vcmask 130048
        %v1373 = vsel %vm1371, %v1370, %v1364
        %vm1374 = vcmask 195584
        %v1376 = vsel %vm1374, %v1373, %v1367
        %vm1378 = vcmask 257024
        %1379 = vst.msk [vmem:[#allocation2] sm:$0xf] %vm1378, %v1376
        %v1380 = vld [vmem:[#allocation2] sm:$0xf]
        %v1381 = vld [vmem:[%s7] sm:$0xf]
        %v1382 = vld [vmem:[%s7 + $0x4] sm:$0xf]
        %v1383 = vld [vmem:[%s7 + $0x8] sm:$0xf]
        %v1384 = vld [vmem:[%s7 + $0xc] sm:$0xf]
        %v1385 = vld [vmem:[%s8] sm:$0x1]
        %v1387 = vlaneseq
        %v1388 = vshrl.u32 %v1387, 7
        %v1389 = vsub.s32 0, %v1388
        %v1390 = vrot.slane %v1385, %v1389
        %v1396 = vunpack.c.l.b16 %v1381
        %v1397 = vunpack.c.l.b16 %v1382
        %v1398 = vunpack.c.l.b16 %v1383
        %v1399 = vunpack.c.l.b16 %v1384
        %v1400 = vpack.c.b16 %v1397, %v1396
        %v1401 = vpack.c.b16 %v1399, %v1398
        %v1405 = vsel %vm483, %v1380, 0
        %1407 = vmatprep.subr.bf16.mxu0 0
        %1408 = vmatpush1.bf16.msra.mxu0 %v1400
        %1409 = vmatprep.subr.bf16.mxu0 0
        %1410 = vmatpush1.bf16.msra.mxu0 %v1401
        %1411 = vmatprep.subr.bf16.mxu0 0
        %1412 = vmatpush1.bf16.msra.mxu0 0
        %1413 = vmatprep.subr.bf16.mxu0 0
        %1414 = vmatpush1.bf16.msra.mxu0 0
        %1415 = vmatprep.subr.bf16.mxu0 0
        %1416 = vmatpush1.bf16.msra.mxu0 0
        %1417 = vmatprep.subr.bf16.mxu0 0
        %1418 = vmatpush1.bf16.msra.mxu0 0
        %1419 = vmatprep.subr.bf16.mxu0 0
        %1420 = vmatpush1.bf16.msra.mxu0 0
        %1421 = vmatprep.subr.bf16.mxu0 0
        %1422 = vmatpush1.bf16.msra.mxu0 0
        %1423 = vmatprep.subr.bf16.mxu0 0
        %1424 = vmatpush1.bf16.msra.mxu0 0
        %1425 = vmatprep.subr.bf16.mxu0 0
        %1426 = vmatpush1.bf16.msra.mxu0 0
        %1427 = vmatprep.subr.bf16.mxu0 0
        %1428 = vmatpush1.bf16.msra.mxu0 0
        %1429 = vmatprep.subr.bf16.mxu0 0
        %1430 = vmatpush1.bf16.msra.mxu0 0
        %1431 = vmatprep.subr.bf16.mxu0 0
        %1432 = vmatpush1.bf16.msra.mxu0 0
        %1433 = vmatprep.subr.bf16.mxu0 0
        %1434 = vmatpush1.bf16.msra.mxu0 0
        %1435 = vmatprep.subr.bf16.mxu0 0
        %1436 = vmatpush1.bf16.msra.mxu0 0
        %1437 = vmatprep.subr.bf16.mxu0 0
        %1438 = vmatpush1.bf16.msra.mxu0 0
        %1439 = vmatprep.mubr.bf16.mxu0 0
        %1440 = vmatmul.mubr.bf16.gmra.mrb[0].mxu0 %v1405
        %v1441 = vpop.f32.mrb[0].mxu0
        %v1442 = vadd.f32 %v1390, %v1441
        %v1443 = vpop.f32.mrb[0].mxu0
        %v1444 = vpop.f32.mrb[0].mxu0
        %v1445 = vpop.f32.mrb[0].mxu0
        %1446 = vdwg.mxu0
        %v1447 = vadd.f32 %v442, %v1442
        %v1448 = vsel %vm483, %v1447, 0.0
        %1449 = vadd.xlane.f32.xlu0 %v1448
        %v1450 = vpop.xlane.xlu0 %1449
        %v1451 = vrcp.pop 32.0
        %v1452 = vmul.f32 %v1450, %v1451
        %v1453 = vsub.f32 %v1447, %v1452
        %v1454 = vmul.f32 %v1453, %v1453
        %v1455 = vsel %vm483, %v1454, 0.0
        %1456 = vadd.xlane.f32.xlu0 %v1455
        %v1457 = vpop.xlane.xlu0 %1456
        %v1458 = vmul.f32 %v1457, %v1451
        %v1459 = vadd.f32 %v1458, 1e-06
        %v1460 = vrsqrt.pop %v1459
        %v1461 = vmul.f32 %v1453, %v1460
        %v1462 = vld [vmem:[%s9] sm:$0x1]
        %v1464 = vlaneseq
        %v1465 = vshrl.u32 %v1464, 7
        %v1466 = vsub.s32 0, %v1465
        %v1467 = vrot.slane %v1462, %v1466
        %v1469 = vmul.f32 %v1461, %v1467
        %v1470 = vld [vmem:[%s10] sm:$0x1]
        %v1472 = vlaneseq
        %v1473 = vshrl.u32 %v1472, 7
        %v1474 = vsub.s32 0, %v1473
        %v1475 = vrot.slane %v1470, %v1474
        %v1477 = vadd.f32 %v1469, %v1475
        %1478 = vst.msk [vmem:[%s425] sm:$0xff] %vm483, %v1477
        %s1479 = sand.u32 %s295, 1
        %s1480 = scalar_lea.sflag [#allocation4], %s1479
        %s1481 = sand.u32 %s295, 1
        %s1482 = smul.addr %s1481, 8
        %s1483 = scalar_lea.vmem [#allocation3], %s1482
        // Predicated region
        $region65: #{tpu_custom_call.1} parent=63 // pred_check
          %p1484 = pneg %p305
        $region66: #{tpu_custom_call.1} parent=63 // pred_check_branch
          %1486 = sbr.rel (%p1484) target = $region68
        $region67: #{tpu_custom_call.1} parent=63 // pred_region
          %s1488 = ssub.s32 128, 128
          %1489 = vsyncadd %s1480, %s1488
          %s1490 = sadd.s32 %s30, %s29
          %s1491 = smul.addr %s1490, 128
          %s1492 = scalar_lea.hbm %s11, %s1491
          %s1494 = sshll.u32 %s1483, 4
          %s1495 = int_to_ptr.vmem [resolvable:$true] %s1494
          %1497 = dma.vmem_to_hbm [thread:$0]  %s1495, 128, %s1492, %s1480
        $region68: #{tpu_custom_call.1} parent=63 // pred_fallthru
          _
      $region64: #{tpu_custom_call.1} parent=5 // pred_fallthru
        _
      %p1498 = scmp.le.s32.totalorder 2, %s20
      // Predicated region
      $region69: #{tpu_custom_call.1} parent=5 // pred_check
        %p1499 = pneg %p1498
      $region70: #{tpu_custom_call.1} parent=5 // pred_check_branch
        %1501 = sbr.rel (%p1499) target = $region72
      $region71: #{tpu_custom_call.1} parent=5 // pred_region
        %s1502 = ssub.s32 %s20, 2
        // Predicated region
        $region73: #{tpu_custom_call.1} parent=71 // pred_check
          %p1503 = pneg %p311
        $region74: #{tpu_custom_call.1} parent=71 // pred_check_branch
          %1505 = sbr.rel (%p1503) target = $region76
        $region75: #{tpu_custom_call.1} parent=71 // pred_region
          %s1506 = sand.u32 %s296, 1
          %s1507 = scalar_lea.sflag [#allocation4], %s1506
          %s1508 = sand.u32 %s296, 1
          %s1509 = smul.addr %s1508, 8
          %s1510 = scalar_lea.vmem [#allocation3], %s1509
          %1511 = dma.done %s1507, 128
        $region76: #{tpu_custom_call.1} parent=71 // pred_fallthru
          _
      $region72: #{tpu_custom_call.1} parent=5 // pred_fallthru
        _
    $region6: #{tpu_custom_call.1} parent=1 // loop_footer
      %s24 = sadd.s32 1, %s20
    $region7: #{tpu_custom_call.1} parent=1 // loop_footer_branch
      %19 = sbr.rel target = $region3
    $region8: #{tpu_custom_call.1} parent=1 // loop_exit
      _
    %1512 = vsyncpa [#allocation4], 1
    %s1513 = scalar_lea.sflag [#allocation4], 1
    %1514 = vsyncpa %s1513, 1

// kernel: tpu_custom_call.1
$region0: #{tpu_custom_call.1}
  #allocation0 [shape = 'u32[]', space=smem, size = 0x4, offset = 0x4, fixed_abs, tag = 'smem constant byte address 0x4 - core index']
  #allocation1 [shape = 'u32[144,128]{1,0:T(1,128)}', space=vmem, size = 0x12000, scoped, tag = 'internal scratch']
  #allocation2 [shape = 'bf16[8,32]{1,0:T(8,128)(2,1)}', space=vmem, size = 0x800, scoped, tag = 'scratch operand']
  %s0 = inlined_call_operand.vmem [shape: f32[2,8,32], index: 0, kind: input, shape index: {}]
  %s1 = inlined_call_operand.vmem [shape: bf16[2,128,32], index: 1, kind: input, shape index: {}]
  %s2 = inlined_call_operand.vmem [shape: f32[2,1,128], index: 2, kind: input, shape index: {}]
  %s3 = inlined_call_operand.vmem [shape: bf16[32,32], index: 3, kind: input, shape index: {}]
  %s4 = inlined_call_operand.vmem [shape: f32[1,32], index: 4, kind: input, shape index: {}]
  %s5 = inlined_call_operand.vmem [shape: bf16[32,64], index: 5, kind: input, shape index: {}]
  %s6 = inlined_call_operand.vmem [shape: f32[1,64], index: 6, kind: input, shape index: {}]
  %s7 = inlined_call_operand.vmem [shape: bf16[32,32], index: 7, kind: input, shape index: {}]
  %s8 = inlined_call_operand.vmem [shape: f32[1,32], index: 8, kind: input, shape index: {}]
  %s9 = inlined_call_operand.vmem [shape: f32[1,32], index: 9, kind: input, shape index: {}]
  %s10 = inlined_call_operand.vmem [shape: f32[1,32], index: 10, kind: input, shape index: {}]
  %s11 = inlined_call_operand.hbm [shape: f32[2,8,32], index: 11, kind: output, shape index: {}]
  %s12 = sld [smem:[#allocation0]]
  $region77: #{tpu_custom_call.1} parent=0
    _
  %s14 = ssub.s32 1, %s12
  %s15 = scalar_select 0, %s14, %s12
  $region1: #{tpu_custom_call.1} parent=0
    #allocation3 [shape = 'u8[8192]{0}', space=vmem, size = 0x2000, scoped, tag = 'output window, operand 0']
    #allocation4 [shape = 's32[2]{0}', space=sflag, size = 0x8, scoped, tag = 'scoped memory for tpu_custom_call.1']
    %16 = vsyncpa [#allocation4], 0
    %s17 = scalar_lea.sflag [#allocation4], 1
    %18 = vsyncpa %s17, 0
    loop: start=0, step=1, limit=4
    $region2: #{tpu_custom_call.1} parent=1 // loop_pre_header
      _
    $region3: #{tpu_custom_call.1} parent=1 // loop_header
      %s20 = sphi 0, %s24
      %p21 = scmp.ge.s32.totalorder %s20, 4
      %s27 = sphi 0, %s39
      %s28 = sphi 0, %s35
      %s29 = sphi 0, %s27
      %s30 = sphi 0, %s28
      %s31 = sphi 0, %s29
      %s32 = sphi 0, %s30
      %s44 = sphi 0, %s46
      %s47 = sphi 0, %s44
      %s48 = sphi 0, %s47
      %s64 = sphi 0, %s48
      %s70 = sphi 0, %s72
      %s73 = sphi 0, %s70
      %s74 = sphi 0, %s73
      %s90 = sphi 0, %s74
      %s96 = sphi 0, %s98
      %s99 = sphi 0, %s96
      %s100 = sphi 0, %s99
      %s116 = sphi 0, %s100
      %s120 = sphi 0, %s120
      %s122 = sphi 0, %s120
      %s123 = sphi 0, %s122
      %s137 = sphi 0, %s123
      %s141 = sphi 0, %s141
      %s143 = sphi 0, %s141
      %s144 = sphi 0, %s143
      %s158 = sphi 0, %s144
      %s162 = sphi 0, %s162
      %s164 = sphi 0, %s162
      %s165 = sphi 0, %s164
      %s179 = sphi 0, %s165
      %s183 = sphi 0, %s183
      %s185 = sphi 0, %s183
      %s186 = sphi 0, %s185
      %s200 = sphi 0, %s186
      %s204 = sphi 0, %s204
      %s206 = sphi 0, %s204
      %s207 = sphi 0, %s206
      %s221 = sphi 0, %s207
      %s225 = sphi 0, %s225
      %s227 = sphi 0, %s225
      %s228 = sphi 0, %s227
      %s242 = sphi 0, %s228
      %s246 = sphi 0, %s246
      %s248 = sphi 0, %s246
      %s249 = sphi 0, %s248
      %s263 = sphi 0, %s249
      %s267 = sphi 0, %s267
      %s269 = sphi 0, %s267
      %s270 = sphi 0, %s269
      %s284 = sphi 0, %s270
      %s292 = sphi 0, %s294
      %s295 = sphi 0, %s292
      %s296 = sphi 0, %s295
      %s312 = sphi 0, %s296
    $region4: #{tpu_custom_call.1} parent=1 // loop_header_branch
      %23 = sbr.rel (%p21) target = $region8
    $region5: #{tpu_custom_call.1} parent=1 // loop_body
      %s25 = ssub.s32 %s20, 1
      %s26 = ssub.s32 %s20, 2
      %s33 = sadd.s32 1, %s28
      %p34 = scmp.ge.s32.totalorder %s33, 1
      %s35 = scalar_select %p34, 0, %s33
      %s36 = sadd.s32 1, %s27
      %s37 = scalar_select %p34, %s36, %s27
      %p38 = scmp.ge.s32.totalorder %s37, 2
      %s39 = scalar_select %p38, 0, %s37
      %s40 = ssub.s32 %s27, %s39
      %s41 = ssub.s32 %s28, %s35
      %s42 = sor.u32 %s40, %s41
      %p43 = scmp.eq.s32.totalorder %s42, 0
      %s45 = sadd.s32 %s44, 1
      %s46 = scalar_select %p43, %s44, %s45
      %p49 = pneg %p43
      %p50 = scmp.eq.s32.totalorder %s20, 1
      %p51 = por %p49, %p50
      %p52 = scmp.ne.s32.totalorder %s44, %s47
      %p53 = scmp.eq.s32.totalorder %s20, 0
      %p54 = por %p52, %p53
      %p55 = scmp.ne.s32.totalorder %s44, %s47
      %p56 = scmp.eq.s32.totalorder %s25, 1
      %p57 = por %p55, %p56
      %p58 = scmp.ne.s32.totalorder %s47, %s48
      %p59 = scmp.eq.s32.totalorder %s25, 0
      %p60 = por %p58, %p59
      %p61 = scmp.ne.s32.totalorder %s47, %s48
      %p62 = scmp.eq.s32.totalorder %s26, 1
      %p63 = por %p61, %p62
      %p65 = scmp.ne.s32.totalorder %s48, %s64
      %p66 = scmp.eq.s32.totalorder %s26, 0
      %p67 = por %p65, %p66
      %s68 = ssub.s32 %s27, %s39
      %p69 = scmp.eq.s32.totalorder %s68, 0
      %s71 = sadd.s32 %s70, 1
      %s72 = scalar_select %p69, %s70, %s71
      %p75 = pneg %p69
      %p76 = scmp.eq.s32.totalorder %s20, 1
      %p77 = por %p75, %p76
      %p78 = scmp.ne.s32.totalorder %s70, %s73
      %p79 = scmp.eq.s32.totalorder %s20, 0
      %p80 = por %p78, %p79
      %p81 = scmp.ne.s32.totalorder %s70, %s73
      %p82 = scmp.eq.s32.totalorder %s25, 1
      %p83 = por %p81, %p82
      %p84 = scmp.ne.s32.totalorder %s73, %s74
      %p85 = scmp.eq.s32.totalorder %s25, 0
      %p86 = por %p84, %p85
      %p87 = scmp.ne.s32.totalorder %s73, %s74
      %p88 = scmp.eq.s32.totalorder %s26, 1
      %p89 = por %p87, %p88
      %p91 = scmp.ne.s32.totalorder %s74, %s90
      %p92 = scmp.eq.s32.totalorder %s26, 0
      %p93 = por %p91, %p92
      %s94 = ssub.s32 %s27, %s39
      %p95 = scmp.eq.s32.totalorder %s94, 0
      %s97 = sadd.s32 %s96, 1
      %s98 = scalar_select %p95, %s96, %s97
      %p101 = pneg %p95
      %p102 = scmp.eq.s32.totalorder %s20, 1
      %p103 = por %p101, %p102
      %p104 = scmp.ne.s32.totalorder %s96, %s99
      %p105 = scmp.eq.s32.totalorder %s20, 0
      %p106 = por %p104, %p105
      %p107 = scmp.ne.s32.totalorder %s96, %s99
      %p108 = scmp.eq.s32.totalorder %s25, 1
      %p109 = por %p107, %p108
      %p110 = scmp.ne.s32.totalorder %s99, %s100
      %p111 = scmp.eq.s32.totalorder %s25, 0
      %p112 = por %p110, %p111
      %p113 = scmp.ne.s32.totalorder %s99, %s100
      %p114 = scmp.eq.s32.totalorder %s26, 1
      %p115 = por %p113, %p114
      %p117 = scmp.ne.s32.totalorder %s100, %s116
      %p118 = scmp.eq.s32.totalorder %s26, 0
      %p119 = por %p117, %p118
      %s121 = sadd.s32 %s120, 1
      %p124 = scmp.eq.s32.totalorder %s20, 1
      %p125 = scmp.ne.s32.totalorder %s120, %s122
      %p126 = scmp.eq.s32.totalorder %s20, 0
      %p127 = por %p125, %p126
      %p128 = scmp.ne.s32.totalorder %s120, %s122
      %p129 = scmp.eq.s32.totalorder %s25, 1
      %p130 = por %p128, %p129
      %p131 = scmp.ne.s32.totalorder %s122, %s123
      %p132 = scmp.eq.s32.totalorder %s25, 0
      %p133 = por %p131, %p132
      %p134 = scmp.ne.s32.totalorder %s122, %s123
      %p135 = scmp.eq.s32.totalorder %s26, 1
      %p136 = por %p134, %p135
      %p138 = scmp.ne.s32.totalorder %s123, %s137
      %p139 = scmp.eq.s32.totalorder %s26, 0
      %p140 = por %p138, %p139
      %s142 = sadd.s32 %s141, 1
      %p145 = scmp.eq.s32.totalorder %s20, 1
      %p146 = scmp.ne.s32.totalorder %s141, %s143
      %p147 = scmp.eq.s32.totalorder %s20, 0
      %p148 = por %p146, %p147
      %p149 = scmp.ne.s32.totalorder %s141, %s143
      %p150 = scmp.eq.s32.totalorder %s25, 1
      %p151 = por %p149, %p150
      %p152 = scmp.ne.s32.totalorder %s143, %s144
      %p153 = scmp.eq.s32.totalorder %s25, 0
      %p154 = por %p152, %p153
      %p155 = scmp.ne.s32.totalorder %s143, %s144
      %p156 = scmp.eq.s32.totalorder %s26, 1
      %p157 = por %p155, %p156
      %p159 = scmp.ne.s32.totalorder %s144, %s158
      %p160 = scmp.eq.s32.totalorder %s26, 0
      %p161 = por %p159, %p160
      %s163 = sadd.s32 %s162, 1
      %p166 = scmp.eq.s32.totalorder %s20, 1
      %p167 = scmp.ne.s32.totalorder %s162, %s164
      %p168 = scmp.eq.s32.totalorder %s20, 0
      %p169 = por %p167, %p168
      %p170 = scmp.ne.s32.totalorder %s162, %s164
      %p171 = scmp.eq.s32.totalorder %s25, 1
      %p172 = por %p170, %p171
      %p173 = scmp.ne.s32.totalorder %s164, %s165
      %p174 = scmp.eq.s32.totalorder %s25, 0
      %p175 = por %p173, %p174
      %p176 = scmp.ne.s32.totalorder %s164, %s165
      %p177 = scmp.eq.s32.totalorder %s26, 1
      %p178 = por %p176, %p177
      %p180 = scmp.ne.s32.totalorder %s165, %s179
      %p181 = scmp.eq.s32.totalorder %s26, 0
      %p182 = por %p180, %p181
      %s184 = sadd.s32 %s183, 1
      %p187 = scmp.eq.s32.totalorder %s20, 1
      %p188 = scmp.ne.s32.totalorder %s183, %s185
      %p189 = scmp.eq.s32.totalorder %s20, 0
      %p190 = por %p188, %p189
      %p191 = scmp.ne.s32.totalorder %s183, %s185
      %p192 = scmp.eq.s32.totalorder %s25, 1
      %p193 = por %p191, %p192
      %p194 = scmp.ne.s32.totalorder %s185, %s186
      %p195 = scmp.eq.s32.totalorder %s25, 0
      %p196 = por %p194, %p195
      %p197 = scmp.ne.s32.totalorder %s185, %s186
      %p198 = scmp.eq.s32.totalorder %s26, 1
      %p199 = por %p197, %p198
      %p201 = scmp.ne.s32.totalorder %s186, %s200
      %p202 = scmp.eq.s32.totalorder %s26, 0
      %p203 = por %p201, %p202
      %s205 = sadd.s32 %s204, 1
      %p208 = scmp.eq.s32.totalorder %s20, 1
      %p209 = scmp.ne.s32.totalorder %s204, %s206
      %p210 = scmp.eq.s32.totalorder %s20, 0
      %p211 = por %p209, %p210
      %p212 = scmp.ne.s32.totalorder %s204, %s206
      %p213 = scmp.eq.s32.totalorder %s25, 1
      %p214 = por %p212, %p213
      %p215 = scmp.ne.s32.totalorder %s206, %s207
      %p216 = scmp.eq.s32.totalorder %s25, 0
      %p217 = por %p215, %p216
      %p218 = scmp.ne.s32.totalorder %s206, %s207
      %p219 = scmp.eq.s32.totalorder %s26, 1
      %p220 = por %p218, %p219
      %p222 = scmp.ne.s32.totalorder %s207, %s221
      %p223 = scmp.eq.s32.totalorder %s26, 0
      %p224 = por %p222, %p223
      %s226 = sadd.s32 %s225, 1
      %p229 = scmp.eq.s32.totalorder %s20, 1
      %p230 = scmp.ne.s32.totalorder %s225, %s227
      %p231 = scmp.eq.s32.totalorder %s20, 0
      %p232 = por %p230, %p231
      %p233 = scmp.ne.s32.totalorder %s225, %s227
      %p234 = scmp.eq.s32.totalorder %s25, 1
      %p235 = por %p233, %p234
      %p236 = scmp.ne.s32.totalorder %s227, %s228
      %p237 = scmp.eq.s32.totalorder %s25, 0
      %p238 = por %p236, %p237
      %p239 = scmp.ne.s32.totalorder %s227, %s228
      %p240 = scmp.eq.s32.totalorder %s26, 1
      %p241 = por %p239, %p240
      %p243 = scmp.ne.s32.totalorder %s228, %s242
      %p244 = scmp.eq.s32.totalorder %s26, 0
      %p245 = por %p243, %p244
      %s247 = sadd.s32 %s246, 1
      %p250 = scmp.eq.s32.totalorder %s20, 1
      %p251 = scmp.ne.s32.totalorder %s246, %s248
      %p252 = scmp.eq.s32.totalorder %s20, 0
      %p253 = por %p251, %p252
      %p254 = scmp.ne.s32.totalorder %s246, %s248
      %p255 = scmp.eq.s32.totalorder %s25, 1
      %p256 = por %p254, %p255
      %p257 = scmp.ne.s32.totalorder %s248, %s249
      %p258 = scmp.eq.s32.totalorder %s25, 0
      %p259 = por %p257, %p258
      %p260 = scmp.ne.s32.totalorder %s248, %s249
      %p261 = scmp.eq.s32.totalorder %s26, 1
      %p262 = por %p260, %p261
      %p264 = scmp.ne.s32.totalorder %s249, %s263
      %p265 = scmp.eq.s32.totalorder %s26, 0
      %p266 = por %p264, %p265
      %s268 = sadd.s32 %s267, 1
      %p271 = scmp.eq.s32.totalorder %s20, 1
      %p272 = scmp.ne.s32.totalorder %s267, %s269
      %p273 = scmp.eq.s32.totalorder %s20, 0
      %p274 = por %p272, %p273
      %p275 = scmp.ne.s32.totalorder %s267, %s269
      %p276 = scmp.eq.s32.totalorder %s25, 1
      %p277 = por %p275, %p276
      %p278 = scmp.ne.s32.totalorder %s269, %s270
      %p279 = scmp.eq.s32.totalorder %s25, 0
      %p280 = por %p278, %p279
      %p281 = scmp.ne.s32.totalorder %s269, %s270
      %p282 = scmp.eq.s32.totalorder %s26, 1
      %p283 = por %p281, %p282
      %p285 = scmp.ne.s32.totalorder %s270, %s284
      %p286 = scmp.eq.s32.totalorder %s26, 0
      %p287 = por %p285, %p286
      %s288 = ssub.s32 %s27, %s39
      %s289 = ssub.s32 %s28, %s35
      %s290 = sor.u32 %s288, %s289
      %p291 = scmp.eq.s32.totalorder %s290, 0
      %s293 = sadd.s32 %s292, 1
      %s294 = scalar_select %p291, %s292, %s293
      %p297 = pneg %p291
      %p298 = scmp.eq.s32.totalorder %s20, 1
      %p299 = por %p297, %p298
      %p300 = scmp.ne.s32.totalorder %s292, %s295
      %p301 = scmp.eq.s32.totalorder %s20, 0
      %p302 = por %p300, %p301
      %p303 = scmp.ne.s32.totalorder %s292, %s295
      %p304 = scmp.eq.s32.totalorder %s25, 1
      %p305 = por %p303, %p304
      %p306 = scmp.ne.s32.totalorder %s295, %s296
      %p307 = scmp.eq.s32.totalorder %s25, 0
      %p308 = por %p306, %p307
      %p309 = scmp.ne.s32.totalorder %s295, %s296
      %p310 = scmp.eq.s32.totalorder %s26, 1
      %p311 = por %p309, %p310
      %p313 = scmp.ne.s32.totalorder %s296, %s312
      %p314 = scmp.eq.s32.totalorder %s26, 0
      %p315 = por %p313, %p314
      %p316 = scmp.le.s32.totalorder 1, %s20
      %p317 = scmp.lt.s32.totalorder %s20, 3
      %p318 = pnand %p316, %p317
      %p319 = pneg %p318
      // Predicated region
      $region9: #{tpu_custom_call.1} parent=5 // pred_check
        _
      $region10: #{tpu_custom_call.1} parent=5 // pred_check_branch
        %321 = sbr.rel (%p318) target = $region12
      $region11: #{tpu_custom_call.1} parent=5 // pred_region
        %s322 = ssub.s32 %s20, 1
        // Predicated region
        $region13: #{tpu_custom_call.1} parent=11 // pred_check
          %p323 = pneg %p133
        $region14: #{tpu_custom_call.1} parent=11 // pred_check_branch
          %325 = sbr.rel (%p323) target = $region16
        $region15: #{tpu_custom_call.1} parent=11 // pred_region
          _
        $region16: #{tpu_custom_call.1} parent=11 // pred_fallthru
          _
        // Predicated region
        $region17: #{tpu_custom_call.1} parent=11 // pred_check
          %p326 = pneg %p154
        $region18: #{tpu_custom_call.1} parent=11 // pred_check_branch
          %328 = sbr.rel (%p326) target = $region20
        $region19: #{tpu_custom_call.1} parent=11 // pred_region
          _
        $region20: #{tpu_custom_call.1} parent=11 // pred_fallthru
          _
        // Predicated region
        $region21: #{tpu_custom_call.1} parent=11 // pred_check
          %p329 = pneg %p175
        $region22: #{tpu_custom_call.1} parent=11 // pred_check_branch
          %331 = sbr.rel (%p329) target = $region24
        $region23: #{tpu_custom_call.1} parent=11 // pred_region
          _
        $region24: #{tpu_custom_call.1} parent=11 // pred_fallthru
          _
        // Predicated region
        $region25: #{tpu_custom_call.1} parent=11 // pred_check
          %p332 = pneg %p196
        $region26: #{tpu_custom_call.1} parent=11 // pred_check_branch
          %334 = sbr.rel (%p332) target = $region28
        $region27: #{tpu_custom_call.1} parent=11 // pred_region
          _
        $region28: #{tpu_custom_call.1} parent=11 // pred_fallthru
          _
        // Predicated region
        $region29: #{tpu_custom_call.1} parent=11 // pred_check
          %p335 = pneg %p217
        $region30: #{tpu_custom_call.1} parent=11 // pred_check_branch
          %337 = sbr.rel (%p335) target = $region32
        $region31: #{tpu_custom_call.1} parent=11 // pred_region
          _
        $region32: #{tpu_custom_call.1} parent=11 // pred_fallthru
          _
        // Predicated region
        $region33: #{tpu_custom_call.1} parent=11 // pred_check
          %p338 = pneg %p238
        $region34: #{tpu_custom_call.1} parent=11 // pred_check_branch
          %340 = sbr.rel (%p338) target = $region36
        $region35: #{tpu_custom_call.1} parent=11 // pred_region
          _
        $region36: #{tpu_custom_call.1} parent=11 // pred_fallthru
          _
        // Predicated region
        $region37: #{tpu_custom_call.1} parent=11 // pred_check
          %p341 = pneg %p259
        $region38: #{tpu_custom_call.1} parent=11 // pred_check_branch
          %343 = sbr.rel (%p341) target = $region40
        $region39: #{tpu_custom_call.1} parent=11 // pred_region
          _
        $region40: #{tpu_custom_call.1} parent=11 // pred_fallthru
          _
        // Predicated region
        $region41: #{tpu_custom_call.1} parent=11 // pred_check
          %p344 = pneg %p280
        $region42: #{tpu_custom_call.1} parent=11 // pred_check_branch
          %346 = sbr.rel (%p344) target = $region44
        $region43: #{tpu_custom_call.1} parent=11 // pred_region
          _
        $region44: #{tpu_custom_call.1} parent=11 // pred_fallthru
          _
      $region12: #{tpu_custom_call.1} parent=5 // pred_fallthru
        _
      %p347 = scmp.lt.s32.totalorder %s20, 2
      // Predicated region
      $region45: #{tpu_custom_call.1} parent=5 // pred_check
        %p348 = pneg %p347
      $region46: #{tpu_custom_call.1} parent=5 // pred_check_branch
        %350 = sbr.rel (%p348) target = $region48
      $region47: #{tpu_custom_call.1} parent=5 // pred_region
        // Predicated region
        $region49: #{tpu_custom_call.1} parent=47 // pred_check
          %p351 = pneg %p54
        $region50: #{tpu_custom_call.1} parent=47 // pred_check_branch
          %353 = sbr.rel (%p351) target = $region52
        $region51: #{tpu_custom_call.1} parent=47 // pred_region
          %p354 = scmp.lt.s32.totalorder %s27, 1
          %s355 = scalar_select %p354, %s27, 1
          %p356 = scmp.lt.s32.totalorder %s28, 0
          %s357 = scalar_select %p356, %s28, 0
          %s358 = sadd.s32 %s357, %s355
          %s359 = smul.addr %s358, 8
          %s360 = scalar_lea.vmem %s0, %s359
        $region52: #{tpu_custom_call.1} parent=47 // pred_fallthru
          _
        // Predicated region
        $region53: #{tpu_custom_call.1} parent=47 // pred_check
          %p361 = pneg %p80
        $region54: #{tpu_custom_call.1} parent=47 // pred_check_branch
          %363 = sbr.rel (%p361) target = $region56
        $region55: #{tpu_custom_call.1} parent=47 // pred_region
          %p364 = scmp.lt.s32.totalorder %s27, 1
          %s365 = scalar_select %p364, %s27, 1
          %s366 = smul.addr %s365, 16
          %s367 = smul.addr %s366, 4
          %s368 = scalar_lea.vmem %s1, %s367
        $region56: #{tpu_custom_call.1} parent=47 // pred_fallthru
          _
        // Predicated region
        $region57: #{tpu_custom_call.1} parent=47 // pred_check
          %p369 = pneg %p106
        $region58: #{tpu_custom_call.1} parent=47 // pred_check_branch
          %371 = sbr.rel (%p369) target = $region60
        $region59: #{tpu_custom_call.1} parent=47 // pred_region
          %p372 = scmp.lt.s32.totalorder %s27, 1
          %s373 = scalar_select %p372, %s27, 1
          %s374 = scalar_lea.vmem %s2, %s373
        $region60: #{tpu_custom_call.1} parent=47 // pred_fallthru
          _
      $region48: #{tpu_custom_call.1} parent=5 // pred_fallthru
        _
      %p375 = scmp.le.s32.totalorder 1, %s20
      %p376 = scmp.lt.s32.totalorder %s20, 3
      %p377 = pnand %p375, %p376
      %p378 = pneg %p377
      // Predicated region
      $region61: #{tpu_custom_call.1} parent=5 // pred_check
        _
      $region62: #{tpu_custom_call.1} parent=5 // pred_check_branch
        %380 = sbr.rel (%p377) target = $region64
      $region63: #{tpu_custom_call.1} parent=5 // pred_region
        %s381 = ssub.s32 %s20, 1
        %p382 = scmp.lt.s32.totalorder %s29, 1
        %s383 = scalar_select %p382, %s29, 1
        %p384 = scmp.lt.s32.totalorder %s30, 0
        %s385 = scalar_select %p384, %s30, 0
        %s386 = sadd.s32 %s385, %s383
        %s387 = smul.addr %s386, 8
        %s388 = scalar_lea.vmem %s0, %s387
        %p389 = pneg %p60
        %p390 = pneg %p57
        %p391 = scmp.lt.s32.totalorder %s29, 1
        %s392 = scalar_select %p391, %s29, 1
        %s393 = smul.addr %s392, 16
        %s394 = smul.addr %s393, 4
        %s395 = scalar_lea.vmem %s1, %s394
        %p396 = pneg %p86
        %p397 = pneg %p83
        %p398 = scmp.lt.s32.totalorder %s29, 1
        %s399 = scalar_select %p398, %s29, 1
        %s400 = scalar_lea.vmem %s2, %s399
        %p401 = pneg %p112
        %p402 = pneg %p109
        %p403 = pneg %p133
        %p404 = pneg %p130
        %p405 = pneg %p154
        %p406 = pneg %p151
        %p407 = pneg %p175
        %p408 = pneg %p172
        %p409 = pneg %p196
        %p410 = pneg %p193
        %p411 = pneg %p217
        %p412 = pneg %p214
        %p413 = pneg %p238
        %p414 = pneg %p235
        %p415 = pneg %p259
        %p416 = pneg %p256
        %p417 = pneg %p280
        %p418 = pneg %p277
        %p419 = pneg %p308
        %p420 = pneg %p305
        %s421 = sand.u32 %s295, 1
        %s422 = scalar_lea.sflag [#allocation4], %s421
        %s423 = sand.u32 %s295, 1
        %s424 = smul.addr %s423, 8
        %s425 = scalar_lea.vmem [#allocation3], %s424
        %p426 = scmp.lt.s32.totalorder %s29, 1
        %s427 = scalar_select %p426, %s29, 1
        %p428 = scmp.lt.s32.totalorder %s30, 0
        %s429 = scalar_select %p428, %s30, 0
        %s430 = sadd.s32 %s429, %s427
        %s431 = smul.addr %s430, 8
        %s432 = scalar_lea.vmem %s0, %s431
        %p433 = scmp.lt.s32.totalorder %s29, 1
        %s434 = scalar_select %p433, %s29, 1
        %s435 = smul.addr %s434, 16
        %s436 = smul.addr %s435, 4
        %s437 = scalar_lea.vmem %s1, %s436
        %p438 = scmp.lt.s32.totalorder %s29, 1
        %s439 = scalar_select %p438, %s29, 1
        %s440 = scalar_lea.vmem %s2, %s439
        %v442 = vld [vmem:[%s432] sm:$0xff]
        %v443 = vld [vmem:[%s437] sm:$0xf]
        %v444 = vld [vmem:[%s437 + $0x4] sm:$0xf]
        %v445 = vld [vmem:[%s437 + $0x8] sm:$0xf]
        %v446 = vld [vmem:[%s437 + $0xc] sm:$0xf]
        %v447 = vld [vmem:[%s437 + $0x10] sm:$0xf]
        %v448 = vld [vmem:[%s437 + $0x14] sm:$0xf]
        %v449 = vld [vmem:[%s437 + $0x18] sm:$0xf]
        %v450 = vld [vmem:[%s437 + $0x1c] sm:$0xf]
        %v451 = vld [vmem:[%s437 + $0x20] sm:$0xf]
        %v452 = vld [vmem:[%s437 + $0x24] sm:$0xf]
        %v453 = vld [vmem:[%s437 + $0x28] sm:$0xf]
        %v454 = vld [vmem:[%s437 + $0x2c] sm:$0xf]
        %v455 = vld [vmem:[%s437 + $0x30] sm:$0xf]
        %v456 = vld [vmem:[%s437 + $0x34] sm:$0xf]
        %v457 = vld [vmem:[%s437 + $0x38] sm:$0xf]
        %v458 = vld [vmem:[%s437 + $0x3c] sm:$0xf]
        %v459 = vpack.c.bf16 %v442, %v442
        %v460 = vld [vmem:[%s3] sm:$0xf]
        %v461 = vld [vmem:[%s3 + $0x4] sm:$0xf]
        %v462 = vld [vmem:[%s3 + $0x8] sm:$0xf]
        %v463 = vld [vmem:[%s3 + $0xc] sm:$0xf]
        %v464 = vld [vmem:[%s4] sm:$0x1]
        %v466 = vlaneseq
        %v467 = vshrl.u32 %v466, 7
        %v468 = vsub.s32 0, %v467
        %v469 = vrot.slane %v464, %v468
        %v475 = vunpack.c.l.b16 %v460
        %v476 = vunpack.c.l.b16 %v461
        %v477 = vunpack.c.l.b16 %v462
        %v478 = vunpack.c.l.b16 %v463
        %v479 = vpack.c.b16 %v476, %v475
        %v480 = vpack.c.b16 %v478, %v477
        %vm483 = vcmask 261120
        %v485 = vsel %vm483, %v459, 0
        %487 = vmatprep.subr.bf16.mxu0 0
        %488 = vmatpush1.bf16.msra.mxu0 %v479
        %489 = vmatprep.subr.bf16.mxu0 0
        %490 = vmatpush1.bf16.msra.mxu0 %v480
        %491 = vmatprep.subr.bf16.mxu0 0
        %492 = vmatpush1.bf16.msra.mxu0 0
        %493 = vmatprep.subr.bf16.mxu0 0
        %494 = vmatpush1.bf16.msra.mxu0 0
        %495 = vmatprep.subr.bf16.mxu0 0
        %496 = vmatpush1.bf16.msra.mxu0 0
        %497 = vmatprep.subr.bf16.mxu0 0
        %498 = vmatpush1.bf16.msra.mxu0 0
        %499 = vmatprep.subr.bf16.mxu0 0
        %500 = vmatpush1.bf16.msra.mxu0 0
        %501 = vmatprep.subr.bf16.mxu0 0
        %502 = vmatpush1.bf16.msra.mxu0 0
        %503 = vmatprep.subr.bf16.mxu0 0
        %504 = vmatpush1.bf16.msra.mxu0 0
        %505 = vmatprep.subr.bf16.mxu0 0
        %506 = vmatpush1.bf16.msra.mxu0 0
        %507 = vmatprep.subr.bf16.mxu0 0
        %508 = vmatpush1.bf16.msra.mxu0 0
        %509 = vmatprep.subr.bf16.mxu0 0
        %510 = vmatpush1.bf16.msra.mxu0 0
        %511 = vmatprep.subr.bf16.mxu0 0
        %512 = vmatpush1.bf16.msra.mxu0 0
        %513 = vmatprep.subr.bf16.mxu0 0
        %514 = vmatpush1.bf16.msra.mxu0 0
        %515 = vmatprep.subr.bf16.mxu0 0
        %516 = vmatpush1.bf16.msra.mxu0 0
        %517 = vmatprep.subr.bf16.mxu0 0
        %518 = vmatpush1.bf16.msra.mxu0 0
        %519 = vmatprep.mubr.bf16.mxu0 0
        %520 = vmatmul.mubr.bf16.gmra.mrb[0].mxu0 %v485
        %v521 = vpop.f32.mrb[0].mxu0
        %v522 = vadd.f32 %v469, %v521
        %v523 = vpop.f32.mrb[0].mxu0
        %v524 = vpop.f32.mrb[0].mxu0
        %v525 = vpop.f32.mrb[0].mxu0
        %526 = vdwg.mxu0
        %v527 = vld [vmem:[%s5] sm:$0xf]
        %v528 = vld [vmem:[%s5 + $0x4] sm:$0xf]
        %v529 = vld [vmem:[%s5 + $0x8] sm:$0xf]
        %v530 = vld [vmem:[%s5 + $0xc] sm:$0xf]
        %v531 = vld [vmem:[%s6] sm:$0x1]
        %v533 = vlaneseq
        %v534 = vshrl.u32 %v533, 7
        %v535 = vsub.s32 0, %v534
        %v536 = vrot.slane %v531, %v535
        %v554 = vunpack.c.l.b16 %v443
        %v555 = vunpack.c.l.b16 %v444
        %v556 = vunpack.c.l.b16 %v445
        %v557 = vunpack.c.l.b16 %v446
        %v558 = vunpack.c.l.b16 %v447
        %v559 = vunpack.c.l.b16 %v448
        %v560 = vunpack.c.l.b16 %v449
        %v561 = vunpack.c.l.b16 %v450
        %v562 = vunpack.c.l.b16 %v451
        %v563 = vunpack.c.l.b16 %v452
        %v564 = vunpack.c.l.b16 %v453
        %v565 = vunpack.c.l.b16 %v454
        %v566 = vunpack.c.l.b16 %v455
        %v567 = vunpack.c.l.b16 %v456
        %v568 = vunpack.c.l.b16 %v457
        %v569 = vunpack.c.l.b16 %v458
        %v570 = vpack.c.b16 %v555, %v554
        %v571 = vpack.c.b16 %v557, %v556
        %v572 = vpack.c.b16 %v559, %v558
        %v573 = vpack.c.b16 %v561, %v560
        %v574 = vpack.c.b16 %v563, %v562
        %v575 = vpack.c.b16 %v565, %v564
        %v576 = vpack.c.b16 %v567, %v566
        %v577 = vpack.c.b16 %v569, %v568
        %v582 = vunpack.c.l.b16 %v527
        %v583 = vunpack.c.l.b16 %v528
        %v584 = vunpack.c.l.b16 %v529
        %v585 = vunpack.c.l.b16 %v530
        %v586 = vpack.c.b16 %v583, %v582
        %v587 = vpack.c.b16 %v585, %v584
        %v591 = vsel %vm483, %v570, 0
        %v594 = vsel %vm483, %v571, 0
        %v597 = vsel %vm483, %v572, 0
        %v600 = vsel %vm483, %v573, 0
        %v603 = vsel %vm483, %v574, 0
        %v606 = vsel %vm483, %v575, 0
        %v609 = vsel %vm483, %v576, 0
        %v612 = vsel %vm483, %v577, 0
        %614 = vmatprep.subr.bf16.mxu0 0
        %615 = vmatpush1.bf16.msra.mxu0 %v586
        %616 = vmatprep.subr.bf16.mxu0 0
        %617 = vmatpush1.bf16.msra.mxu0 %v587
        %618 = vmatprep.subr.bf16.mxu0 0
        %619 = vmatpush1.bf16.msra.mxu0 0
        %620 = vmatprep.subr.bf16.mxu0 0
        %621 = vmatpush1.bf16.msra.mxu0 0
        %622 = vmatprep.subr.bf16.mxu0 0
        %623 = vmatpush1.bf16.msra.mxu0 0
        %624 = vmatprep.subr.bf16.mxu0 0
        %625 = vmatpush1.bf16.msra.mxu0 0
        %626 = vmatprep.subr.bf16.mxu0 0
        %627 = vmatpush1.bf16.msra.mxu0 0
        %628 = vmatprep.subr.bf16.mxu0 0
        %629 = vmatpush1.bf16.msra.mxu0 0
        %630 = vmatprep.subr.bf16.mxu0 0
        %631 = vmatpush1.bf16.msra.mxu0 0
        %632 = vmatprep.subr.bf16.mxu0 0
        %633 = vmatpush1.bf16.msra.mxu0 0
        %634 = vmatprep.subr.bf16.mxu0 0
        %635 = vmatpush1.bf16.msra.mxu0 0
        %636 = vmatprep.subr.bf16.mxu0 0
        %637 = vmatpush1.bf16.msra.mxu0 0
        %638 = vmatprep.subr.bf16.mxu0 0
        %639 = vmatpush1.bf16.msra.mxu0 0
        %640 = vmatprep.subr.bf16.mxu0 0
        %641 = vmatpush1.bf16.msra.mxu0 0
        %642 = vmatprep.subr.bf16.mxu0 0
        %643 = vmatpush1.bf16.msra.mxu0 0
        %644 = vmatprep.subr.bf16.mxu0 0
        %645 = vmatpush1.bf16.msra.mxu0 0
        %646 = vmatprep.mubr.bf16.mxu0 0
        %647 = vmatmul.mubr.bf16.gmra.mrb[0].mxu0 %v591
        %v648 = vpop.f32.mrb[0].mxu0
        %v649 = vadd.f32 %v536, %v648
        %v650 = vpop.f32.mrb[0].mxu0
        %v651 = vpop.f32.mrb[0].mxu0
        %v652 = vadd.f32 %v536, %v651
        %v653 = vpop.f32.mrb[0].mxu0
        %654 = vmatprep.mubr.bf16.mxu0 0
        %655 = vmatmul.mubr.bf16.gmra.mrb[0].mxu0 %v594
        %v656 = vpop.f32.mrb[0].mxu0
        %v657 = vadd.f32 %v536, %v656
        %v658 = vpop.f32.mrb[0].mxu0
        %v659 = vpop.f32.mrb[0].mxu0
        %v660 = vadd.f32 %v536, %v659
        %v661 = vpop.f32.mrb[0].mxu0
        %662 = vmatprep.mubr.bf16.mxu0 0
        %663 = vmatmul.mubr.bf16.gmra.mrb[0].mxu0 %v597
        %v664 = vpop.f32.mrb[0].mxu0
        %v665 = vadd.f32 %v536, %v664
        %v666 = vpop.f32.mrb[0].mxu0
        %v667 = vpop.f32.mrb[0].mxu0
        %v668 = vadd.f32 %v536, %v667
        %v669 = vpop.f32.mrb[0].mxu0
        %670 = vmatprep.mubr.bf16.mxu0 0
        %671 = vmatmul.mubr.bf16.gmra.mrb[0].mxu0 %v600
        %v672 = vpop.f32.mrb[0].mxu0
        %v673 = vadd.f32 %v536, %v672
        %v674 = vpop.f32.mrb[0].mxu0
        %v675 = vpop.f32.mrb[0].mxu0
        %v676 = vadd.f32 %v536, %v675
        %v677 = vpop.f32.mrb[0].mxu0
        %678 = vmatprep.mubr.bf16.mxu0 0
        %679 = vmatmul.mubr.bf16.gmra.mrb[0].mxu0 %v603
        %v680 = vpop.f32.mrb[0].mxu0
        %v681 = vadd.f32 %v536, %v680
        %v682 = vpop.f32.mrb[0].mxu0
        %v683 = vpop.f32.mrb[0].mxu0
        %v684 = vadd.f32 %v536, %v683
        %v685 = vpop.f32.mrb[0].mxu0
        %686 = vmatprep.mubr.bf16.mxu0 0
        %687 = vmatmul.mubr.bf16.gmra.mrb[0].mxu0 %v606
        %v688 = vpop.f32.mrb[0].mxu0
        %v689 = vadd.f32 %v536, %v688
        %v690 = vpop.f32.mrb[0].mxu0
        %v691 = vpop.f32.mrb[0].mxu0
        %v692 = vadd.f32 %v536, %v691
        %v693 = vpop.f32.mrb[0].mxu0
        %694 = vmatprep.mubr.bf16.mxu0 0
        %695 = vmatmul.mubr.bf16.gmra.mrb[0].mxu0 %v609
        %v696 = vpop.f32.mrb[0].mxu0
        %v697 = vadd.f32 %v536, %v696
        %v698 = vpop.f32.mrb[0].mxu0
        %v699 = vpop.f32.mrb[0].mxu0
        %v700 = vadd.f32 %v536, %v699
        %v701 = vpop.f32.mrb[0].mxu0
        %702 = vmatprep.mubr.bf16.mxu0 0
        %703 = vmatmul.mubr.bf16.gmra.mrb[0].mxu0 %v612
        %v704 = vpop.f32.mrb[0].mxu0
        %v705 = vadd.f32 %v536, %v704
        %v706 = vpop.f32.mrb[0].mxu0
        %v707 = vpop.f32.mrb[0].mxu0
        %v708 = vadd.f32 %v536, %v707
        %v709 = vpop.f32.mrb[0].mxu0
        %710 = vdwg.mxu0
        %v711 = vpack.c.bf16 %v522, %v522
        %v712 = vpack.c.bf16 %v652, %v649
        %v713 = vpack.c.bf16 %v660, %v657
        %v714 = vpack.c.bf16 %v668, %v665
        %v715 = vpack.c.bf16 %v676, %v673
        %v716 = vpack.c.bf16 %v684, %v681
        %v717 = vpack.c.bf16 %v692, %v689
        %v718 = vpack.c.bf16 %v700, %v697
        %v719 = vpack.c.bf16 %v708, %v705
        %v720 = vld [vmem:[%s440] sm:$0x1]
        %v722 = vlaneseq
        %v723 = vshrl.u32 %v722, 7
        %v724 = vsub.s32 0, %v723
        %v725 = vrot.slane %v720, %v724
        %vm727 = vcmask 64512
        %v729 = vsel %vm727, %v711, 0
        %v732 = vsel %vm727, %v712, 0
        %v735 = vsel %vm727, %v713, 0
        %v738 = vsel %vm727, %v714, 0
        %v741 = vsel %vm727, %v715, 0
        %v744 = vsel %vm727, %v716, 0
        %v747 = vsel %vm727, %v717, 0
        %v750 = vsel %vm727, %v718, 0
        %v753 = vsel %vm727, %v719, 0
        %755 = vmatprep.subr.bf16.mxu0 0
        %756 = vmatpush1.bf16.xpose.msra.mxu0 %v732
        %757 = vmatprep.subr.bf16.mxu0 0
        %758 = vmatpush1.bf16.xpose.msra.mxu0 %v735
        %759 = vmatprep.subr.bf16.mxu0 0
        %760 = vmatpush1.bf16.xpose.msra.mxu0 %v738
        %761 = vmatprep.subr.bf16.mxu0 0
        %762 = vmatpush1.bf16.xpose.msra.mxu0 %v741
        %763 = vmatprep.subr.bf16.mxu0 0
        %764 = vmatpush1.bf16.xpose.msra.mxu0 %v744
        %765 = vmatprep.subr.bf16.mxu0 0
        %766 = vmatpush1.bf16.xpose.msra.mxu0 %v747
        %767 = vmatprep.subr.bf16.mxu0 0
        %768 = vmatpush1.bf16.xpose.msra.mxu0 %v750
        %769 = vmatprep.subr.bf16.mxu0 0
        %770 = vmatpush1.bf16.xpose.msra.mxu0 %v753
        %771 = vmatprep.subr.bf16.mxu0 0
        %772 = vmatpush1.bf16.xpose.msra.mxu0 0
        %773 = vmatprep.subr.bf16.mxu0 0
        %774 = vmatpush1.bf16.xpose.msra.mxu0 0
        %775 = vmatprep.subr.bf16.mxu0 0
        %776 = vmatpush1.bf16.xpose.msra.mxu0 0
        %777 = vmatprep.subr.bf16.mxu0 0
        %778 = vmatpush1.bf16.xpose.msra.mxu0 0
        %779 = vmatprep.subr.bf16.mxu0 0
        %780 = vmatpush1.bf16.xpose.msra.mxu0 0
        %781 = vmatprep.subr.bf16.mxu0 0
        %782 = vmatpush1.bf16.xpose.msra.mxu0 0
        %783 = vmatprep.subr.bf16.mxu0 0
        %784 = vmatpush1.bf16.xpose.msra.mxu0 0
        %785 = vmatprep.subr.bf16.mxu0 0
        %786 = vmatpush1.bf16.xpose.msra.mxu0 0
        %787 = vmatprep.mubr.bf16.mxu0 0
        %788 = vmatmul.mubr.bf16.gmra.mrb[0].mxu0 %v729
        %v789 = vpop.f32.mrb[0].mxu0
        %v790 = vadd.f32 %v725, %v789
        %v791 = vpop.f32.mrb[0].mxu0
        %v792 = vpop.f32.mrb[0].mxu0
        %v793 = vpop.f32.mrb[0].mxu0
        %794 = vdwg.mxu0
        %795 = vmax.xlane.f32.xlu0 %v790
        %v796 = vpop.xlane.xlu0 %795
        %v797 = vsub.f32 %v790, %v796
        %v798 = vmul.f32 %v797, 1.442695
        %v799 = vpow.pop %v798
        %800 = vadd.xlane.f32.xlu0 %v799
        %v801 = vpop.xlane.xlu0 %800
        %v802 = vrcp.pop %v801
        %v803 = vpack.c.bf16 %v799, %v799
        %812 = vrot.lane.b32.xlu0 %v712, 96
        %v813 = vpop.permute.xlu0 %812
        %814 = vrot.lane.b32.xlu0 %v713, 96
        %v815 = vpop.permute.xlu0 %814
        %816 = vrot.lane.b32.xlu0 %v714, 96
        %v817 = vpop.permute.xlu0 %816
        %818 = vrot.lane.b32.xlu0 %v715, 96
        %v819 = vpop.permute.xlu0 %818
        %820 = vrot.lane.b32.xlu0 %v716, 96
        %v821 = vpop.permute.xlu0 %820
        %822 = vrot.lane.b32.xlu0 %v717, 96
        %v823 = vpop.permute.xlu0 %822
        %824 = vrot.lane.b32.xlu0 %v718, 96
        %v825 = vpop.permute.xlu0 %824
        %826 = vrot.lane.b32.xlu0 %v719, 96
        %v827 = vpop.permute.xlu0 %826
        %836 = vmatprep.subr.bf16.mxu0 0
        %837 = vmatpush1.bf16.msra.mxu0 %v813
        %838 = vmatprep.subr.bf16.mxu0 0
        %839 = vmatpush1.bf16.msra.mxu0 %v815
        %840 = vmatprep.subr.bf16.mxu0 0
        %841 = vmatpush1.bf16.msra.mxu0 %v817
        %842 = vmatprep.subr.bf16.mxu0 0
        %843 = vmatpush1.bf16.msra.mxu0 %v819
        %844 = vmatprep.subr.bf16.mxu0 0
        %845 = vmatpush1.bf16.msra.mxu0 %v821
        %846 = vmatprep.subr.bf16.mxu0 0
        %847 = vmatpush1.bf16.msra.mxu0 %v823
        %848 = vmatprep.subr.bf16.mxu0 0
        %849 = vmatpush1.bf16.msra.mxu0 %v825
        %850 = vmatprep.subr.bf16.mxu0 0
        %851 = vmatpush1.bf16.msra.mxu0 %v827
        %852 = vmatprep.subr.bf16.mxu0 0
        %853 = vmatpush1.bf16.msra.mxu0 0
        %854 = vmatprep.subr.bf16.mxu0 0
        %855 = vmatpush1.bf16.msra.mxu0 0
        %856 = vmatprep.subr.bf16.mxu0 0
        %857 = vmatpush1.bf16.msra.mxu0 0
        %858 = vmatprep.subr.bf16.mxu0 0
        %859 = vmatpush1.bf16.msra.mxu0 0
        %860 = vmatprep.subr.bf16.mxu0 0
        %861 = vmatpush1.bf16.msra.mxu0 0
        %862 = vmatprep.subr.bf16.mxu0 0
        %863 = vmatpush1.bf16.msra.mxu0 0
        %864 = vmatprep.subr.bf16.mxu0 0
        %865 = vmatpush1.bf16.msra.mxu0 0
        %866 = vmatprep.subr.bf16.mxu0 0
        %867 = vmatpush1.bf16.msra.mxu0 0
        %868 = vmatprep.mubr.bf16.mxu0 0
        %869 = vmatmul.mubr.bf16.gmra.mrb[0].mxu0 %v803
        %v870 = vpop.f32.mrb[0].mxu0
        %v871 = vadd.f32 0.0, %v870
        %v872 = vpop.f32.mrb[0].mxu0
        %v873 = vpop.f32.mrb[0].mxu0
        %v874 = vpop.f32.mrb[0].mxu0
        %875 = vdwg.mxu0
        %v876 = vmul.f32 %v871, %v802
        %v877 = vpack.c.bf16 %v876, %v876
        %879 = vrot.lane.b32.xlu0 %v711, 120
        %v880 = vpop.permute.xlu0 %879
        %881 = vrot.lane.b32.xlu0 %v712, 120
        %v882 = vpop.permute.xlu0 %881
        %883 = vrot.lane.b32.xlu0 %v713, 120
        %v884 = vpop.permute.xlu0 %883
        %885 = vrot.lane.b32.xlu0 %v714, 120
        %v886 = vpop.permute.xlu0 %885
        %887 = vrot.lane.b32.xlu0 %v715, 120
        %v888 = vpop.permute.xlu0 %887
        %889 = vrot.lane.b32.xlu0 %v716, 120
        %v890 = vpop.permute.xlu0 %889
        %891 = vrot.lane.b32.xlu0 %v717, 120
        %v892 = vpop.permute.xlu0 %891
        %893 = vrot.lane.b32.xlu0 %v718, 120
        %v894 = vpop.permute.xlu0 %893
        %895 = vrot.lane.b32.xlu0 %v719, 120
        %v896 = vpop.permute.xlu0 %895
        %v898 = vsel %vm727, %v880, 0
        %v901 = vsel %vm727, %v882, 0
        %v904 = vsel %vm727, %v884, 0
        %v907 = vsel %vm727, %v886, 0
        %v910 = vsel %vm727, %v888, 0
        %v913 = vsel %vm727, %v890, 0
        %v916 = vsel %vm727, %v892, 0
        %v919 = vsel %vm727, %v894, 0
        %v922 = vsel %vm727, %v896, 0
        %924 = vmatprep.subr.bf16.mxu0 0
        %925 = vmatpush1.bf16.xpose.msra.mxu0 %v901
        %926 = vmatprep.subr.bf16.mxu0 0
        %927 = vmatpush1.bf16.xpose.msra.mxu0 %v904
        %928 = vmatprep.subr.bf16.mxu0 0
        %929 = vmatpush1.bf16.xpose.msra.mxu0 %v907
        %930 = vmatprep.subr.bf16.mxu0 0
        %931 = vmatpush1.bf16.xpose.msra.mxu0 %v910
        %932 = vmatprep.subr.bf16.mxu0 0
        %933 = vmatpush1.bf16.xpose.msra.mxu0 %v913
        %934 = vmatprep.subr.bf16.mxu0 0
        %935 = vmatpush1.bf16.xpose.msra.mxu0 %v916
        %936 = vmatprep.subr.bf16.mxu0 0
        %937 = vmatpush1.bf16.xpose.msra.mxu0 %v919
        %938 = vmatprep.subr.bf16.mxu0 0
        %939 = vmatpush1.bf16.xpose.msra.mxu0 %v922
        %940 = vmatprep.subr.bf16.mxu0 0
        %941 = vmatpush1.bf16.xpose.msra.mxu0 0
        %942 = vmatprep.subr.bf16.mxu0 0
        %943 = vmatpush1.bf16.xpose.msra.mxu0 0
        %944 = vmatprep.subr.bf16.mxu0 0
        %945 = vmatpush1.bf16.xpose.msra.mxu0 0
        %946 = vmatprep.subr.bf16.mxu0 0
        %947 = vmatpush1.bf16.xpose.msra.mxu0 0
        %948 = vmatprep.subr.bf16.mxu0 0
        %949 = vmatpush1.bf16.xpose.msra.mxu0 0
        %950 = vmatprep.subr.bf16.mxu0 0
        %951 = vmatpush1.bf16.xpose.msra.mxu0 0
        %952 = vmatprep.subr.bf16.mxu0 0
        %953 = vmatpush1.bf16.xpose.msra.mxu0 0
        %954 = vmatprep.subr.bf16.mxu0 0
        %955 = vmatpush1.bf16.xpose.msra.mxu0 0
        %956 = vmatprep.mubr.bf16.mxu0 0
        %957 = vmatmul.mubr.bf16.gmra.mrb[0].mxu0 %v898
        %v958 = vpop.f32.mrb[0].mxu0
        %v959 = vadd.f32 %v725, %v958
        %v960 = vpop.f32.mrb[0].mxu0
        %v961 = vpop.f32.mrb[0].mxu0
        %v962 = vpop.f32.mrb[0].mxu0
        %963 = vdwg.mxu0
        %964 = vmax.xlane.f32.xlu0 %v959
        %v965 = vpop.xlane.xlu0 %964
        %v966 = vsub.f32 %v959, %v965
        %v967 = vmul.f32 %v966, 1.442695
        %v968 = vpow.pop %v967
        %969 = vadd.xlane.f32.xlu0 %v968
        %v970 = vpop.xlane.xlu0 %969
        %v971 = vrcp.pop %v970
        %v972 = vpack.c.bf16 %v968, %v968
        %973 = vrot.lane.b32.xlu0 %v712, 88
        %v974 = vpop.permute.xlu0 %973
        %975 = vrot.lane.b32.xlu0 %v713, 88
        %v976 = vpop.permute.xlu0 %975
        %977 = vrot.lane.b32.xlu0 %v714, 88
        %v978 = vpop.permute.xlu0 %977
        %979 = vrot.lane.b32.xlu0 %v715, 88
        %v980 = vpop.permute.xlu0 %979
        %981 = vrot.lane.b32.xlu0 %v716, 88
        %v982 = vpop.permute.xlu0 %981
        %983 = vrot.lane.b32.xlu0 %v717, 88
        %v984 = vpop.permute.xlu0 %983
        %985 = vrot.lane.b32.xlu0 %v718, 88
        %v986 = vpop.permute.xlu0 %985
        %987 = vrot.lane.b32.xlu0 %v719, 88
        %v988 = vpop.permute.xlu0 %987
        %997 = vmatprep.subr.bf16.mxu0 0
        %998 = vmatpush1.bf16.msra.mxu0 %v974
        %999 = vmatprep.subr.bf16.mxu0 0
        %1000 = vmatpush1.bf16.msra.mxu0 %v976
        %1001 = vmatprep.subr.bf16.mxu0 0
        %1002 = vmatpush1.bf16.msra.mxu0 %v978
        %1003 = vmatprep.subr.bf16.mxu0 0
        %1004 = vmatpush1.bf16.msra.mxu0 %v980
        %1005 = vmatprep.subr.bf16.mxu0 0
        %1006 = vmatpush1.bf16.msra.mxu0 %v982
        %1007 = vmatprep.subr.bf16.mxu0 0
        %1008 = vmatpush1.bf16.msra.mxu0 %v984
        %1009 = vmatprep.subr.bf16.mxu0 0
        %1010 = vmatpush1.bf16.msra.mxu0 %v986
        %1011 = vmatprep.subr.bf16.mxu0 0
        %1012 = vmatpush1.bf16.msra.mxu0 %v988
        %1013 = vmatprep.subr.bf16.mxu0 0
        %1014 = vmatpush1.bf16.msra.mxu0 0
        %1015 = vmatprep.subr.bf16.mxu0 0
        %1016 = vmatpush1.bf16.msra.mxu0 0
        %1017 = vmatprep.subr.bf16.mxu0 0
        %1018 = vmatpush1.bf16.msra.mxu0 0
        %1019 = vmatprep.subr.bf16.mxu0 0
        %1020 = vmatpush1.bf16.msra.mxu0 0
        %1021 = vmatprep.subr.bf16.mxu0 0
        %1022 = vmatpush1.bf16.msra.mxu0 0
        %1023 = vmatprep.subr.bf16.mxu0 0
        %1024 = vmatpush1.bf16.msra.mxu0 0
        %1025 = vmatprep.subr.bf16.mxu0 0
        %1026 = vmatpush1.bf16.msra.mxu0 0
        %1027 = vmatprep.subr.bf16.mxu0 0
        %1028 = vmatpush1.bf16.msra.mxu0 0
        %1029 = vmatprep.mubr.bf16.mxu0 0
        %1030 = vmatmul.mubr.bf16.gmra.mrb[0].mxu0 %v972
        %v1031 = vpop.f32.mrb[0].mxu0
        %v1032 = vadd.f32 0.0, %v1031
        %v1033 = vpop.f32.mrb[0].mxu0
        %v1034 = vpop.f32.mrb[0].mxu0
        %v1035 = vpop.f32.mrb[0].mxu0
        %1036 = vdwg.mxu0
        %v1037 = vmul.f32 %v1032, %v971
        %v1038 = vpack.c.bf16 %v1037, %v1037
        %1039 = vrot.lane.b32.xlu0 %v711, 112
        %v1040 = vpop.permute.xlu0 %1039
        %1041 = vrot.lane.b32.xlu0 %v712, 112
        %v1042 = vpop.permute.xlu0 %1041
        %1043 = vrot.lane.b32.xlu0 %v713, 112
        %v1044 = vpop.permute.xlu0 %1043
        %1045 = vrot.lane.b32.xlu0 %v714, 112
        %v1046 = vpop.permute.xlu0 %1045
        %1047 = vrot.lane.b32.xlu0 %v715, 112
        %v1048 = vpop.permute.xlu0 %1047
        %1049 = vrot.lane.b32.xlu0 %v716, 112
        %v1050 = vpop.permute.xlu0 %1049
        %1051 = vrot.lane.b32.xlu0 %v717, 112
        %v1052 = vpop.permute.xlu0 %1051
        %1053 = vrot.lane.b32.xlu0 %v718, 112
        %v1054 = vpop.permute.xlu0 %1053
        %1055 = vrot.lane.b32.xlu0 %v719, 112
        %v1056 = vpop.permute.xlu0 %1055
        %v1058 = vsel %vm727, %v1040, 0
        %v1061 = vsel %vm727, %v1042, 0
        %v1064 = vsel %vm727, %v1044, 0
        %v1067 = vsel %vm727, %v1046, 0
        %v1070 = vsel %vm727, %v1048, 0
        %v1073 = vsel %vm727, %v1050, 0
        %v1076 = vsel %vm727, %v1052, 0
        %v1079 = vsel %vm727, %v1054, 0
        %v1082 = vsel %vm727, %v1056, 0
        %1084 = vmatprep.subr.bf16.mxu0 0
        %1085 = vmatpush1.bf16.xpose.msra.mxu0 %v1061
        %1086 = vmatprep.subr.bf16.mxu0 0
        %1087 = vmatpush1.bf16.xpose.msra.mxu0 %v1064
        %1088 = vmatprep.subr.bf16.mxu0 0
        %1089 = vmatpush1.bf16.xpose.msra.mxu0 %v1067
        %1090 = vmatprep.subr.bf16.mxu0 0
        %1091 = vmatpush1.bf16.xpose.msra.mxu0 %v1070
        %1092 = vmatprep.subr.bf16.mxu0 0
        %1093 = vmatpush1.bf16.xpose.msra.mxu0 %v1073
        %1094 = vmatprep.subr.bf16.mxu0 0
        %1095 = vmatpush1.bf16.xpose.msra.mxu0 %v1076
        %1096 = vmatprep.subr.bf16.mxu0 0
        %1097 = vmatpush1.bf16.xpose.msra.mxu0 %v1079
        %1098 = vmatprep.subr.bf16.mxu0 0
        %1099 = vmatpush1.bf16.xpose.msra.mxu0 %v1082
        %1100 = vmatprep.subr.bf16.mxu0 0
        %1101 = vmatpush1.bf16.xpose.msra.mxu0 0
        %1102 = vmatprep.subr.bf16.mxu0 0
        %1103 = vmatpush1.bf16.xpose.msra.mxu0 0
        %1104 = vmatprep.subr.bf16.mxu0 0
        %1105 = vmatpush1.bf16.xpose.msra.mxu0 0
        %1106 = vmatprep.subr.bf16.mxu0 0
        %1107 = vmatpush1.bf16.xpose.msra.mxu0 0
        %1108 = vmatprep.subr.bf16.mxu0 0
        %1109 = vmatpush1.bf16.xpose.msra.mxu0 0
        %1110 = vmatprep.subr.bf16.mxu0 0
        %1111 = vmatpush1.bf16.xpose.msra.mxu0 0
        %1112 = vmatprep.subr.bf16.mxu0 0
        %1113 = vmatpush1.bf16.xpose.msra.mxu0 0
        %1114 = vmatprep.subr.bf16.mxu0 0
        %1115 = vmatpush1.bf16.xpose.msra.mxu0 0
        %1116 = vmatprep.mubr.bf16.mxu0 0
        %1117 = vmatmul.mubr.bf16.gmra.mrb[0].mxu0 %v1058
        %v1118 = vpop.f32.mrb[0].mxu0
        %v1119 = vadd.f32 %v725, %v1118
        %v1120 = vpop.f32.mrb[0].mxu0
        %v1121 = vpop.f32.mrb[0].mxu0
        %v1122 = vpop.f32.mrb[0].mxu0
        %1123 = vdwg.mxu0
        %1124 = vmax.xlane.f32.xlu0 %v1119
        %v1125 = vpop.xlane.xlu0 %1124
        %v1126 = vsub.f32 %v1119, %v1125
        %v1127 = vmul.f32 %v1126, 1.442695
        %v1128 = vpow.pop %v1127
        %1129 = vadd.xlane.f32.xlu0 %v1128
        %v1130 = vpop.xlane.xlu0 %1129
        %v1131 = vrcp.pop %v1130
        %v1132 = vpack.c.bf16 %v1128, %v1128
        %1133 = vrot.lane.b32.xlu0 %v712, 80
        %v1134 = vpop.permute.xlu0 %1133
        %1135 = vrot.lane.b32.xlu0 %v713, 80
        %v1136 = vpop.permute.xlu0 %1135
        %1137 = vrot.lane.b32.xlu0 %v714, 80
        %v1138 = vpop.permute.xlu0 %1137
        %1139 = vrot.lane.b32.xlu0 %v715, 80
        %v1140 = vpop.permute.xlu0 %1139
        %1141 = vrot.lane.b32.xlu0 %v716, 80
        %v1142 = vpop.permute.xlu0 %1141
        %1143 = vrot.lane.b32.xlu0 %v717, 80
        %v1144 = vpop.permute.xlu0 %1143
        %1145 = vrot.lane.b32.xlu0 %v718, 80
        %v1146 = vpop.permute.xlu0 %1145
        %1147 = vrot.lane.b32.xlu0 %v719, 80
        %v1148 = vpop.permute.xlu0 %1147
        %1157 = vmatprep.subr.bf16.mxu0 0
        %1158 = vmatpush1.bf16.msra.mxu0 %v1134
        %1159 = vmatprep.subr.bf16.mxu0 0
        %1160 = vmatpush1.bf16.msra.mxu0 %v1136
        %1161 = vmatprep.subr.bf16.mxu0 0
        %1162 = vmatpush1.bf16.msra.mxu0 %v1138
        %1163 = vmatprep.subr.bf16.mxu0 0
        %1164 = vmatpush1.bf16.msra.mxu0 %v1140
        %1165 = vmatprep.subr.bf16.mxu0 0
        %1166 = vmatpush1.bf16.msra.mxu0 %v1142
        %1167 = vmatprep.subr.bf16.mxu0 0
        %1168 = vmatpush1.bf16.msra.mxu0 %v1144
        %1169 = vmatprep.subr.bf16.mxu0 0
        %1170 = vmatpush1.bf16.msra.mxu0 %v1146
        %1171 = vmatprep.subr.bf16.mxu0 0
        %1172 = vmatpush1.bf16.msra.mxu0 %v1148
        %1173 = vmatprep.subr.bf16.mxu0 0
        %1174 = vmatpush1.bf16.msra.mxu0 0
        %1175 = vmatprep.subr.bf16.mxu0 0
        %1176 = vmatpush1.bf16.msra.mxu0 0
        %1177 = vmatprep.subr.bf16.mxu0 0
        %1178 = vmatpush1.bf16.msra.mxu0 0
        %1179 = vmatprep.subr.bf16.mxu0 0
        %1180 = vmatpush1.bf16.msra.mxu0 0
        %1181 = vmatprep.subr.bf16.mxu0 0
        %1182 = vmatpush1.bf16.msra.mxu0 0
        %1183 = vmatprep.subr.bf16.mxu0 0
        %1184 = vmatpush1.bf16.msra.mxu0 0
        %1185 = vmatprep.subr.bf16.mxu0 0
        %1186 = vmatpush1.bf16.msra.mxu0 0
        %1187 = vmatprep.subr.bf16.mxu0 0
        %1188 = vmatpush1.bf16.msra.mxu0 0
        %1189 = vmatprep.mubr.bf16.mxu0 0
        %1190 = vmatmul.mubr.bf16.gmra.mrb[0].mxu0 %v1132
        %v1191 = vpop.f32.mrb[0].mxu0
        %v1192 = vadd.f32 0.0, %v1191
        %v1193 = vpop.f32.mrb[0].mxu0
        %v1194 = vpop.f32.mrb[0].mxu0
        %v1195 = vpop.f32.mrb[0].mxu0
        %1196 = vdwg.mxu0
        %v1197 = vmul.f32 %v1192, %v1131
        %v1198 = vpack.c.bf16 %v1197, %v1197
        %1199 = vrot.lane.b32.xlu0 %v711, 104
        %v1200 = vpop.permute.xlu0 %1199
        %1201 = vrot.lane.b32.xlu0 %v712, 104
        %v1202 = vpop.permute.xlu0 %1201
        %1203 = vrot.lane.b32.xlu0 %v713, 104
        %v1204 = vpop.permute.xlu0 %1203
        %1205 = vrot.lane.b32.xlu0 %v714, 104
        %v1206 = vpop.permute.xlu0 %1205
        %1207 = vrot.lane.b32.xlu0 %v715, 104
        %v1208 = vpop.permute.xlu0 %1207
        %1209 = vrot.lane.b32.xlu0 %v716, 104
        %v1210 = vpop.permute.xlu0 %1209
        %1211 = vrot.lane.b32.xlu0 %v717, 104
        %v1212 = vpop.permute.xlu0 %1211
        %1213 = vrot.lane.b32.xlu0 %v718, 104
        %v1214 = vpop.permute.xlu0 %1213
        %1215 = vrot.lane.b32.xlu0 %v719, 104
        %v1216 = vpop.permute.xlu0 %1215
        %v1218 = vsel %vm727, %v1200, 0
        %v1221 = vsel %vm727, %v1202, 0
        %v1224 = vsel %vm727, %v1204, 0
        %v1227 = vsel %vm727, %v1206, 0
        %v1230 = vsel %vm727, %v1208, 0
        %v1233 = vsel %vm727, %v1210, 0
        %v1236 = vsel %vm727, %v1212, 0
        %v1239 = vsel %vm727, %v1214, 0
        %v1242 = vsel %vm727, %v1216, 0
        %1244 = vmatprep.subr.bf16.mxu0 0
        %1245 = vmatpush1.bf16.xpose.msra.mxu0 %v1221
        %1246 = vmatprep.subr.bf16.mxu0 0
        %1247 = vmatpush1.bf16.xpose.msra.mxu0 %v1224
        %1248 = vmatprep.subr.bf16.mxu0 0
        %1249 = vmatpush1.bf16.xpose.msra.mxu0 %v1227
        %1250 = vmatprep.subr.bf16.mxu0 0
        %1251 = vmatpush1.bf16.xpose.msra.mxu0 %v1230
        %1252 = vmatprep.subr.bf16.mxu0 0
        %1253 = vmatpush1.bf16.xpose.msra.mxu0 %v1233
        %1254 = vmatprep.subr.bf16.mxu0 0
        %1255 = vmatpush1.bf16.xpose.msra.mxu0 %v1236
        %1256 = vmatprep.subr.bf16.mxu0 0
        %1257 = vmatpush1.bf16.xpose.msra.mxu0 %v1239
        %1258 = vmatprep.subr.bf16.mxu0 0
        %1259 = vmatpush1.bf16.xpose.msra.mxu0 %v1242
        %1260 = vmatprep.subr.bf16.mxu0 0
        %1261 = vmatpush1.bf16.xpose.msra.mxu0 0
        %1262 = vmatprep.subr.bf16.mxu0 0
        %1263 = vmatpush1.bf16.xpose.msra.mxu0 0
        %1264 = vmatprep.subr.bf16.mxu0 0
        %1265 = vmatpush1.bf16.xpose.msra.mxu0 0
        %1266 = vmatprep.subr.bf16.mxu0 0
        %1267 = vmatpush1.bf16.xpose.msra.mxu0 0
        %1268 = vmatprep.subr.bf16.mxu0 0
        %1269 = vmatpush1.bf16.xpose.msra.mxu0 0
        %1270 = vmatprep.subr.bf16.mxu0 0
        %1271 = vmatpush1.bf16.xpose.msra.mxu0 0
        %1272 = vmatprep.subr.bf16.mxu0 0
        %1273 = vmatpush1.bf16.xpose.msra.mxu0 0
        %1274 = vmatprep.subr.bf16.mxu0 0
        %1275 = vmatpush1.bf16.xpose.msra.mxu0 0
        %1276 = vmatprep.mubr.bf16.mxu0 0
        %1277 = vmatmul.mubr.bf16.gmra.mrb[0].mxu0 %v1218
        %v1278 = vpop.f32.mrb[0].mxu0
        %v1279 = vadd.f32 %v725, %v1278
        %v1280 = vpop.f32.mrb[0].mxu0
        %v1281 = vpop.f32.mrb[0].mxu0
        %v1282 = vpop.f32.mrb[0].mxu0
        %1283 = vdwg.mxu0
        %1284 = vmax.xlane.f32.xlu0 %v1279
        %v1285 = vpop.xlane.xlu0 %1284
        %v1286 = vsub.f32 %v1279, %v1285
        %v1287 = vmul.f32 %v1286, 1.442695
        %v1288 = vpow.pop %v1287
        %1289 = vadd.xlane.f32.xlu0 %v1288
        %v1290 = vpop.xlane.xlu0 %1289
        %v1291 = vrcp.pop %v1290
        %v1292 = vpack.c.bf16 %v1288, %v1288
        %1293 = vrot.lane.b32.xlu0 %v712, 72
        %v1294 = vpop.permute.xlu0 %1293
        %1295 = vrot.lane.b32.xlu0 %v713, 72
        %v1296 = vpop.permute.xlu0 %1295
        %1297 = vrot.lane.b32.xlu0 %v714, 72
        %v1298 = vpop.permute.xlu0 %1297
        %1299 = vrot.lane.b32.xlu0 %v715, 72
        %v1300 = vpop.permute.xlu0 %1299
        %1301 = vrot.lane.b32.xlu0 %v716, 72
        %v1302 = vpop.permute.xlu0 %1301
        %1303 = vrot.lane.b32.xlu0 %v717, 72
        %v1304 = vpop.permute.xlu0 %1303
        %1305 = vrot.lane.b32.xlu0 %v718, 72
        %v1306 = vpop.permute.xlu0 %1305
        %1307 = vrot.lane.b32.xlu0 %v719, 72
        %v1308 = vpop.permute.xlu0 %1307
        %1317 = vmatprep.subr.bf16.mxu0 0
        %1318 = vmatpush1.bf16.msra.mxu0 %v1294
        %1319 = vmatprep.subr.bf16.mxu0 0
        %1320 = vmatpush1.bf16.msra.mxu0 %v1296
        %1321 = vmatprep.subr.bf16.mxu0 0
        %1322 = vmatpush1.bf16.msra.mxu0 %v1298
        %1323 = vmatprep.subr.bf16.mxu0 0
        %1324 = vmatpush1.bf16.msra.mxu0 %v1300
        %1325 = vmatprep.subr.bf16.mxu0 0
        %1326 = vmatpush1.bf16.msra.mxu0 %v1302
        %1327 = vmatprep.subr.bf16.mxu0 0
        %1328 = vmatpush1.bf16.msra.mxu0 %v1304
        %1329 = vmatprep.subr.bf16.mxu0 0
        %1330 = vmatpush1.bf16.msra.mxu0 %v1306
        %1331 = vmatprep.subr.bf16.mxu0 0
        %1332 = vmatpush1.bf16.msra.mxu0 %v1308
        %1333 = vmatprep.subr.bf16.mxu0 0
        %1334 = vmatpush1.bf16.msra.mxu0 0
        %1335 = vmatprep.subr.bf16.mxu0 0
        %1336 = vmatpush1.bf16.msra.mxu0 0
        %1337 = vmatprep.subr.bf16.mxu0 0
        %1338 = vmatpush1.bf16.msra.mxu0 0
        %1339 = vmatprep.subr.bf16.mxu0 0
        %1340 = vmatpush1.bf16.msra.mxu0 0
        %1341 = vmatprep.subr.bf16.mxu0 0
        %1342 = vmatpush1.bf16.msra.mxu0 0
        %1343 = vmatprep.subr.bf16.mxu0 0
        %1344 = vmatpush1.bf16.msra.mxu0 0
        %1345 = vmatprep.subr.bf16.mxu0 0
        %1346 = vmatpush1.bf16.msra.mxu0 0
        %1347 = vmatprep.subr.bf16.mxu0 0
        %1348 = vmatpush1.bf16.msra.mxu0 0
        %1349 = vmatprep.mubr.bf16.mxu0 0
        %1350 = vmatmul.mubr.bf16.gmra.mrb[0].mxu0 %v1292
        %v1351 = vpop.f32.mrb[0].mxu0
        %v1352 = vadd.f32 0.0, %v1351
        %v1353 = vpop.f32.mrb[0].mxu0
        %v1354 = vpop.f32.mrb[0].mxu0
        %v1355 = vpop.f32.mrb[0].mxu0
        %1356 = vdwg.mxu0
        %v1357 = vmul.f32 %v1352, %v1291
        %v1358 = vpack.c.bf16 %v1357, %v1357
        %1360 = vrot.lane.b32.xlu0 %v1038, 8
        %v1361 = vpop.permute.xlu0 %1360
        %1363 = vrot.lane.b32.xlu0 %v1198, 16
        %v1364 = vpop.permute.xlu0 %1363
        %1366 = vrot.lane.b32.xlu0 %v1358, 24
        %v1367 = vpop.permute.xlu0 %1366
        %v1370 = vsel %vm727, %v877, %v1361
        %vm1371 = vcmask 130048
        %v1373 = vsel %vm1371, %v1370, %v1364
        %vm1374 = vcmask 195584
        %v1376 = vsel %vm1374, %v1373, %v1367
        %vm1378 = vcmask 257024
        %1379 = vst.msk [vmem:[#allocation2] sm:$0xf] %vm1378, %v1376
        %v1380 = vld [vmem:[#allocation2] sm:$0xf]
        %v1381 = vld [vmem:[%s7] sm:$0xf]
        %v1382 = vld [vmem:[%s7 + $0x4] sm:$0xf]
        %v1383 = vld [vmem:[%s7 + $0x8] sm:$0xf]
        %v1384 = vld [vmem:[%s7 + $0xc] sm:$0xf]
        %v1385 = vld [vmem:[%s8] sm:$0x1]
        %v1387 = vlaneseq
        %v1388 = vshrl.u32 %v1387, 7
        %v1389 = vsub.s32 0, %v1388
        %v1390 = vrot.slane %v1385, %v1389
        %v1396 = vunpack.c.l.b16 %v1381
        %v1397 = vunpack.c.l.b16 %v1382
        %v1398 = vunpack.c.l.b16 %v1383
        %v1399 = vunpack.c.l.b16 %v1384
        %v1400 = vpack.c.b16 %v1397, %v1396
        %v1401 = vpack.c.b16 %v1399, %v1398
        %v1405 = vsel %vm483, %v1380, 0
        %1407 = vmatprep.subr.bf16.mxu0 0
        %1408 = vmatpush1.bf16.msra.mxu0 %v1400
        %1409 = vmatprep.subr.bf16.mxu0 0
        %1410 = vmatpush1.bf16.msra.mxu0 %v1401
        %1411 = vmatprep.subr.bf16.mxu0 0
        %1412 = vmatpush1.bf16.msra.mxu0 0
        %1413 = vmatprep.subr.bf16.mxu0 0
        %1414 = vmatpush1.bf16.msra.mxu0 0
        %1415 = vmatprep.subr.bf16.mxu0 0
        %1416 = vmatpush1.bf16.msra.mxu0 0
        %1417 = vmatprep.subr.bf16.mxu0 0
        %1418 = vmatpush1.bf16.msra.mxu0 0
        %1419 = vmatprep.subr.bf16.mxu0 0
        %1420 = vmatpush1.bf16.msra.mxu0 0
        %1421 = vmatprep.subr.bf16.mxu0 0
        %1422 = vmatpush1.bf16.msra.mxu0 0
        %1423 = vmatprep.subr.bf16.mxu0 0
        %1424 = vmatpush1.bf16.msra.mxu0 0
        %1425 = vmatprep.subr.bf16.mxu0 0
        %1426 = vmatpush1.bf16.msra.mxu0 0
        %1427 = vmatprep.subr.bf16.mxu0 0
        %1428 = vmatpush1.bf16.msra.mxu0 0
        %1429 = vmatprep.subr.bf16.mxu0 0
        %1430 = vmatpush1.bf16.msra.mxu0 0
        %1431 = vmatprep.subr.bf16.mxu0 0
        %1432 = vmatpush1.bf16.msra.mxu0 0
        %1433 = vmatprep.subr.bf16.mxu0 0
        %1434 = vmatpush1.bf16.msra.mxu0 0
        %1435 = vmatprep.subr.bf16.mxu0 0
        %1436 = vmatpush1.bf16.msra.mxu0 0
        %1437 = vmatprep.subr.bf16.mxu0 0
        %1438 = vmatpush1.bf16.msra.mxu0 0
        %1439 = vmatprep.mubr.bf16.mxu0 0
        %1440 = vmatmul.mubr.bf16.gmra.mrb[0].mxu0 %v1405
        %v1441 = vpop.f32.mrb[0].mxu0
        %v1442 = vadd.f32 %v1390, %v1441
        %v1443 = vpop.f32.mrb[0].mxu0
        %v1444 = vpop.f32.mrb[0].mxu0
        %v1445 = vpop.f32.mrb[0].mxu0
        %1446 = vdwg.mxu0
        %v1447 = vadd.f32 %v442, %v1442
        %v1448 = vsel %vm483, %v1447, 0.0
        %1449 = vadd.xlane.f32.xlu0 %v1448
        %v1450 = vpop.xlane.xlu0 %1449
        %v1451 = vrcp.pop 32.0
        %v1452 = vmul.f32 %v1450, %v1451
        %v1453 = vsub.f32 %v1447, %v1452
        %v1454 = vmul.f32 %v1453, %v1453
        %v1455 = vsel %vm483, %v1454, 0.0
        %1456 = vadd.xlane.f32.xlu0 %v1455
        %v1457 = vpop.xlane.xlu0 %1456
        %v1458 = vmul.f32 %v1457, %v1451
        %v1459 = vadd.f32 %v1458, 1e-06
        %v1460 = vrsqrt.pop %v1459
        %v1461 = vmul.f32 %v1453, %v1460
        %v1462 = vld [vmem:[%s9] sm:$0x1]
        %v1464 = vlaneseq
        %v1465 = vshrl.u32 %v1464, 7
        %v1466 = vsub.s32 0, %v1465
        %v1467 = vrot.slane %v1462, %v1466
        %v1469 = vmul.f32 %v1461, %v1467
        %v1470 = vld [vmem:[%s10] sm:$0x1]
        %v1472 = vlaneseq
        %v1473 = vshrl.u32 %v1472, 7
        %v1474 = vsub.s32 0, %v1473
        %v1475 = vrot.slane %v1470, %v1474
        %v1477 = vadd.f32 %v1469, %v1475
        %1478 = vst.msk [vmem:[%s425] sm:$0xff] %vm483, %v1477
        %s1479 = sand.u32 %s295, 1
        %s1480 = scalar_lea.sflag [#allocation4], %s1479
        %s1481 = sand.u32 %s295, 1
        %s1482 = smul.addr %s1481, 8
        %s1483 = scalar_lea.vmem [#allocation3], %s1482
        // Predicated region
        $region65: #{tpu_custom_call.1} parent=63 // pred_check
          %p1484 = pneg %p305
        $region66: #{tpu_custom_call.1} parent=63 // pred_check_branch
          %1486 = sbr.rel (%p1484) target = $region68
        $region67: #{tpu_custom_call.1} parent=63 // pred_region
          %s1488 = ssub.s32 128, 128
          %1489 = vsyncadd %s1480, %s1488
          %s1490 = sadd.s32 %s30, %s29
          %s1491 = smul.addr %s1490, 128
          %s1492 = scalar_lea.hbm %s11, %s1491
          %s1494 = sshll.u32 %s1483, 4
          %s1495 = int_to_ptr.vmem [resolvable:$true] %s1494
          %1497 = dma.vmem_to_hbm [thread:$0]  %s1495, 128, %s1492, %s1480
        $region68: #{tpu_custom_call.1} parent=63 // pred_fallthru
          _
      $region64: #{tpu_custom_call.1} parent=5 // pred_fallthru
        _
      %p1498 = scmp.le.s32.totalorder 2, %s20
      // Predicated region
      $region69: #{tpu_custom_call.1} parent=5 // pred_check
        %p1499 = pneg %p1498
      $region70: #{tpu_custom_call.1} parent=5 // pred_check_branch
        %1501 = sbr.rel (%p1499) target = $region72
      $region71: #{tpu_custom_call.1} parent=5 // pred_region
        %s1502 = ssub.s32 %s20, 2
        // Predicated region
        $region73: #{tpu_custom_call.1} parent=71 // pred_check
          %p1503 = pneg %p311
        $region74: #{tpu_custom_call.1} parent=71 // pred_check_branch
          %1505 = sbr.rel (%p1503) target = $region76
        $region75: #{tpu_custom_call.1} parent=71 // pred_region
          %s1506 = sand.u32 %s296, 1
          %s1507 = scalar_lea.sflag [#allocation4], %s1506
          %s1508 = sand.u32 %s296, 1
          %s1509 = smul.addr %s1508, 8
          %s1510 = scalar_lea.vmem [#allocation3], %s1509
          %1511 = dma.done %s1507, 128
        $region76: #{tpu_custom_call.1} parent=71 // pred_fallthru
          _
      $region72: #{tpu_custom_call.1} parent=5 // pred_fallthru
        _
    $region6: #{tpu_custom_call.1} parent=1 // loop_footer
      %s24 = sadd.s32 1, %s20
    $region7: #{tpu_custom_call.1} parent=1 // loop_footer_branch
      %19 = sbr.rel target = $region3
    $region8: #{tpu_custom_call.1} parent=1 // loop_exit
      _
    %1512 = vsyncpa [#allocation4], 1
    %s1513 = scalar_lea.sflag [#allocation4], 1
    %1514 = vsyncpa %s1513, 1

</llo_original>
